<compile_context>
chip_gen: v7x
topology: tpu7x:2x2x1
jax: 0.10.0
libtpu: 0.0.40
codegen_flags: <defaults>
</compile_context>

<pallas_src>
import numpy as np
import jax
import jax.numpy as jnp
from jax.experimental import pallas as pl
from jax.experimental.pallas import tpu as pltpu

IMG_SHAPE = (1, 28, 28)
IN_DIM = int(np.prod(IMG_SHAPE))       # 784
H1 = 512
H2 = 256
OUT_DIM = 1


def _round_up(x, m):
    return ((x + m - 1) // m) * m


def d_mlp_kernel(x_ref, w1_ref, b1_ref, w2_ref, b2_ref, w3_ref, b3_ref, o_ref):
    """One batch tile of the fused MLP: 2 MXU matmuls + VPU/XLU last layer."""
    # f32 tile straight from HBM; cast to bf16 on the VPU (no wrapper pass).
    x = x_ref[...].astype(jnp.bfloat16)                              # (TB, 784)

    # Layer 1: (TB,784) @ (784,512) -> f32 accumulation on the MXU.
    h1 = jnp.dot(x, w1_ref[...], preferred_element_type=jnp.float32)
    h1 = h1 + b1_ref[...]
    h1 = jnp.maximum(h1, 0.2 * h1)                                   # LeakyReLU(0.2)

    # Layer 2: (TB,512) @ (512,256) -> f32 accumulation (bf16 MXU inputs).
    h2 = jnp.dot(h1.astype(jnp.bfloat16), w2_ref[...],
                 preferred_element_type=jnp.float32)
    h2 = h2 + b2_ref[...]
    h2 = jnp.maximum(h2, 0.2 * h2)

    # Layer 3 (256 -> 1): lane-sparse on the MXU, so do it on VPU + XLU:
    # broadcast-multiply by the weight row and reduce over the lane axis.
    h3 = jnp.sum(h2 * w3_ref[...], axis=-1, keepdims=True) + b3_ref[...]

    # TODO(synk): optional lane-dense (1, TB) output layout (XLU transpose)
    # intentionally skipped; the (TB, 1) writeback is a negligible byte count.
    o_ref[...] = jax.nn.sigmoid(h3)                                   # (TB, 1) f32


def _pick_tile(B, tile_b):
    """Batch tile: multiple of 16 (bf16 sublane packing), capped at tile_b,
    and >=2 tiles whenever the batch allows it (v7x dual-TC; harmless else)."""
    B16 = _round_up(B, 16)
    if B16 <= 16:
        TB = B16
    else:
        TB = min(tile_b, _round_up(pl.cdiv(B16, 2), 16))
    n_tiles = pl.cdiv(B, TB)
    return TB, n_tiles


def d_mlp_forward(x_img, params, *, tile_b=1024):
    """x_img: (B, 1, 28, 28) float32 -> (B, 1) float32."""
    B = x_img.shape[0]
    w1, b1, w2, b2, w3, b3 = params

    # Flatten (matches torch .view(B, -1)); NO pad / dtype pass over x — the
    # kernel consumes the f32 activation directly and casts inside VMEM.
    x = x_img.reshape(B, -1).astype(jnp.float32)

    TB, n_tiles = _pick_tile(B, tile_b)
    B_pad = n_tiles * TB
    if B_pad != B:
        x = jnp.pad(x, ((0, B_pad - B), (0, 0)))

    # Weights: bf16 MXU operands; last-layer row + biases stay f32 (VPU path).
    w1b = w1.astype(jnp.bfloat16)                       # (784, 512)
    w2b = w2.astype(jnp.bfloat16)                       # (512, 256)
    w3row = w3.reshape(1, H2).astype(jnp.float32)       # (1, 256)
    b1r = b1.reshape(1, H1).astype(jnp.float32)
    b2r = b2.reshape(1, H2).astype(jnp.float32)
    b3r = b3.reshape(1, OUT_DIM).astype(jnp.float32)

    cost = pl.CostEstimate(
        flops=2 * B_pad * (IN_DIM * H1 + H1 * H2 + H2 * OUT_DIM),
        transcendentals=2 * B_pad,                      # sigmoid: exp + recip
        bytes_accessed=int(x.size * 4 + w1b.size * 2 + w2b.size * 2
                           + (H2 + H1 + H2 + OUT_DIM) * 4
                           + B_pad * OUT_DIM * 4),
    )

    def build_specs(single_buffer_weights):
        resident = (dict(pipeline_mode=pl.Buffered(1))
                    if single_buffer_weights else {})
        in_specs = [
            pl.BlockSpec((TB, IN_DIM), lambda i: (i, 0)),              # x tile
            pl.BlockSpec((IN_DIM, H1), lambda i: (0, 0), **resident),  # w1
            pl.BlockSpec((1, H1), lambda i: (0, 0), **resident),       # b1
            pl.BlockSpec((H1, H2), lambda i: (0, 0), **resident),      # w2
            pl.BlockSpec((1, H2), lambda i: (0, 0), **resident),       # b2
            pl.BlockSpec((1, H2), lambda i: (0, 0), **resident),       # w3 row
            pl.BlockSpec((1, OUT_DIM), lambda i: (0, 0), **resident),  # b3
        ]
        out_spec = pl.BlockSpec((TB, OUT_DIM), lambda i: (i, 0))
        return in_specs, out_spec

    def run(single_buffer_weights):
        in_specs, out_spec = build_specs(single_buffer_weights)
        return pl.pallas_call(
            d_mlp_kernel,
            out_shape=jax.ShapeDtypeStruct((B_pad, OUT_DIM), jnp.float32),
            grid=(n_tiles,),
            in_specs=in_specs,
            out_specs=out_spec,
            compiler_params=pltpu.CompilerParams(
                dimension_semantics=("parallel",),
                vmem_limit_bytes=32 * 1024 * 1024),
            cost_estimate=cost,
        )(x, w1b, b1r, w2b, b2r, w3row, b3r)

    try:
        # Resident operands single-buffered: reclaims the dead ~1.2 MiB copy.
        out = run(single_buffer_weights=True)
    except Exception:
        # Installed JAX may not honor BlockSpec.pipeline_mode / pl.Buffered;
        # fall back to default double-buffering (correctness identical).
        out = run(single_buffer_weights=False)

    return out[:B]


def init_params(key):
    """Deterministic init mimicking torch.nn.Linear's uniform(-1/sqrt(fan_in), ...).

    Weights are stored transposed: (in_features, out_features)."""
    ks = jax.random.split(key, 6)

    def linear(kw, kb, fan_in, fan_out):
        bound = 1.0 / np.sqrt(fan_in)
        w = jax.random.uniform(kw, (fan_in, fan_out), jnp.float32, -bound, bound)
        b = jax.random.uniform(kb, (1, fan_out), jnp.float32, -bound, bound)
        return w, b

    w1, b1 = linear(ks[0], ks[1], IN_DIM, H1)
    w2, b2 = linear(ks[2], ks[3], H1, H2)
    w3, b3 = linear(ks[4], ks[5], H2, OUT_DIM)
    return (w1, b1, w2, b2, w3, b3)


def reference_forward(x_img, params):
    """Pure-JAX f32 reference for correctness checking."""
    w1, b1, w2, b2, w3, b3 = params
    x = x_img.reshape(x_img.shape[0], -1).astype(jnp.float32)
    h = x @ w1 + b1
    h = jnp.where(h > 0, h, 0.2 * h)
    h = h @ w2 + b2
    h = jnp.where(h > 0, h, 0.2 * h)
    return jax.nn.sigmoid(h @ w3 + b3)


if __name__ == "__main__":
    key = jax.random.PRNGKey(0)
    kx, kp = jax.random.split(key)
    kx1, kx2 = jax.random.split(kx)

    params = init_params(kp)

    # Small single-tile batch (matches the original module's typical use).
    B = 8
    x_img = jax.random.normal(kx1, (B,) + IMG_SHAPE, dtype=jnp.float32)
    out = jax.block_until_ready(d_mlp_forward(x_img, params))
    ref = reference_forward(x_img, params)
    assert out.shape == (B, OUT_DIM)
    # bf16 matmul inputs (f32 accumulation) => loosen tolerance vs f32 reference.
    np.testing.assert_allclose(np.asarray(out), np.asarray(ref),
                               rtol=1e-2, atol=1e-2)

    # Multi-tile batch: exercises batch padding and the >=2-tile (v7x) path.
    B2 = 40
    x_img2 = jax.random.normal(kx2, (B2,) + IMG_SHAPE, dtype=jnp.float32)
    out2 = jax.block_until_ready(d_mlp_forward(x_img2, params))
    ref2 = reference_forward(x_img2, params)
    assert out2.shape == (B2, OUT_DIM)
    np.testing.assert_allclose(np.asarray(out2), np.asarray(ref2),
                               rtol=1e-2, atol=1e-2)

    print("KERNEL_OK")
</pallas_src>

<mosaic_0001>
module attributes {stable_mosaic.version = 11 : i64} {
  func.func @d_mlp_kernel(%arg0: i32, %arg1: memref<16x784xf32, #tpu.memory_space<vmem>>, %arg2: memref<784x512xbf16, #tpu.memory_space<vmem>>, %arg3: memref<1x512xf32, #tpu.memory_space<vmem>>, %arg4: memref<512x256xbf16, #tpu.memory_space<vmem>>, %arg5: memref<1x256xf32, #tpu.memory_space<vmem>>, %arg6: memref<1x256xf32, #tpu.memory_space<vmem>>, %arg7: memref<1x1xf32, #tpu.memory_space<vmem>>, %arg8: memref<16x1xf32, #tpu.memory_space<vmem>>) attributes {dimension_semantics = [#tpu.dimension_semantics<parallel>], iteration_bounds = array<i64: 1>, scalar_prefetch = 0 : i64, scratch_operands = 0 : i64, tpu.core_type = #tpu.core_type<tc>, window_params = [{transform_indices = @transform_0, window_bounds = array<i64: 16, 784>}, {pipeline_mode = #tpu.pipeline_mode<synchronous>, transform_indices = @transform_1, window_bounds = array<i64: 784, 512>}, {pipeline_mode = #tpu.pipeline_mode<synchronous>, transform_indices = @transform_2, window_bounds = array<i64: 1, 512>}, {pipeline_mode = #tpu.pipeline_mode<synchronous>, transform_indices = @transform_3, window_bounds = array<i64: 512, 256>}, {pipeline_mode = #tpu.pipeline_mode<synchronous>, transform_indices = @transform_4, window_bounds = array<i64: 1, 256>}, {pipeline_mode = #tpu.pipeline_mode<synchronous>, transform_indices = @transform_5, window_bounds = array<i64: 1, 256>}, {pipeline_mode = #tpu.pipeline_mode<synchronous>, transform_indices = @transform_6, window_bounds = array<i64: 1, 1>}, {transform_indices = @transform_7, window_bounds = array<i64: 16, 1>}]} {
    %c0 = arith.constant 0 : index
    %c0_0 = arith.constant 0 : index
    %0 = vector.load %arg1[%c0, %c0_0] : memref<16x784xf32, #tpu.memory_space<vmem>>, vector<16x784xf32>
    %1 = arith.truncf %0 : vector<16x784xf32> to vector<16x784xbf16>
    %c0_1 = arith.constant 0 : index
    %c0_2 = arith.constant 0 : index
    %2 = vector.load %arg2[%c0_1, %c0_2] : memref<784x512xbf16, #tpu.memory_space<vmem>>, vector<784x512xbf16>
    %cst = arith.constant dense<0.000000e+00> : vector<16x512xf32>
    %3 = tpu.matmul %1, %2, %cst {dimension_numbers = #tpu.dot_dimension_numbers<[1], [0], [0], [1], [0, 0, 1, 1], [], []>} : vector<16x784xbf16>, vector<784x512xbf16>, vector<16x512xf32> -> vector<16x512xf32>
    %c0_3 = arith.constant 0 : index
    %c0_4 = arith.constant 0 : index
    %4 = vector.load %arg3[%c0_3, %c0_4] : memref<1x512xf32, #tpu.memory_space<vmem>>, vector<1x512xf32>
    %5 = vector.broadcast %4 : vector<1x512xf32> to vector<16x512xf32>
    %6 = arith.addf %3, %5 : vector<16x512xf32>
    %cst_5 = arith.constant 2.000000e-01 : f32
    %7 = vector.broadcast %cst_5 : f32 to vector<16x512xf32>
    %8 = arith.mulf %7, %6 : vector<16x512xf32>
    %9 = arith.maximumf %6, %8 : vector<16x512xf32>
    %10 = arith.truncf %9 : vector<16x512xf32> to vector<16x512xbf16>
    %c0_6 = arith.constant 0 : index
    %c0_7 = arith.constant 0 : index
    %11 = vector.load %arg4[%c0_6, %c0_7] : memref<512x256xbf16, #tpu.memory_space<vmem>>, vector<512x256xbf16>
    %cst_8 = arith.constant dense<0.000000e+00> : vector<16x256xf32>
    %12 = tpu.matmul %10, %11, %cst_8 {dimension_numbers = #tpu.dot_dimension_numbers<[1], [0], [0], [1], [0, 0, 1, 1], [], []>} : vector<16x512xbf16>, vector<512x256xbf16>, vector<16x256xf32> -> vector<16x256xf32>
    %c0_9 = arith.constant 0 : index
    %c0_10 = arith.constant 0 : index
    %13 = vector.load %arg5[%c0_9, %c0_10] : memref<1x256xf32, #tpu.memory_space<vmem>>, vector<1x256xf32>
    %14 = vector.broadcast %13 : vector<1x256xf32> to vector<16x256xf32>
    %15 = arith.addf %12, %14 : vector<16x256xf32>
    %cst_11 = arith.constant 2.000000e-01 : f32
    %16 = vector.broadcast %cst_11 : f32 to vector<16x256xf32>
    %17 = arith.mulf %16, %15 : vector<16x256xf32>
    %18 = arith.maximumf %15, %17 : vector<16x256xf32>
    %c0_12 = arith.constant 0 : index
    %c0_13 = arith.constant 0 : index
    %19 = vector.load %arg6[%c0_12, %c0_13] : memref<1x256xf32, #tpu.memory_space<vmem>>, vector<1x256xf32>
    %20 = vector.broadcast %19 : vector<1x256xf32> to vector<16x256xf32>
    %21 = arith.mulf %18, %20 : vector<16x256xf32>
    %cst_14 = arith.constant dense<0.000000e+00> : vector<16xf32>
    %22 = vector.multi_reduction <add>, %21, %cst_14 [1] : vector<16x256xf32> to vector<16xf32>
    %23 = vector.shape_cast %22 : vector<16xf32> to vector<16x1xf32>
    %c0_15 = arith.constant 0 : index
    %c0_16 = arith.constant 0 : index
    %24 = vector.load %arg7[%c0_15, %c0_16] : memref<1x1xf32, #tpu.memory_space<vmem>>, vector<1x1xf32>
    %25 = vector.broadcast %24 : vector<1x1xf32> to vector<16x1xf32>
    %26 = arith.addf %23, %25 : vector<16x1xf32>
    %27 = arith.negf %26 : vector<16x1xf32>
    %28 = math.exp %27 : vector<16x1xf32>
    %cst_17 = arith.constant 1.000000e+00 : f32
    %29 = vector.broadcast %cst_17 : f32 to vector<16x1xf32>
    %30 = arith.addf %29, %28 : vector<16x1xf32>
    %31 = arith.divf %29, %30 : vector<16x1xf32>
    %c0_18 = arith.constant 0 : index
    %c0_19 = arith.constant 0 : index
    %32 = vector.load %arg8[%c0_18, %c0_19] : memref<16x1xf32, #tpu.memory_space<vmem>>, vector<16x1xf32>
    tpu.vector_store %arg8[%c0_18, %c0_19], %31 {strides = array<i32>} : memref<16x1xf32, #tpu.memory_space<vmem>>, vector<16x1xf32>,
    return
  }
  func.func @transform_0(%arg0: i32) -> (i32, i32) {
    %c0_i32 = arith.constant 0 : i32
    %c0_i32_0 = arith.constant 0 : i32
    return %arg0, %c0_i32 : i32, i32
  }
  func.func @transform_1(%arg0: i32) -> (i32, i32) {
    %c0_i32 = arith.constant 0 : i32
    %c0_i32_0 = arith.constant 0 : i32
    %c0_i32_1 = arith.constant 0 : i32
    return %c0_i32, %c0_i32_0 : i32, i32
  }
  func.func @transform_2(%arg0: i32) -> (i32, i32) {
    %c0_i32 = arith.constant 0 : i32
    %c0_i32_0 = arith.constant 0 : i32
    %c0_i32_1 = arith.constant 0 : i32
    return %c0_i32, %c0_i32_0 : i32, i32
  }
  func.func @transform_3(%arg0: i32) -> (i32, i32) {
    %c0_i32 = arith.constant 0 : i32
    %c0_i32_0 = arith.constant 0 : i32
    %c0_i32_1 = arith.constant 0 : i32
    return %c0_i32, %c0_i32_0 : i32, i32
  }
  func.func @transform_4(%arg0: i32) -> (i32, i32) {
    %c0_i32 = arith.constant 0 : i32
    %c0_i32_0 = arith.constant 0 : i32
    %c0_i32_1 = arith.constant 0 : i32
    return %c0_i32, %c0_i32_0 : i32, i32
  }
  func.func @transform_5(%arg0: i32) -> (i32, i32) {
    %c0_i32 = arith.constant 0 : i32
    %c0_i32_0 = arith.constant 0 : i32
    %c0_i32_1 = arith.constant 0 : i32
    return %c0_i32, %c0_i32_0 : i32, i32
  }
  func.func @transform_6(%arg0: i32) -> (i32, i32) {
    %c0_i32 = arith.constant 0 : i32
    %c0_i32_0 = arith.constant 0 : i32
    %c0_i32_1 = arith.constant 0 : i32
    return %c0_i32, %c0_i32_0 : i32, i32
  }
  func.func @transform_7(%arg0: i32) -> (i32, i32) {
    %c0_i32 = arith.constant 0 : i32
    %c0_i32_0 = arith.constant 0 : i32
    return %arg0, %c0_i32 : i32, i32
  }
}

module attributes {stable_mosaic.version = 11 : i64} {
  func.func @d_mlp_kernel(%arg0: i32, %arg1: memref<16x784xf32, #tpu.memory_space<vmem>>, %arg2: memref<784x512xbf16, #tpu.memory_space<vmem>>, %arg3: memref<1x512xf32, #tpu.memory_space<vmem>>, %arg4: memref<512x256xbf16, #tpu.memory_space<vmem>>, %arg5: memref<1x256xf32, #tpu.memory_space<vmem>>, %arg6: memref<1x256xf32, #tpu.memory_space<vmem>>, %arg7: memref<1x1xf32, #tpu.memory_space<vmem>>, %arg8: memref<16x1xf32, #tpu.memory_space<vmem>>) attributes {dimension_semantics = [#tpu.dimension_semantics<parallel>], iteration_bounds = array<i64: 1>, scalar_prefetch = 0 : i64, scratch_operands = 0 : i64, tpu.core_type = #tpu.core_type<tc>, window_params = [{transform_indices = @transform_0, window_bounds = array<i64: 16, 784>}, {pipeline_mode = #tpu.pipeline_mode<synchronous>, transform_indices = @transform_1, window_bounds = array<i64: 784, 512>}, {pipeline_mode = #tpu.pipeline_mode<synchronous>, transform_indices = @transform_2, window_bounds = array<i64: 1, 512>}, {pipeline_mode = #tpu.pipeline_mode<synchronous>, transform_indices = @transform_3, window_bounds = array<i64: 512, 256>}, {pipeline_mode = #tpu.pipeline_mode<synchronous>, transform_indices = @transform_4, window_bounds = array<i64: 1, 256>}, {pipeline_mode = #tpu.pipeline_mode<synchronous>, transform_indices = @transform_5, window_bounds = array<i64: 1, 256>}, {pipeline_mode = #tpu.pipeline_mode<synchronous>, transform_indices = @transform_6, window_bounds = array<i64: 1, 1>}, {transform_indices = @transform_7, window_bounds = array<i64: 16, 1>}]} {
    %c0 = arith.constant 0 : index
    %c0_0 = arith.constant 0 : index
    %0 = vector.load %arg1[%c0, %c0_0] : memref<16x784xf32, #tpu.memory_space<vmem>>, vector<16x784xf32>
    %1 = arith.truncf %0 : vector<16x784xf32> to vector<16x784xbf16>
    %c0_1 = arith.constant 0 : index
    %c0_2 = arith.constant 0 : index
    %2 = vector.load %arg2[%c0_1, %c0_2] : memref<784x512xbf16, #tpu.memory_space<vmem>>, vector<784x512xbf16>
    %cst = arith.constant dense<0.000000e+00> : vector<16x512xf32>
    %3 = tpu.matmul %1, %2, %cst {dimension_numbers = #tpu.dot_dimension_numbers<[1], [0], [0], [1], [0, 0, 1, 1], [], []>} : vector<16x784xbf16>, vector<784x512xbf16>, vector<16x512xf32> -> vector<16x512xf32>
    %c0_3 = arith.constant 0 : index
    %c0_4 = arith.constant 0 : index
    %4 = vector.load %arg3[%c0_3, %c0_4] : memref<1x512xf32, #tpu.memory_space<vmem>>, vector<1x512xf32>
    %5 = vector.broadcast %4 : vector<1x512xf32> to vector<16x512xf32>
    %6 = arith.addf %3, %5 : vector<16x512xf32>
    %cst_5 = arith.constant 2.000000e-01 : f32
    %7 = vector.broadcast %cst_5 : f32 to vector<16x512xf32>
    %8 = arith.mulf %7, %6 : vector<16x512xf32>
    %9 = arith.maximumf %6, %8 : vector<16x512xf32>
    %10 = arith.truncf %9 : vector<16x512xf32> to vector<16x512xbf16>
    %c0_6 = arith.constant 0 : index
    %c0_7 = arith.constant 0 : index
    %11 = vector.load %arg4[%c0_6, %c0_7] : memref<512x256xbf16, #tpu.memory_space<vmem>>, vector<512x256xbf16>
    %cst_8 = arith.constant dense<0.000000e+00> : vector<16x256xf32>
    %12 = tpu.matmul %10, %11, %cst_8 {dimension_numbers = #tpu.dot_dimension_numbers<[1], [0], [0], [1], [0, 0, 1, 1], [], []>} : vector<16x512xbf16>, vector<512x256xbf16>, vector<16x256xf32> -> vector<16x256xf32>
    %c0_9 = arith.constant 0 : index
    %c0_10 = arith.constant 0 : index
    %13 = vector.load %arg5[%c0_9, %c0_10] : memref<1x256xf32, #tpu.memory_space<vmem>>, vector<1x256xf32>
    %14 = vector.broadcast %13 : vector<1x256xf32> to vector<16x256xf32>
    %15 = arith.addf %12, %14 : vector<16x256xf32>
    %cst_11 = arith.constant 2.000000e-01 : f32
    %16 = vector.broadcast %cst_11 : f32 to vector<16x256xf32>
    %17 = arith.mulf %16, %15 : vector<16x256xf32>
    %18 = arith.maximumf %15, %17 : vector<16x256xf32>
    %c0_12 = arith.constant 0 : index
    %c0_13 = arith.constant 0 : index
    %19 = vector.load %arg6[%c0_12, %c0_13] : memref<1x256xf32, #tpu.memory_space<vmem>>, vector<1x256xf32>
    %20 = vector.broadcast %19 : vector<1x256xf32> to vector<16x256xf32>
    %21 = arith.mulf %18, %20 : vector<16x256xf32>
    %cst_14 = arith.constant dense<0.000000e+00> : vector<16xf32>
    %22 = vector.multi_reduction <add>, %21, %cst_14 [1] : vector<16x256xf32> to vector<16xf32>
    %23 = vector.shape_cast %22 : vector<16xf32> to vector<16x1xf32>
    %c0_15 = arith.constant 0 : index
    %c0_16 = arith.constant 0 : index
    %24 = vector.load %arg7[%c0_15, %c0_16] : memref<1x1xf32, #tpu.memory_space<vmem>>, vector<1x1xf32>
    %25 = vector.broadcast %24 : vector<1x1xf32> to vector<16x1xf32>
    %26 = arith.addf %23, %25 : vector<16x1xf32>
    %27 = arith.negf %26 : vector<16x1xf32>
    %28 = math.exp %27 : vector<16x1xf32>
    %cst_17 = arith.constant 1.000000e+00 : f32
    %29 = vector.broadcast %cst_17 : f32 to vector<16x1xf32>
    %30 = arith.addf %29, %28 : vector<16x1xf32>
    %31 = arith.divf %29, %30 : vector<16x1xf32>
    %c0_18 = arith.constant 0 : index
    %c0_19 = arith.constant 0 : index
    %32 = vector.load %arg8[%c0_18, %c0_19] : memref<16x1xf32, #tpu.memory_space<vmem>>, vector<16x1xf32>
    tpu.vector_store %arg8[%c0_18, %c0_19], %31 {strides = array<i32>} : memref<16x1xf32, #tpu.memory_space<vmem>>, vector<16x1xf32>,
    return
  }
  func.func @transform_0(%arg0: i32) -> (i32, i32) {
    %c0_i32 = arith.constant 0 : i32
    %c0_i32_0 = arith.constant 0 : i32
    return %arg0, %c0_i32 : i32, i32
  }
  func.func @transform_1(%arg0: i32) -> (i32, i32) {
    %c0_i32 = arith.constant 0 : i32
    %c0_i32_0 = arith.constant 0 : i32
    %c0_i32_1 = arith.constant 0 : i32
    return %c0_i32, %c0_i32_0 : i32, i32
  }
  func.func @transform_2(%arg0: i32) -> (i32, i32) {
    %c0_i32 = arith.constant 0 : i32
    %c0_i32_0 = arith.constant 0 : i32
    %c0_i32_1 = arith.constant 0 : i32
    return %c0_i32, %c0_i32_0 : i32, i32
  }
  func.func @transform_3(%arg0: i32) -> (i32, i32) {
    %c0_i32 = arith.constant 0 : i32
    %c0_i32_0 = arith.constant 0 : i32
    %c0_i32_1 = arith.constant 0 : i32
    return %c0_i32, %c0_i32_0 : i32, i32
  }
  func.func @transform_4(%arg0: i32) -> (i32, i32) {
    %c0_i32 = arith.constant 0 : i32
    %c0_i32_0 = arith.constant 0 : i32
    %c0_i32_1 = arith.constant 0 : i32
    return %c0_i32, %c0_i32_0 : i32, i32
  }
  func.func @transform_5(%arg0: i32) -> (i32, i32) {
    %c0_i32 = arith.constant 0 : i32
    %c0_i32_0 = arith.constant 0 : i32
    %c0_i32_1 = arith.constant 0 : i32
    return %c0_i32, %c0_i32_0 : i32, i32
  }
  func.func @transform_6(%arg0: i32) -> (i32, i32) {
    %c0_i32 = arith.constant 0 : i32
    %c0_i32_0 = arith.constant 0 : i32
    %c0_i32_1 = arith.constant 0 : i32
    return %c0_i32, %c0_i32_0 : i32, i32
  }
  func.func @transform_7(%arg0: i32) -> (i32, i32) {
    %c0_i32 = arith.constant 0 : i32
    %c0_i32_0 = arith.constant 0 : i32
    return %arg0, %c0_i32 : i32, i32
  }
}

</mosaic_0001>

<llo_original>
// kernel: tpu_custom_call.1
$region0: #{tpu_custom_call.1}
  #allocation0 [shape = 'u32[]', space=smem, size = 0x4, offset = 0x4, fixed_abs, tag = 'smem constant byte address 0x4 - core index']
  #allocation1 [shape = 'u32[144,128]{1,0:T(1,128)}', space=vmem, size = 0x12000, scoped, tag = 'internal scratch']
  #allocation2 [shape = 'f32[1,1]{1,0:T(1,128)S(1)}', space=vmem, size = 0x200, scoped, tag = 'scoped memory for tpu_custom_call.1']
  %s0 = inlined_call_operand.hbm [shape: f32[16,784], index: 0, kind: input, shape index: {}]
  %s1 = inlined_call_operand.hbm [shape: bf16[784,512], index: 1, kind: input, shape index: {}]
  %s2 = inlined_call_operand.vmem [shape: f32[1,512], index: 2, kind: input, shape index: {}]
  %s3 = inlined_call_operand.hbm [shape: bf16[512,256], index: 3, kind: input, shape index: {}]
  %s4 = inlined_call_operand.vmem [shape: f32[1,256], index: 4, kind: input, shape index: {}]
  %s5 = inlined_call_operand.vmem [shape: f32[1,256], index: 5, kind: input, shape index: {}]
  %s6 = inlined_call_operand.<no memory space> [shape: f32[1,1], index: 6, kind: input, shape index: {}]
  %s7 = inlined_call_operand.vmem [shape: f32[16,1], index: 7, kind: output, shape index: {}]
  %s8 = sld [smem:[#allocation0]]
  $region50: #{tpu_custom_call.1} parent=0
    _
  %s10 = ssub.s32 1, %s8
  %s11 = scalar_select 0, %s10, %s8
  %v12 = vstv %s6
  %13 = vst [vmem:[#allocation2] sm:$0x1] %v12
  $region1: #{tpu_custom_call.1} parent=0
    #allocation3 [shape = 'u8[57344]{0}', space=vmem, size = 0xe000, scoped, tag = 'input window, operand 0, single buffered']
    #allocation4 [shape = 's32[1]{0}', space=sflag, size = 0x4, scoped, tag = 'scoped memory for tpu_custom_call.1']
    #allocation5 [shape = 'u8[802816]{0}', space=vmem, size = 0xc4000, scoped, tag = 'input window, operand 1, single buffered']
    #allocation6 [shape = 's32[1]{0}', space=sflag, size = 0x4, scoped, tag = 'scoped memory for tpu_custom_call.1']
    #allocation7 [shape = 'u8[262144]{0}', space=vmem, size = 0x40000, scoped, tag = 'input window, operand 3, single buffered']
    %14 = vsyncpa [#allocation4], 0
    %15 = vsyncpa [#allocation6], 0
    // Predicated region
    $region2: #{tpu_custom_call.1} parent=1 // pred_check
      _
    $region3: #{tpu_custom_call.1} parent=1 // pred_check_branch
      %17 = sbr.rel (0) target = $region5
    $region4: #{tpu_custom_call.1} parent=1 // pred_region
      %s19 = ssub.s32 1792, 1792
      %20 = vsyncadd [#allocation4], %s19
      %s21 = sshll.u32 [#allocation3], 4
      %s22 = int_to_ptr.vmem [resolvable:$true] %s21
      %27 = dma.hbm_to_vmem [thread:$0]  %s0, 1792, %s22, [#allocation4], 896, 896, 56
    $region5: #{tpu_custom_call.1} parent=1 // pred_fallthru
      _
    // Predicated region
    $region6: #{tpu_custom_call.1} parent=1 // pred_check
      _
    $region7: #{tpu_custom_call.1} parent=1 // pred_check_branch
      %29 = sbr.rel (0) target = $region9
    $region8: #{tpu_custom_call.1} parent=1 // pred_region
      %s31 = ssub.s32 25088, 25088
      %32 = vsyncadd [#allocation6], %s31
      %s33 = sshll.u32 [#allocation5], 4
      %s34 = int_to_ptr.vmem [resolvable:$true] %s33
      %39 = dma.hbm_to_vmem [thread:$0]  %s1, 25088, %s34, [#allocation6], 256, 256, 16
    $region9: #{tpu_custom_call.1} parent=1 // pred_fallthru
      _
    // Predicated region
    $region10: #{tpu_custom_call.1} parent=1 // pred_check
      _
    $region11: #{tpu_custom_call.1} parent=1 // pred_check_branch
      %41 = sbr.rel (0) target = $region13
    $region12: #{tpu_custom_call.1} parent=1 // pred_region
      _
    $region13: #{tpu_custom_call.1} parent=1 // pred_fallthru
      _
    // Predicated region
    $region14: #{tpu_custom_call.1} parent=1 // pred_check
      _
    $region15: #{tpu_custom_call.1} parent=1 // pred_check_branch
      %43 = sbr.rel (0) target = $region17
    $region16: #{tpu_custom_call.1} parent=1 // pred_region
      %s45 = ssub.s32 8192, 8192
      %46 = vsyncadd [#allocation6], %s45
      %s47 = sshll.u32 [#allocation7], 4
      %s48 = int_to_ptr.vmem [resolvable:$true] %s47
      %53 = dma.hbm_to_vmem [thread:$0]  %s3, 8192, %s48, [#allocation6], 128, 128, 8
    $region17: #{tpu_custom_call.1} parent=1 // pred_fallthru
      _
    // Predicated region
    $region18: #{tpu_custom_call.1} parent=1 // pred_check
      _
    $region19: #{tpu_custom_call.1} parent=1 // pred_check_branch
      %55 = sbr.rel (0) target = $region21
    $region20: #{tpu_custom_call.1} parent=1 // pred_region
      _
    $region21: #{tpu_custom_call.1} parent=1 // pred_fallthru
      _
    // Predicated region
    $region22: #{tpu_custom_call.1} parent=1 // pred_check
      _
    $region23: #{tpu_custom_call.1} parent=1 // pred_check_branch
      %57 = sbr.rel (0) target = $region25
    $region24: #{tpu_custom_call.1} parent=1 // pred_region
      _
    $region25: #{tpu_custom_call.1} parent=1 // pred_fallthru
      _
    // Predicated region
    $region26: #{tpu_custom_call.1} parent=1 // pred_check
      _
    $region27: #{tpu_custom_call.1} parent=1 // pred_check_branch
      %59 = sbr.rel (0) target = $region29
    $region28: #{tpu_custom_call.1} parent=1 // pred_region
      _
    $region29: #{tpu_custom_call.1} parent=1 // pred_fallthru
      _
    // Predicated region
    $region30: #{tpu_custom_call.1} parent=1 // pred_check
      _
    $region31: #{tpu_custom_call.1} parent=1 // pred_check_branch
      %61 = sbr.rel (0) target = $region33
    $region32: #{tpu_custom_call.1} parent=1 // pred_region
      %62 = dma.done [#allocation4], 1792
    $region33: #{tpu_custom_call.1} parent=1 // pred_fallthru
      _
    // Predicated region
    $region34: #{tpu_custom_call.1} parent=1 // pred_check
      _
    $region35: #{tpu_custom_call.1} parent=1 // pred_check_branch
      %64 = sbr.rel (0) target = $region37
    $region36: #{tpu_custom_call.1} parent=1 // pred_region
      %65 = dma.done [#allocation6], 25088
    $region37: #{tpu_custom_call.1} parent=1 // pred_fallthru
      _
    // Predicated region
    $region38: #{tpu_custom_call.1} parent=1 // pred_check
      _
    $region39: #{tpu_custom_call.1} parent=1 // pred_check_branch
      %67 = sbr.rel (0) target = $region41
    $region40: #{tpu_custom_call.1} parent=1 // pred_region
      %68 = dma.done [#allocation6], 8192
    $region41: #{tpu_custom_call.1} parent=1 // pred_fallthru
      _
    %v70 = vld [vmem:[#allocation3] sm:$0xff]
    %v71 = vld [vmem:[#allocation3 + $0x8] sm:$0xff]
    %v72 = vld [vmem:[#allocation3 + $0x10] sm:$0xff]
    %v73 = vld [vmem:[#allocation3 + $0x18] sm:$0xff]
    %v74 = vld [vmem:[#allocation3 + $0x20] sm:$0xff]
    %v75 = vld [vmem:[#allocation3 + $0x28] sm:$0xff]
    %v76 = vld [vmem:[#allocation3 + $0x30] sm:$0xff]
    %v77 = vld [vmem:[#allocation3 + $0x38] sm:$0xff]
    %v78 = vld [vmem:[#allocation3 + $0x40] sm:$0xff]
    %v79 = vld [vmem:[#allocation3 + $0x48] sm:$0xff]
    %v80 = vld [vmem:[#allocation3 + $0x50] sm:$0xff]
    %v81 = vld [vmem:[#allocation3 + $0x58] sm:$0xff]
    %v82 = vld [vmem:[#allocation3 + $0x60] sm:$0xff]
    %v83 = vld [vmem:[#allocation3 + $0x68] sm:$0xff]
    %v84 = vpack.c.bf16 %v77, %v70
    %v85 = vpack.c.bf16 %v78, %v71
    %v86 = vpack.c.bf16 %v79, %v72
    %v87 = vpack.c.bf16 %v80, %v73
    %v88 = vpack.c.bf16 %v81, %v74
    %v89 = vpack.c.bf16 %v82, %v75
    %v90 = vpack.c.bf16 %v83, %v76
    %v91 = vld [vmem:[#allocation5] sm:$0xff]
    %v92 = vld [vmem:[#allocation5 + $0x8] sm:$0xff]
    %v93 = vld [vmem:[#allocation5 + $0x10] sm:$0xff]
    %v94 = vld [vmem:[#allocation5 + $0x18] sm:$0xff]
    %v95 = vld [vmem:[#allocation5 + $0x20] sm:$0xff]
    %v96 = vld [vmem:[#allocation5 + $0x28] sm:$0xff]
    %v97 = vld [vmem:[#allocation5 + $0x30] sm:$0xff]
    %v98 = vld [vmem:[#allocation5 + $0x38] sm:$0xff]
    %v99 = vld [vmem:[#allocation5 + $0x40] sm:$0xff]
    %v100 = vld [vmem:[#allocation5 + $0x48] sm:$0xff]
    %v101 = vld [vmem:[#allocation5 + $0x50] sm:$0xff]
    %v102 = vld [vmem:[#allocation5 + $0x58] sm:$0xff]
    %v103 = vld [vmem:[#allocation5 + $0x60] sm:$0xff]
    %v104 = vld [vmem:[#allocation5 + $0x68] sm:$0xff]
    %v105 = vld [vmem:[#allocation5 + $0x70] sm:$0xff]
    %v106 = vld [vmem:[#allocation5 + $0x78] sm:$0xff]
    %v107 = vld [vmem:[#allocation5 + $0x80] sm:$0xff]
    %v108 = vld [vmem:[#allocation5 + $0x88] sm:$0xff]
    %v109 = vld [vmem:[#allocation5 + $0x90] sm:$0xff]
    %v110 = vld [vmem:[#allocation5 + $0x98] sm:$0xff]
    %v111 = vld [vmem:[#allocation5 + $0xa0] sm:$0xff]
    %v112 = vld [vmem:[#allocation5 + $0xa8] sm:$0xff]
    %v113 = vld [vmem:[#allocation5 + $0xb0] sm:$0xff]
    %v114 = vld [vmem:[#allocation5 + $0xb8] sm:$0xff]
    %v115 = vld [vmem:[#allocation5 + $0xc0] sm:$0xff]
    %v116 = vld [vmem:[#allocation5 + $0xc8] sm:$0xff]
    %v117 = vld [vmem:[#allocation5 + $0xd0] sm:$0xff]
    %v118 = vld [vmem:[#allocation5 + $0xd8] sm:$0xff]
    %v119 = vld [vmem:[#allocation5 + $0xe0] sm:$0xff]
    %v120 = vld [vmem:[#allocation5 + $0xe8] sm:$0xff]
    %v121 = vld [vmem:[#allocation5 + $0xf0] sm:$0xff]
    %v122 = vld [vmem:[#allocation5 + $0xf8] sm:$0xff]
    %v123 = vld [vmem:[#allocation5 + $0x100] sm:$0xff]
    %v124 = vld [vmem:[#allocation5 + $0x108] sm:$0xff]
    %v125 = vld [vmem:[#allocation5 + $0x110] sm:$0xff]
    %v126 = vld [vmem:[#allocation5 + $0x118] sm:$0xff]
    %v127 = vld [vmem:[#allocation5 + $0x120] sm:$0xff]
    %v128 = vld [vmem:[#allocation5 + $0x128] sm:$0xff]
    %v129 = vld [vmem:[#allocation5 + $0x130] sm:$0xff]
    %v130 = vld [vmem:[#allocation5 + $0x138] sm:$0xff]
    %v131 = vld [vmem:[#allocation5 + $0x140] sm:$0xff]
    %v132 = vld [vmem:[#allocation5 + $0x148] sm:$0xff]
    %v133 = vld [vmem:[#allocation5 + $0x150] sm:$0xff]
    %v134 = vld [vmem:[#allocation5 + $0x158] sm:$0xff]
    %v135 = vld [vmem:[#allocation5 + $0x160] sm:$0xff]
    %v136 = vld [vmem:[#allocation5 + $0x168] sm:$0xff]
    %v137 = vld [vmem:[#allocation5 + $0x170] sm:$0xff]
    %v138 = vld [vmem:[#allocation5 + $0x178] sm:$0xff]
    %v139 = vld [vmem:[#allocation5 + $0x180] sm:$0xff]
    %v140 = vld [vmem:[#allocation5 + $0x188] sm:$0xff]
    %v141 = vld [vmem:[#allocation5 + $0x190] sm:$0xff]
    %v142 = vld [vmem:[#allocation5 + $0x198] sm:$0xff]
    %v143 = vld [vmem:[#allocation5 + $0x1a0] sm:$0xff]
    %v144 = vld [vmem:[#allocation5 + $0x1a8] sm:$0xff]
    %v145 = vld [vmem:[#allocation5 + $0x1b0] sm:$0xff]
    %v146 = vld [vmem:[#allocation5 + $0x1b8] sm:$0xff]
    %v147 = vld [vmem:[#allocation5 + $0x1c0] sm:$0xff]
    %v148 = vld [vmem:[#allocation5 + $0x1c8] sm:$0xff]
    %v149 = vld [vmem:[#allocation5 + $0x1d0] sm:$0xff]
    %v150 = vld [vmem:[#allocation5 + $0x1d8] sm:$0xff]
    %v151 = vld [vmem:[#allocation5 + $0x1e0] sm:$0xff]
    %v152 = vld [vmem:[#allocation5 + $0x1e8] sm:$0xff]
    %v153 = vld [vmem:[#allocation5 + $0x1f0] sm:$0xff]
    %v154 = vld [vmem:[#allocation5 + $0x1f8] sm:$0xff]
    %v155 = vld [vmem:[#allocation5 + $0x200] sm:$0xff]
    %v156 = vld [vmem:[#allocation5 + $0x208] sm:$0xff]
    %v157 = vld [vmem:[#allocation5 + $0x210] sm:$0xff]
    %v158 = vld [vmem:[#allocation5 + $0x218] sm:$0xff]
    %v159 = vld [vmem:[#allocation5 + $0x220] sm:$0xff]
    %v160 = vld [vmem:[#allocation5 + $0x228] sm:$0xff]
    %v161 = vld [vmem:[#allocation5 + $0x230] sm:$0xff]
    %v162 = vld [vmem:[#allocation5 + $0x238] sm:$0xff]
    %v163 = vld [vmem:[#allocation5 + $0x240] sm:$0xff]
    %v164 = vld [vmem:[#allocation5 + $0x248] sm:$0xff]
    %v165 = vld [vmem:[#allocation5 + $0x250] sm:$0xff]
    %v166 = vld [vmem:[#allocation5 + $0x258] sm:$0xff]
    %v167 = vld [vmem:[#allocation5 + $0x260] sm:$0xff]
    %v168 = vld [vmem:[#allocation5 + $0x268] sm:$0xff]
    %v169 = vld [vmem:[#allocation5 + $0x270] sm:$0xff]
    %v170 = vld [vmem:[#allocation5 + $0x278] sm:$0xff]
    %v171 = vld [vmem:[#allocation5 + $0x280] sm:$0xff]
    %v172 = vld [vmem:[#allocation5 + $0x288] sm:$0xff]
    %v173 = vld [vmem:[#allocation5 + $0x290] sm:$0xff]
    %v174 = vld [vmem:[#allocation5 + $0x298] sm:$0xff]
    %v175 = vld [vmem:[#allocation5 + $0x2a0] sm:$0xff]
    %v176 = vld [vmem:[#allocation5 + $0x2a8] sm:$0xff]
    %v177 = vld [vmem:[#allocation5 + $0x2b0] sm:$0xff]
    %v178 = vld [vmem:[#allocation5 + $0x2b8] sm:$0xff]
    %v179 = vld [vmem:[#allocation5 + $0x2c0] sm:$0xff]
    %v180 = vld [vmem:[#allocation5 + $0x2c8] sm:$0xff]
    %v181 = vld [vmem:[#allocation5 + $0x2d0] sm:$0xff]
    %v182 = vld [vmem:[#allocation5 + $0x2d8] sm:$0xff]
    %v183 = vld [vmem:[#allocation5 + $0x2e0] sm:$0xff]
    %v184 = vld [vmem:[#allocation5 + $0x2e8] sm:$0xff]
    %v185 = vld [vmem:[#allocation5 + $0x2f0] sm:$0xff]
    %v186 = vld [vmem:[#allocation5 + $0x2f8] sm:$0xff]
    %v187 = vld [vmem:[#allocation5 + $0x300] sm:$0xff]
    %v188 = vld [vmem:[#allocation5 + $0x308] sm:$0xff]
    %v189 = vld [vmem:[#allocation5 + $0x310] sm:$0xff]
    %v190 = vld [vmem:[#allocation5 + $0x318] sm:$0xff]
    %v191 = vld [vmem:[#allocation5 + $0x320] sm:$0xff]
    %v192 = vld [vmem:[#allocation5 + $0x328] sm:$0xff]
    %v193 = vld [vmem:[#allocation5 + $0x330] sm:$0xff]
    %v194 = vld [vmem:[#allocation5 + $0x338] sm:$0xff]
    %v195 = vld [vmem:[#allocation5 + $0x340] sm:$0xff]
    %v196 = vld [vmem:[#allocation5 + $0x348] sm:$0xff]
    %v197 = vld [vmem:[#allocation5 + $0x350] sm:$0xff]
    %v198 = vld [vmem:[#allocation5 + $0x358] sm:$0xff]
    %v199 = vld [vmem:[#allocation5 + $0x360] sm:$0xff]
    %v200 = vld [vmem:[#allocation5 + $0x368] sm:$0xff]
    %v201 = vld [vmem:[#allocation5 + $0x370] sm:$0xff]
    %v202 = vld [vmem:[#allocation5 + $0x378] sm:$0xff]
    %v203 = vld [vmem:[#allocation5 + $0x380] sm:$0xff]
    %v204 = vld [vmem:[#allocation5 + $0x388] sm:$0xff]
    %v205 = vld [vmem:[#allocation5 + $0x390] sm:$0xff]
    %v206 = vld [vmem:[#allocation5 + $0x398] sm:$0xff]
    %v207 = vld [vmem:[#allocation5 + $0x3a0] sm:$0xff]
    %v208 = vld [vmem:[#allocation5 + $0x3a8] sm:$0xff]
    %v209 = vld [vmem:[#allocation5 + $0x3b0] sm:$0xff]
    %v210 = vld [vmem:[#allocation5 + $0x3b8] sm:$0xff]
    %v211 = vld [vmem:[#allocation5 + $0x3c0] sm:$0xff]
    %v212 = vld [vmem:[#allocation5 + $0x3c8] sm:$0xff]
    %v213 = vld [vmem:[#allocation5 + $0x3d0] sm:$0xff]
    %v214 = vld [vmem:[#allocation5 + $0x3d8] sm:$0xff]
    %v215 = vld [vmem:[#allocation5 + $0x3e0] sm:$0xff]
    %v216 = vld [vmem:[#allocation5 + $0x3e8] sm:$0xff]
    %v217 = vld [vmem:[#allocation5 + $0x3f0] sm:$0xff]
    %v218 = vld [vmem:[#allocation5 + $0x3f8] sm:$0xff]
    %v219 = vld [vmem:[#allocation5 + $0x400] sm:$0xff]
    %v220 = vld [vmem:[#allocation5 + $0x408] sm:$0xff]
    %v221 = vld [vmem:[#allocation5 + $0x410] sm:$0xff]
    %v222 = vld [vmem:[#allocation5 + $0x418] sm:$0xff]
    %v223 = vld [vmem:[#allocation5 + $0x420] sm:$0xff]
    %v224 = vld [vmem:[#allocation5 + $0x428] sm:$0xff]
    %v225 = vld [vmem:[#allocation5 + $0x430] sm:$0xff]
    %v226 = vld [vmem:[#allocation5 + $0x438] sm:$0xff]
    %v227 = vld [vmem:[#allocation5 + $0x440] sm:$0xff]
    %v228 = vld [vmem:[#allocation5 + $0x448] sm:$0xff]
    %v229 = vld [vmem:[#allocation5 + $0x450] sm:$0xff]
    %v230 = vld [vmem:[#allocation5 + $0x458] sm:$0xff]
    %v231 = vld [vmem:[#allocation5 + $0x460] sm:$0xff]
    %v232 = vld [vmem:[#allocation5 + $0x468] sm:$0xff]
    %v233 = vld [vmem:[#allocation5 + $0x470] sm:$0xff]
    %v234 = vld [vmem:[#allocation5 + $0x478] sm:$0xff]
    %v235 = vld [vmem:[#allocation5 + $0x480] sm:$0xff]
    %v236 = vld [vmem:[#allocation5 + $0x488] sm:$0xff]
    %v237 = vld [vmem:[#allocation5 + $0x490] sm:$0xff]
    %v238 = vld [vmem:[#allocation5 + $0x498] sm:$0xff]
    %v239 = vld [vmem:[#allocation5 + $0x4a0] sm:$0xff]
    %v240 = vld [vmem:[#allocation5 + $0x4a8] sm:$0xff]
    %v241 = vld [vmem:[#allocation5 + $0x4b0] sm:$0xff]
    %v242 = vld [vmem:[#allocation5 + $0x4b8] sm:$0xff]
    %v243 = vld [vmem:[#allocation5 + $0x4c0] sm:$0xff]
    %v244 = vld [vmem:[#allocation5 + $0x4c8] sm:$0xff]
    %v245 = vld [vmem:[#allocation5 + $0x4d0] sm:$0xff]
    %v246 = vld [vmem:[#allocation5 + $0x4d8] sm:$0xff]
    %v247 = vld [vmem:[#allocation5 + $0x4e0] sm:$0xff]
    %v248 = vld [vmem:[#allocation5 + $0x4e8] sm:$0xff]
    %v249 = vld [vmem:[#allocation5 + $0x4f0] sm:$0xff]
    %v250 = vld [vmem:[#allocation5 + $0x4f8] sm:$0xff]
    %v251 = vld [vmem:[#allocation5 + $0x500] sm:$0xff]
    %v252 = vld [vmem:[#allocation5 + $0x508] sm:$0xff]
    %v253 = vld [vmem:[#allocation5 + $0x510] sm:$0xff]
    %v254 = vld [vmem:[#allocation5 + $0x518] sm:$0xff]
    %v255 = vld [vmem:[#allocation5 + $0x520] sm:$0xff]
    %v256 = vld [vmem:[#allocation5 + $0x528] sm:$0xff]
    %v257 = vld [vmem:[#allocation5 + $0x530] sm:$0xff]
    %v258 = vld [vmem:[#allocation5 + $0x538] sm:$0xff]
    %v259 = vld [vmem:[#allocation5 + $0x540] sm:$0xff]
    %v260 = vld [vmem:[#allocation5 + $0x548] sm:$0xff]
    %v261 = vld [vmem:[#allocation5 + $0x550] sm:$0xff]
    %v262 = vld [vmem:[#allocation5 + $0x558] sm:$0xff]
    %v263 = vld [vmem:[#allocation5 + $0x560] sm:$0xff]
    %v264 = vld [vmem:[#allocation5 + $0x568] sm:$0xff]
    %v265 = vld [vmem:[#allocation5 + $0x570] sm:$0xff]
    %v266 = vld [vmem:[#allocation5 + $0x578] sm:$0xff]
    %v267 = vld [vmem:[#allocation5 + $0x580] sm:$0xff]
    %v268 = vld [vmem:[#allocation5 + $0x588] sm:$0xff]
    %v269 = vld [vmem:[#allocation5 + $0x590] sm:$0xff]
    %v270 = vld [vmem:[#allocation5 + $0x598] sm:$0xff]
    %v271 = vld [vmem:[#allocation5 + $0x5a0] sm:$0xff]
    %v272 = vld [vmem:[#allocation5 + $0x5a8] sm:$0xff]
    %v273 = vld [vmem:[#allocation5 + $0x5b0] sm:$0xff]
    %v274 = vld [vmem:[#allocation5 + $0x5b8] sm:$0xff]
    %v275 = vld [vmem:[#allocation5 + $0x5c0] sm:$0xff]
    %v276 = vld [vmem:[#allocation5 + $0x5c8] sm:$0xff]
    %v277 = vld [vmem:[#allocation5 + $0x5d0] sm:$0xff]
    %v278 = vld [vmem:[#allocation5 + $0x5d8] sm:$0xff]
    %v279 = vld [vmem:[#allocation5 + $0x5e0] sm:$0xff]
    %v280 = vld [vmem:[#allocation5 + $0x5e8] sm:$0xff]
    %v281 = vld [vmem:[#allocation5 + $0x5f0] sm:$0xff]
    %v282 = vld [vmem:[#allocation5 + $0x5f8] sm:$0xff]
    %v283 = vld [vmem:[#allocation5 + $0x600] sm:$0xff]
    %v284 = vld [vmem:[#allocation5 + $0x608] sm:$0xff]
    %v285 = vld [vmem:[#allocation5 + $0x610] sm:$0xff]
    %v286 = vld [vmem:[#allocation5 + $0x618] sm:$0xff]
    %v287 = vld [vmem:[%s2] sm:$0xf]
    %v289 = vlaneseq
    %v290 = vshrl.u32 %v289, 7
    %v291 = vsub.s32 0, %v290
    %v292 = vrot.slane %v287, %v291
    %v293 = vlaneseq
    %v294 = vshrl.u32 %v293, 7
    %v295 = vsub.s32 1, %v294
    %v296 = vrot.slane %v287, %v295
    %v297 = vlaneseq
    %v298 = vshrl.u32 %v297, 7
    %v299 = vsub.s32 2, %v298
    %v300 = vrot.slane %v287, %v299
    %v301 = vlaneseq
    %v302 = vshrl.u32 %v301, 7
    %v303 = vsub.s32 3, %v302
    %v304 = vrot.slane %v287, %v303
    %v505 = vunpack.c.l.b16 %v91
    %v506 = vunpack.c.h.b16 %v91
    %v507 = vunpack.c.l.b16 %v92
    %v508 = vunpack.c.h.b16 %v92
    %v509 = vunpack.c.l.b16 %v93
    %v510 = vunpack.c.h.b16 %v93
    %v511 = vunpack.c.l.b16 %v94
    %v512 = vunpack.c.h.b16 %v94
    %v513 = vunpack.c.l.b16 %v95
    %v514 = vunpack.c.h.b16 %v95
    %v515 = vunpack.c.l.b16 %v96
    %v516 = vunpack.c.h.b16 %v96
    %v517 = vunpack.c.l.b16 %v97
    %v518 = vunpack.c.h.b16 %v97
    %v519 = vunpack.c.l.b16 %v98
    %v520 = vunpack.c.h.b16 %v98
    %v521 = vunpack.c.l.b16 %v99
    %v522 = vunpack.c.h.b16 %v99
    %v523 = vunpack.c.l.b16 %v100
    %v524 = vunpack.c.h.b16 %v100
    %v525 = vunpack.c.l.b16 %v101
    %v526 = vunpack.c.h.b16 %v101
    %v527 = vunpack.c.l.b16 %v102
    %v528 = vunpack.c.h.b16 %v102
    %v529 = vunpack.c.l.b16 %v103
    %v530 = vunpack.c.h.b16 %v103
    %v531 = vunpack.c.l.b16 %v104
    %v532 = vunpack.c.h.b16 %v104
    %v533 = vunpack.c.l.b16 %v105
    %v534 = vunpack.c.h.b16 %v105
    %v535 = vunpack.c.l.b16 %v106
    %v536 = vunpack.c.h.b16 %v106
    %v537 = vunpack.c.l.b16 %v107
    %v538 = vunpack.c.h.b16 %v107
    %v539 = vunpack.c.l.b16 %v108
    %v540 = vunpack.c.h.b16 %v108
    %v541 = vunpack.c.l.b16 %v109
    %v542 = vunpack.c.h.b16 %v109
    %v543 = vunpack.c.l.b16 %v110
    %v544 = vunpack.c.h.b16 %v110
    %v545 = vunpack.c.l.b16 %v111
    %v546 = vunpack.c.h.b16 %v111
    %v547 = vunpack.c.l.b16 %v112
    %v548 = vunpack.c.h.b16 %v112
    %v549 = vunpack.c.l.b16 %v113
    %v550 = vunpack.c.h.b16 %v113
    %v551 = vunpack.c.l.b16 %v114
    %v552 = vunpack.c.h.b16 %v114
    %v553 = vunpack.c.l.b16 %v115
    %v554 = vunpack.c.h.b16 %v115
    %v555 = vunpack.c.l.b16 %v116
    %v556 = vunpack.c.h.b16 %v116
    %v557 = vunpack.c.l.b16 %v117
    %v558 = vunpack.c.h.b16 %v117
    %v559 = vunpack.c.l.b16 %v118
    %v560 = vunpack.c.h.b16 %v118
    %v561 = vunpack.c.l.b16 %v119
    %v562 = vunpack.c.h.b16 %v119
    %v563 = vunpack.c.l.b16 %v120
    %v564 = vunpack.c.h.b16 %v120
    %v565 = vunpack.c.l.b16 %v121
    %v566 = vunpack.c.h.b16 %v121
    %v567 = vunpack.c.l.b16 %v122
    %v568 = vunpack.c.h.b16 %v122
    %v569 = vunpack.c.l.b16 %v123
    %v570 = vunpack.c.h.b16 %v123
    %v571 = vunpack.c.l.b16 %v124
    %v572 = vunpack.c.h.b16 %v124
    %v573 = vunpack.c.l.b16 %v125
    %v574 = vunpack.c.h.b16 %v125
    %v575 = vunpack.c.l.b16 %v126
    %v576 = vunpack.c.h.b16 %v126
    %v577 = vunpack.c.l.b16 %v127
    %v578 = vunpack.c.h.b16 %v127
    %v579 = vunpack.c.l.b16 %v128
    %v580 = vunpack.c.h.b16 %v128
    %v581 = vunpack.c.l.b16 %v129
    %v582 = vunpack.c.h.b16 %v129
    %v583 = vunpack.c.l.b16 %v130
    %v584 = vunpack.c.h.b16 %v130
    %v585 = vunpack.c.l.b16 %v131
    %v586 = vunpack.c.h.b16 %v131
    %v587 = vunpack.c.l.b16 %v132
    %v588 = vunpack.c.h.b16 %v132
    %v589 = vunpack.c.l.b16 %v133
    %v590 = vunpack.c.h.b16 %v133
    %v591 = vunpack.c.l.b16 %v134
    %v592 = vunpack.c.h.b16 %v134
    %v593 = vunpack.c.l.b16 %v135
    %v594 = vunpack.c.h.b16 %v135
    %v595 = vunpack.c.l.b16 %v136
    %v596 = vunpack.c.h.b16 %v136
    %v597 = vunpack.c.l.b16 %v137
    %v598 = vunpack.c.h.b16 %v137
    %v599 = vunpack.c.l.b16 %v138
    %v600 = vunpack.c.h.b16 %v138
    %v601 = vunpack.c.l.b16 %v139
    %v602 = vunpack.c.h.b16 %v139
    %v603 = vunpack.c.l.b16 %v140
    %v604 = vunpack.c.h.b16 %v140
    %v605 = vunpack.c.l.b16 %v141
    %v606 = vunpack.c.h.b16 %v141
    %v607 = vunpack.c.l.b16 %v142
    %v608 = vunpack.c.h.b16 %v142
    %v609 = vunpack.c.l.b16 %v143
    %v610 = vunpack.c.h.b16 %v143
    %v611 = vunpack.c.l.b16 %v144
    %v612 = vunpack.c.h.b16 %v144
    %v613 = vunpack.c.l.b16 %v145
    %v614 = vunpack.c.h.b16 %v145
    %v615 = vunpack.c.l.b16 %v146
    %v616 = vunpack.c.h.b16 %v146
    %v617 = vunpack.c.l.b16 %v147
    %v618 = vunpack.c.h.b16 %v147
    %v619 = vunpack.c.l.b16 %v148
    %v620 = vunpack.c.h.b16 %v148
    %v621 = vunpack.c.l.b16 %v149
    %v622 = vunpack.c.h.b16 %v149
    %v623 = vunpack.c.l.b16 %v150
    %v624 = vunpack.c.h.b16 %v150
    %v625 = vunpack.c.l.b16 %v151
    %v626 = vunpack.c.h.b16 %v151
    %v627 = vunpack.c.l.b16 %v152
    %v628 = vunpack.c.h.b16 %v152
    %v629 = vunpack.c.l.b16 %v153
    %v630 = vunpack.c.h.b16 %v153
    %v631 = vunpack.c.l.b16 %v154
    %v632 = vunpack.c.h.b16 %v154
    %v633 = vunpack.c.l.b16 %v155
    %v634 = vunpack.c.h.b16 %v155
    %v635 = vunpack.c.l.b16 %v156
    %v636 = vunpack.c.h.b16 %v156
    %v637 = vunpack.c.l.b16 %v157
    %v638 = vunpack.c.h.b16 %v157
    %v639 = vunpack.c.l.b16 %v158
    %v640 = vunpack.c.h.b16 %v158
    %v641 = vunpack.c.l.b16 %v159
    %v642 = vunpack.c.h.b16 %v159
    %v643 = vunpack.c.l.b16 %v160
    %v644 = vunpack.c.h.b16 %v160
    %v645 = vunpack.c.l.b16 %v161
    %v646 = vunpack.c.h.b16 %v161
    %v647 = vunpack.c.l.b16 %v162
    %v648 = vunpack.c.h.b16 %v162
    %v649 = vunpack.c.l.b16 %v163
    %v650 = vunpack.c.h.b16 %v163
    %v651 = vunpack.c.l.b16 %v164
    %v652 = vunpack.c.h.b16 %v164
    %v653 = vunpack.c.l.b16 %v165
    %v654 = vunpack.c.h.b16 %v165
    %v655 = vunpack.c.l.b16 %v166
    %v656 = vunpack.c.h.b16 %v166
    %v657 = vunpack.c.l.b16 %v167
    %v658 = vunpack.c.h.b16 %v167
    %v659 = vunpack.c.l.b16 %v168
    %v660 = vunpack.c.h.b16 %v168
    %v661 = vunpack.c.l.b16 %v169
    %v662 = vunpack.c.h.b16 %v169
    %v663 = vunpack.c.l.b16 %v170
    %v664 = vunpack.c.h.b16 %v170
    %v665 = vunpack.c.l.b16 %v171
    %v666 = vunpack.c.h.b16 %v171
    %v667 = vunpack.c.l.b16 %v172
    %v668 = vunpack.c.h.b16 %v172
    %v669 = vunpack.c.l.b16 %v173
    %v670 = vunpack.c.h.b16 %v173
    %v671 = vunpack.c.l.b16 %v174
    %v672 = vunpack.c.h.b16 %v174
    %v673 = vunpack.c.l.b16 %v175
    %v674 = vunpack.c.h.b16 %v175
    %v675 = vunpack.c.l.b16 %v176
    %v676 = vunpack.c.h.b16 %v176
    %v677 = vunpack.c.l.b16 %v177
    %v678 = vunpack.c.h.b16 %v177
    %v679 = vunpack.c.l.b16 %v178
    %v680 = vunpack.c.h.b16 %v178
    %v681 = vunpack.c.l.b16 %v179
    %v682 = vunpack.c.h.b16 %v179
    %v683 = vunpack.c.l.b16 %v180
    %v684 = vunpack.c.h.b16 %v180
    %v685 = vunpack.c.l.b16 %v181
    %v686 = vunpack.c.h.b16 %v181
    %v687 = vunpack.c.l.b16 %v182
    %v688 = vunpack.c.h.b16 %v182
    %v689 = vunpack.c.l.b16 %v183
    %v690 = vunpack.c.h.b16 %v183
    %v691 = vunpack.c.l.b16 %v184
    %v692 = vunpack.c.h.b16 %v184
    %v693 = vunpack.c.l.b16 %v185
    %v694 = vunpack.c.h.b16 %v185
    %v695 = vunpack.c.l.b16 %v186
    %v696 = vunpack.c.h.b16 %v186
    %v697 = vunpack.c.l.b16 %v187
    %v698 = vunpack.c.h.b16 %v187
    %v699 = vunpack.c.l.b16 %v188
    %v700 = vunpack.c.h.b16 %v188
    %v701 = vunpack.c.l.b16 %v189
    %v702 = vunpack.c.h.b16 %v189
    %v703 = vunpack.c.l.b16 %v190
    %v704 = vunpack.c.h.b16 %v190
    %v705 = vunpack.c.l.b16 %v191
    %v706 = vunpack.c.h.b16 %v191
    %v707 = vunpack.c.l.b16 %v192
    %v708 = vunpack.c.h.b16 %v192
    %v709 = vunpack.c.l.b16 %v193
    %v710 = vunpack.c.h.b16 %v193
    %v711 = vunpack.c.l.b16 %v194
    %v712 = vunpack.c.h.b16 %v194
    %v713 = vunpack.c.l.b16 %v195
    %v714 = vunpack.c.h.b16 %v195
    %v715 = vunpack.c.l.b16 %v196
    %v716 = vunpack.c.h.b16 %v196
    %v717 = vunpack.c.l.b16 %v197
    %v718 = vunpack.c.h.b16 %v197
    %v719 = vunpack.c.l.b16 %v198
    %v720 = vunpack.c.h.b16 %v198
    %v721 = vunpack.c.l.b16 %v199
    %v722 = vunpack.c.h.b16 %v199
    %v723 = vunpack.c.l.b16 %v200
    %v724 = vunpack.c.h.b16 %v200
    %v725 = vunpack.c.l.b16 %v201
    %v726 = vunpack.c.h.b16 %v201
    %v727 = vunpack.c.l.b16 %v202
    %v728 = vunpack.c.h.b16 %v202
    %v729 = vunpack.c.l.b16 %v203
    %v730 = vunpack.c.h.b16 %v203
    %v731 = vunpack.c.l.b16 %v204
    %v732 = vunpack.c.h.b16 %v204
    %v733 = vunpack.c.l.b16 %v205
    %v734 = vunpack.c.h.b16 %v205
    %v735 = vunpack.c.l.b16 %v206
    %v736 = vunpack.c.h.b16 %v206
    %v737 = vunpack.c.l.b16 %v207
    %v738 = vunpack.c.h.b16 %v207
    %v739 = vunpack.c.l.b16 %v208
    %v740 = vunpack.c.h.b16 %v208
    %v741 = vunpack.c.l.b16 %v209
    %v742 = vunpack.c.h.b16 %v209
    %v743 = vunpack.c.l.b16 %v210
    %v744 = vunpack.c.h.b16 %v210
    %v745 = vunpack.c.l.b16 %v211
    %v746 = vunpack.c.h.b16 %v211
    %v747 = vunpack.c.l.b16 %v212
    %v748 = vunpack.c.h.b16 %v212
    %v749 = vunpack.c.l.b16 %v213
    %v750 = vunpack.c.h.b16 %v213
    %v751 = vunpack.c.l.b16 %v214
    %v752 = vunpack.c.h.b16 %v214
    %v753 = vunpack.c.l.b16 %v215
    %v754 = vunpack.c.h.b16 %v215
    %v755 = vunpack.c.l.b16 %v216
    %v756 = vunpack.c.h.b16 %v216
    %v757 = vunpack.c.l.b16 %v217
    %v758 = vunpack.c.h.b16 %v217
    %v759 = vunpack.c.l.b16 %v218
    %v760 = vunpack.c.h.b16 %v218
    %v761 = vunpack.c.l.b16 %v219
    %v762 = vunpack.c.h.b16 %v219
    %v763 = vunpack.c.l.b16 %v220
    %v764 = vunpack.c.h.b16 %v220
    %v765 = vunpack.c.l.b16 %v221
    %v766 = vunpack.c.h.b16 %v221
    %v767 = vunpack.c.l.b16 %v222
    %v768 = vunpack.c.h.b16 %v222
    %v769 = vunpack.c.l.b16 %v223
    %v770 = vunpack.c.h.b16 %v223
    %v771 = vunpack.c.l.b16 %v224
    %v772 = vunpack.c.h.b16 %v224
    %v773 = vunpack.c.l.b16 %v225
    %v774 = vunpack.c.h.b16 %v225
    %v775 = vunpack.c.l.b16 %v226
    %v776 = vunpack.c.h.b16 %v226
    %v777 = vunpack.c.l.b16 %v227
    %v778 = vunpack.c.h.b16 %v227
    %v779 = vunpack.c.l.b16 %v228
    %v780 = vunpack.c.h.b16 %v228
    %v781 = vunpack.c.l.b16 %v229
    %v782 = vunpack.c.h.b16 %v229
    %v783 = vunpack.c.l.b16 %v230
    %v784 = vunpack.c.h.b16 %v230
    %v785 = vunpack.c.l.b16 %v231
    %v786 = vunpack.c.h.b16 %v231
    %v787 = vunpack.c.l.b16 %v232
    %v788 = vunpack.c.h.b16 %v232
    %v789 = vunpack.c.l.b16 %v233
    %v790 = vunpack.c.h.b16 %v233
    %v791 = vunpack.c.l.b16 %v234
    %v792 = vunpack.c.h.b16 %v234
    %v793 = vunpack.c.l.b16 %v235
    %v794 = vunpack.c.h.b16 %v235
    %v795 = vunpack.c.l.b16 %v236
    %v796 = vunpack.c.h.b16 %v236
    %v797 = vunpack.c.l.b16 %v237
    %v798 = vunpack.c.h.b16 %v237
    %v799 = vunpack.c.l.b16 %v238
    %v800 = vunpack.c.h.b16 %v238
    %v801 = vunpack.c.l.b16 %v239
    %v802 = vunpack.c.h.b16 %v239
    %v803 = vunpack.c.l.b16 %v240
    %v804 = vunpack.c.h.b16 %v240
    %v805 = vunpack.c.l.b16 %v241
    %v806 = vunpack.c.h.b16 %v241
    %v807 = vunpack.c.l.b16 %v242
    %v808 = vunpack.c.h.b16 %v242
    %v809 = vunpack.c.l.b16 %v243
    %v810 = vunpack.c.h.b16 %v243
    %v811 = vunpack.c.l.b16 %v244
    %v812 = vunpack.c.h.b16 %v244
    %v813 = vunpack.c.l.b16 %v245
    %v814 = vunpack.c.h.b16 %v245
    %v815 = vunpack.c.l.b16 %v246
    %v816 = vunpack.c.h.b16 %v246
    %v817 = vunpack.c.l.b16 %v247
    %v818 = vunpack.c.h.b16 %v247
    %v819 = vunpack.c.l.b16 %v248
    %v820 = vunpack.c.h.b16 %v248
    %v821 = vunpack.c.l.b16 %v249
    %v822 = vunpack.c.h.b16 %v249
    %v823 = vunpack.c.l.b16 %v250
    %v824 = vunpack.c.h.b16 %v250
    %v825 = vunpack.c.l.b16 %v251
    %v826 = vunpack.c.h.b16 %v251
    %v827 = vunpack.c.l.b16 %v252
    %v828 = vunpack.c.h.b16 %v252
    %v829 = vunpack.c.l.b16 %v253
    %v830 = vunpack.c.h.b16 %v253
    %v831 = vunpack.c.l.b16 %v254
    %v832 = vunpack.c.h.b16 %v254
    %v833 = vunpack.c.l.b16 %v255
    %v834 = vunpack.c.h.b16 %v255
    %v835 = vunpack.c.l.b16 %v256
    %v836 = vunpack.c.h.b16 %v256
    %v837 = vunpack.c.l.b16 %v257
    %v838 = vunpack.c.h.b16 %v257
    %v839 = vunpack.c.l.b16 %v258
    %v840 = vunpack.c.h.b16 %v258
    %v841 = vunpack.c.l.b16 %v259
    %v842 = vunpack.c.h.b16 %v259
    %v843 = vunpack.c.l.b16 %v260
    %v844 = vunpack.c.h.b16 %v260
    %v845 = vunpack.c.l.b16 %v261
    %v846 = vunpack.c.h.b16 %v261
    %v847 = vunpack.c.l.b16 %v262
    %v848 = vunpack.c.h.b16 %v262
    %v849 = vunpack.c.l.b16 %v263
    %v850 = vunpack.c.h.b16 %v263
    %v851 = vunpack.c.l.b16 %v264
    %v852 = vunpack.c.h.b16 %v264
    %v853 = vunpack.c.l.b16 %v265
    %v854 = vunpack.c.h.b16 %v265
    %v855 = vunpack.c.l.b16 %v266
    %v856 = vunpack.c.h.b16 %v266
    %v857 = vunpack.c.l.b16 %v267
    %v858 = vunpack.c.h.b16 %v267
    %v859 = vunpack.c.l.b16 %v268
    %v860 = vunpack.c.h.b16 %v268
    %v861 = vunpack.c.l.b16 %v269
    %v862 = vunpack.c.h.b16 %v269
    %v863 = vunpack.c.l.b16 %v270
    %v864 = vunpack.c.h.b16 %v270
    %v865 = vunpack.c.l.b16 %v271
    %v866 = vunpack.c.h.b16 %v271
    %v867 = vunpack.c.l.b16 %v272
    %v868 = vunpack.c.h.b16 %v272
    %v869 = vunpack.c.l.b16 %v273
    %v870 = vunpack.c.h.b16 %v273
    %v871 = vunpack.c.l.b16 %v274
    %v872 = vunpack.c.h.b16 %v274
    %v873 = vunpack.c.l.b16 %v275
    %v874 = vunpack.c.h.b16 %v275
    %v875 = vunpack.c.l.b16 %v276
    %v876 = vunpack.c.h.b16 %v276
    %v877 = vunpack.c.l.b16 %v277
    %v878 = vunpack.c.h.b16 %v277
    %v879 = vunpack.c.l.b16 %v278
    %v880 = vunpack.c.h.b16 %v278
    %v881 = vunpack.c.l.b16 %v279
    %v882 = vunpack.c.h.b16 %v279
    %v883 = vunpack.c.l.b16 %v280
    %v884 = vunpack.c.h.b16 %v280
    %v885 = vunpack.c.l.b16 %v281
    %v886 = vunpack.c.h.b16 %v281
    %v887 = vunpack.c.l.b16 %v282
    %v888 = vunpack.c.h.b16 %v282
    %v889 = vunpack.c.l.b16 %v283
    %v890 = vunpack.c.h.b16 %v283
    %v891 = vunpack.c.l.b16 %v284
    %v892 = vunpack.c.h.b16 %v284
    %v893 = vunpack.c.l.b16 %v285
    %v894 = vunpack.c.h.b16 %v285
    %v895 = vunpack.c.l.b16 %v286
    %v896 = vunpack.c.h.b16 %v286
    %v897 = vpack.c.b16 %v509, %v505
    %v898 = vpack.c.b16 %v510, %v506
    %v899 = vpack.c.b16 %v511, %v507
    %v900 = vpack.c.b16 %v512, %v508
    %v901 = vpack.c.b16 %v517, %v513
    %v902 = vpack.c.b16 %v518, %v514
    %v903 = vpack.c.b16 %v519, %v515
    %v904 = vpack.c.b16 %v520, %v516
    %v905 = vpack.c.b16 %v525, %v521
    %v906 = vpack.c.b16 %v526, %v522
    %v907 = vpack.c.b16 %v527, %v523
    %v908 = vpack.c.b16 %v528, %v524
    %v909 = vpack.c.b16 %v533, %v529
    %v910 = vpack.c.b16 %v534, %v530
    %v911 = vpack.c.b16 %v535, %v531
    %v912 = vpack.c.b16 %v536, %v532
    %v913 = vpack.c.b16 %v541, %v537
    %v914 = vpack.c.b16 %v542, %v538
    %v915 = vpack.c.b16 %v543, %v539
    %v916 = vpack.c.b16 %v544, %v540
    %v917 = vpack.c.b16 %v549, %v545
    %v918 = vpack.c.b16 %v550, %v546
    %v919 = vpack.c.b16 %v551, %v547
    %v920 = vpack.c.b16 %v552, %v548
    %v921 = vpack.c.b16 %v557, %v553
    %v922 = vpack.c.b16 %v558, %v554
    %v923 = vpack.c.b16 %v559, %v555
    %v924 = vpack.c.b16 %v560, %v556
    %v925 = vpack.c.b16 %v565, %v561
    %v926 = vpack.c.b16 %v566, %v562
    %v927 = vpack.c.b16 %v567, %v563
    %v928 = vpack.c.b16 %v568, %v564
    %v929 = vpack.c.b16 %v573, %v569
    %v930 = vpack.c.b16 %v574, %v570
    %v931 = vpack.c.b16 %v575, %v571
    %v932 = vpack.c.b16 %v576, %v572
    %v933 = vpack.c.b16 %v581, %v577
    %v934 = vpack.c.b16 %v582, %v578
    %v935 = vpack.c.b16 %v583, %v579
    %v936 = vpack.c.b16 %v584, %v580
    %v937 = vpack.c.b16 %v589, %v585
    %v938 = vpack.c.b16 %v590, %v586
    %v939 = vpack.c.b16 %v591, %v587
    %v940 = vpack.c.b16 %v592, %v588
    %v941 = vpack.c.b16 %v597, %v593
    %v942 = vpack.c.b16 %v598, %v594
    %v943 = vpack.c.b16 %v599, %v595
    %v944 = vpack.c.b16 %v600, %v596
    %v945 = vpack.c.b16 %v605, %v601
    %v946 = vpack.c.b16 %v606, %v602
    %v947 = vpack.c.b16 %v607, %v603
    %v948 = vpack.c.b16 %v608, %v604
    %v949 = vpack.c.b16 %v613, %v609
    %v950 = vpack.c.b16 %v614, %v610
    %v951 = vpack.c.b16 %v615, %v611
    %v952 = vpack.c.b16 %v616, %v612
    %v953 = vpack.c.b16 %v621, %v617
    %v954 = vpack.c.b16 %v622, %v618
    %v955 = vpack.c.b16 %v623, %v619
    %v956 = vpack.c.b16 %v624, %v620
    %v957 = vpack.c.b16 %v629, %v625
    %v958 = vpack.c.b16 %v630, %v626
    %v959 = vpack.c.b16 %v631, %v627
    %v960 = vpack.c.b16 %v632, %v628
    %v961 = vpack.c.b16 %v637, %v633
    %v962 = vpack.c.b16 %v638, %v634
    %v963 = vpack.c.b16 %v639, %v635
    %v964 = vpack.c.b16 %v640, %v636
    %v965 = vpack.c.b16 %v645, %v641
    %v966 = vpack.c.b16 %v646, %v642
    %v967 = vpack.c.b16 %v647, %v643
    %v968 = vpack.c.b16 %v648, %v644
    %v969 = vpack.c.b16 %v653, %v649
    %v970 = vpack.c.b16 %v654, %v650
    %v971 = vpack.c.b16 %v655, %v651
    %v972 = vpack.c.b16 %v656, %v652
    %v973 = vpack.c.b16 %v661, %v657
    %v974 = vpack.c.b16 %v662, %v658
    %v975 = vpack.c.b16 %v663, %v659
    %v976 = vpack.c.b16 %v664, %v660
    %v977 = vpack.c.b16 %v669, %v665
    %v978 = vpack.c.b16 %v670, %v666
    %v979 = vpack.c.b16 %v671, %v667
    %v980 = vpack.c.b16 %v672, %v668
    %v981 = vpack.c.b16 %v677, %v673
    %v982 = vpack.c.b16 %v678, %v674
    %v983 = vpack.c.b16 %v679, %v675
    %v984 = vpack.c.b16 %v680, %v676
    %v985 = vpack.c.b16 %v685, %v681
    %v986 = vpack.c.b16 %v686, %v682
    %v987 = vpack.c.b16 %v687, %v683
    %v988 = vpack.c.b16 %v688, %v684
    %v989 = vpack.c.b16 %v693, %v689
    %v990 = vpack.c.b16 %v694, %v690
    %v991 = vpack.c.b16 %v695, %v691
    %v992 = vpack.c.b16 %v696, %v692
    %v993 = vpack.c.b16 %v701, %v697
    %v994 = vpack.c.b16 %v702, %v698
    %v995 = vpack.c.b16 %v703, %v699
    %v996 = vpack.c.b16 %v704, %v700
    %v997 = vpack.c.b16 %v709, %v705
    %v998 = vpack.c.b16 %v710, %v706
    %v999 = vpack.c.b16 %v711, %v707
    %v1000 = vpack.c.b16 %v712, %v708
    %v1001 = vpack.c.b16 %v717, %v713
    %v1002 = vpack.c.b16 %v718, %v714
    %v1003 = vpack.c.b16 %v719, %v715
    %v1004 = vpack.c.b16 %v720, %v716
    %v1005 = vpack.c.b16 %v725, %v721
    %v1006 = vpack.c.b16 %v726, %v722
    %v1007 = vpack.c.b16 %v727, %v723
    %v1008 = vpack.c.b16 %v728, %v724
    %v1009 = vpack.c.b16 %v733, %v729
    %v1010 = vpack.c.b16 %v734, %v730
    %v1011 = vpack.c.b16 %v735, %v731
    %v1012 = vpack.c.b16 %v736, %v732
    %v1013 = vpack.c.b16 %v741, %v737
    %v1014 = vpack.c.b16 %v742, %v738
    %v1015 = vpack.c.b16 %v743, %v739
    %v1016 = vpack.c.b16 %v744, %v740
    %v1017 = vpack.c.b16 %v749, %v745
    %v1018 = vpack.c.b16 %v750, %v746
    %v1019 = vpack.c.b16 %v751, %v747
    %v1020 = vpack.c.b16 %v752, %v748
    %v1021 = vpack.c.b16 %v757, %v753
    %v1022 = vpack.c.b16 %v758, %v754
    %v1023 = vpack.c.b16 %v759, %v755
    %v1024 = vpack.c.b16 %v760, %v756
    %v1025 = vpack.c.b16 %v765, %v761
    %v1026 = vpack.c.b16 %v766, %v762
    %v1027 = vpack.c.b16 %v767, %v763
    %v1028 = vpack.c.b16 %v768, %v764
    %v1029 = vpack.c.b16 %v773, %v769
    %v1030 = vpack.c.b16 %v774, %v770
    %v1031 = vpack.c.b16 %v775, %v771
    %v1032 = vpack.c.b16 %v776, %v772
    %v1033 = vpack.c.b16 %v781, %v777
    %v1034 = vpack.c.b16 %v782, %v778
    %v1035 = vpack.c.b16 %v783, %v779
    %v1036 = vpack.c.b16 %v784, %v780
    %v1037 = vpack.c.b16 %v789, %v785
    %v1038 = vpack.c.b16 %v790, %v786
    %v1039 = vpack.c.b16 %v791, %v787
    %v1040 = vpack.c.b16 %v792, %v788
    %v1041 = vpack.c.b16 %v797, %v793
    %v1042 = vpack.c.b16 %v798, %v794
    %v1043 = vpack.c.b16 %v799, %v795
    %v1044 = vpack.c.b16 %v800, %v796
    %v1045 = vpack.c.b16 %v805, %v801
    %v1046 = vpack.c.b16 %v806, %v802
    %v1047 = vpack.c.b16 %v807, %v803
    %v1048 = vpack.c.b16 %v808, %v804
    %v1049 = vpack.c.b16 %v813, %v809
    %v1050 = vpack.c.b16 %v814, %v810
    %v1051 = vpack.c.b16 %v815, %v811
    %v1052 = vpack.c.b16 %v816, %v812
    %v1053 = vpack.c.b16 %v821, %v817
    %v1054 = vpack.c.b16 %v822, %v818
    %v1055 = vpack.c.b16 %v823, %v819
    %v1056 = vpack.c.b16 %v824, %v820
    %v1057 = vpack.c.b16 %v829, %v825
    %v1058 = vpack.c.b16 %v830, %v826
    %v1059 = vpack.c.b16 %v831, %v827
    %v1060 = vpack.c.b16 %v832, %v828
    %v1061 = vpack.c.b16 %v837, %v833
    %v1062 = vpack.c.b16 %v838, %v834
    %v1063 = vpack.c.b16 %v839, %v835
    %v1064 = vpack.c.b16 %v840, %v836
    %v1065 = vpack.c.b16 %v845, %v841
    %v1066 = vpack.c.b16 %v846, %v842
    %v1067 = vpack.c.b16 %v847, %v843
    %v1068 = vpack.c.b16 %v848, %v844
    %v1069 = vpack.c.b16 %v853, %v849
    %v1070 = vpack.c.b16 %v854, %v850
    %v1071 = vpack.c.b16 %v855, %v851
    %v1072 = vpack.c.b16 %v856, %v852
    %v1073 = vpack.c.b16 %v861, %v857
    %v1074 = vpack.c.b16 %v862, %v858
    %v1075 = vpack.c.b16 %v863, %v859
    %v1076 = vpack.c.b16 %v864, %v860
    %v1077 = vpack.c.b16 %v869, %v865
    %v1078 = vpack.c.b16 %v870, %v866
    %v1079 = vpack.c.b16 %v871, %v867
    %v1080 = vpack.c.b16 %v872, %v868
    %v1081 = vpack.c.b16 %v877, %v873
    %v1082 = vpack.c.b16 %v878, %v874
    %v1083 = vpack.c.b16 %v879, %v875
    %v1084 = vpack.c.b16 %v880, %v876
    %v1085 = vpack.c.b16 %v885, %v881
    %v1086 = vpack.c.b16 %v886, %v882
    %v1087 = vpack.c.b16 %v887, %v883
    %v1088 = vpack.c.b16 %v888, %v884
    %v1089 = vpack.c.b16 %v893, %v889
    %v1090 = vpack.c.b16 %v894, %v890
    %v1091 = vpack.c.b16 %v895, %v891
    %v1092 = vpack.c.b16 %v896, %v892
    %vm1289 = vcmask 130048
    %v1291 = vsel %vm1289, %v90, 0
    %1293 = vmatprep.subr.bf16.mxu0 %v898
    %1294 = vmatpush1.bf16.msra.mxu0 %v897
    %1295 = vmatprep.subr.bf16.mxu0 %v902
    %1296 = vmatpush1.bf16.msra.mxu0 %v901
    %1297 = vmatprep.subr.bf16.mxu0 %v906
    %1298 = vmatpush1.bf16.msra.mxu0 %v905
    %1299 = vmatprep.subr.bf16.mxu0 %v910
    %1300 = vmatpush1.bf16.msra.mxu0 %v909
    %1301 = vmatprep.subr.bf16.mxu0 %v914
    %1302 = vmatpush1.bf16.msra.mxu0 %v913
    %1303 = vmatprep.subr.bf16.mxu0 %v918
    %1304 = vmatpush1.bf16.msra.mxu0 %v917
    %1305 = vmatprep.subr.bf16.mxu0 %v922
    %1306 = vmatpush1.bf16.msra.mxu0 %v921
    %1307 = vmatprep.subr.bf16.mxu0 %v926
    %1308 = vmatpush1.bf16.msra.mxu0 %v925
    %1309 = vmatprep.subr.bf16.mxu0 %v930
    %1310 = vmatpush1.bf16.msra.mxu0 %v929
    %1311 = vmatprep.subr.bf16.mxu0 %v934
    %1312 = vmatpush1.bf16.msra.mxu0 %v933
    %1313 = vmatprep.subr.bf16.mxu0 %v938
    %1314 = vmatpush1.bf16.msra.mxu0 %v937
    %1315 = vmatprep.subr.bf16.mxu0 %v942
    %1316 = vmatpush1.bf16.msra.mxu0 %v941
    %1317 = vmatprep.subr.bf16.mxu0 %v946
    %1318 = vmatpush1.bf16.msra.mxu0 %v945
    %1319 = vmatprep.subr.bf16.mxu0 %v950
    %1320 = vmatpush1.bf16.msra.mxu0 %v949
    %1321 = vmatprep.subr.bf16.mxu0 %v954
    %1322 = vmatpush1.bf16.msra.mxu0 %v953
    %1323 = vmatprep.subr.bf16.mxu0 %v958
    %1324 = vmatpush1.bf16.msra.mxu0 %v957
    %1325 = vmatprep.mubr.bf16.mxu0 %v85
    %1326 = vmatmul.mubr.bf16.gmra.mrb[0].mxu0 %v84
    %v1327 = vpop.f32.mrb[0].mxu0
    %v1328 = vadd.f32 %v292, %v1327
    %v1329 = vpop.f32.mrb[0].mxu0
    %v1330 = vadd.f32 %v296, %v1329
    %v1331 = vpop.f32.mrb[0].mxu0
    %v1332 = vadd.f32 %v292, %v1331
    %v1333 = vpop.f32.mrb[0].mxu0
    %v1334 = vadd.f32 %v296, %v1333
    %1335 = vdwg.mxu0
    %1336 = vmatprep.subr.bf16.mxu0 %v962
    %1337 = vmatpush1.bf16.msra.mxu0 %v961
    %1338 = vmatprep.subr.bf16.mxu0 %v966
    %1339 = vmatpush1.bf16.msra.mxu0 %v965
    %1340 = vmatprep.subr.bf16.mxu0 %v970
    %1341 = vmatpush1.bf16.msra.mxu0 %v969
    %1342 = vmatprep.subr.bf16.mxu0 %v974
    %1343 = vmatpush1.bf16.msra.mxu0 %v973
    %1344 = vmatprep.subr.bf16.mxu0 %v978
    %1345 = vmatpush1.bf16.msra.mxu0 %v977
    %1346 = vmatprep.subr.bf16.mxu0 %v982
    %1347 = vmatpush1.bf16.msra.mxu0 %v981
    %1348 = vmatprep.subr.bf16.mxu0 %v986
    %1349 = vmatpush1.bf16.msra.mxu0 %v985
    %1350 = vmatprep.subr.bf16.mxu0 %v990
    %1351 = vmatpush1.bf16.msra.mxu0 %v989
    %1352 = vmatprep.subr.bf16.mxu0 %v994
    %1353 = vmatpush1.bf16.msra.mxu0 %v993
    %1354 = vmatprep.subr.bf16.mxu0 %v998
    %1355 = vmatpush1.bf16.msra.mxu0 %v997
    %1356 = vmatprep.subr.bf16.mxu0 %v1002
    %1357 = vmatpush1.bf16.msra.mxu0 %v1001
    %1358 = vmatprep.subr.bf16.mxu0 %v1006
    %1359 = vmatpush1.bf16.msra.mxu0 %v1005
    %1360 = vmatprep.subr.bf16.mxu0 %v1010
    %1361 = vmatpush1.bf16.msra.mxu0 %v1009
    %1362 = vmatprep.subr.bf16.mxu0 %v1014
    %1363 = vmatpush1.bf16.msra.mxu0 %v1013
    %1364 = vmatprep.subr.bf16.mxu0 %v1018
    %1365 = vmatpush1.bf16.msra.mxu0 %v1017
    %1366 = vmatprep.subr.bf16.mxu0 %v1022
    %1367 = vmatpush1.bf16.msra.mxu0 %v1021
    %1368 = vmatprep.mubr.bf16.mxu0 %v87
    %1369 = vmatmul.mubr.bf16.gmra.mrb[0].mxu0 %v86
    %v1370 = vpop.f32.mrb[0].mxu0
    %v1371 = vadd.f32 %v1328, %v1370
    %v1372 = vpop.f32.mrb[0].mxu0
    %v1373 = vadd.f32 %v1330, %v1372
    %v1374 = vpop.f32.mrb[0].mxu0
    %v1375 = vadd.f32 %v1332, %v1374
    %v1376 = vpop.f32.mrb[0].mxu0
    %v1377 = vadd.f32 %v1334, %v1376
    %1378 = vdwg.mxu0
    %1379 = vmatprep.subr.bf16.mxu0 %v1026
    %1380 = vmatpush1.bf16.msra.mxu0 %v1025
    %1381 = vmatprep.subr.bf16.mxu0 %v1030
    %1382 = vmatpush1.bf16.msra.mxu0 %v1029
    %1383 = vmatprep.subr.bf16.mxu0 %v1034
    %1384 = vmatpush1.bf16.msra.mxu0 %v1033
    %1385 = vmatprep.subr.bf16.mxu0 %v1038
    %1386 = vmatpush1.bf16.msra.mxu0 %v1037
    %1387 = vmatprep.subr.bf16.mxu0 %v1042
    %1388 = vmatpush1.bf16.msra.mxu0 %v1041
    %1389 = vmatprep.subr.bf16.mxu0 %v1046
    %1390 = vmatpush1.bf16.msra.mxu0 %v1045
    %1391 = vmatprep.subr.bf16.mxu0 %v1050
    %1392 = vmatpush1.bf16.msra.mxu0 %v1049
    %1393 = vmatprep.subr.bf16.mxu0 %v1054
    %1394 = vmatpush1.bf16.msra.mxu0 %v1053
    %1395 = vmatprep.subr.bf16.mxu0 %v1058
    %1396 = vmatpush1.bf16.msra.mxu0 %v1057
    %1397 = vmatprep.subr.bf16.mxu0 %v1062
    %1398 = vmatpush1.bf16.msra.mxu0 %v1061
    %1399 = vmatprep.subr.bf16.mxu0 %v1066
    %1400 = vmatpush1.bf16.msra.mxu0 %v1065
    %1401 = vmatprep.subr.bf16.mxu0 %v1070
    %1402 = vmatpush1.bf16.msra.mxu0 %v1069
    %1403 = vmatprep.subr.bf16.mxu0 %v1074
    %1404 = vmatpush1.bf16.msra.mxu0 %v1073
    %1405 = vmatprep.subr.bf16.mxu0 %v1078
    %1406 = vmatpush1.bf16.msra.mxu0 %v1077
    %1407 = vmatprep.subr.bf16.mxu0 %v1082
    %1408 = vmatpush1.bf16.msra.mxu0 %v1081
    %1409 = vmatprep.subr.bf16.mxu0 %v1086
    %1410 = vmatpush1.bf16.msra.mxu0 %v1085
    %1411 = vmatprep.mubr.bf16.mxu0 %v89
    %1412 = vmatmul.mubr.bf16.gmra.mrb[0].mxu0 %v88
    %v1413 = vpop.f32.mrb[0].mxu0
    %v1414 = vadd.f32 %v1371, %v1413
    %v1415 = vpop.f32.mrb[0].mxu0
    %v1416 = vadd.f32 %v1373, %v1415
    %v1417 = vpop.f32.mrb[0].mxu0
    %v1418 = vadd.f32 %v1375, %v1417
    %v1419 = vpop.f32.mrb[0].mxu0
    %v1420 = vadd.f32 %v1377, %v1419
    %1421 = vdwg.mxu0
    %1422 = vmatprep.subr.bf16.mxu0 %v1090
    %1423 = vmatpush1.bf16.msra.mxu0 %v1089
    %1424 = vmatprep.subr.bf16.mxu0 0
    %1425 = vmatpush1.bf16.msra.mxu0 0
    %1426 = vmatprep.subr.bf16.mxu0 0
    %1427 = vmatpush1.bf16.msra.mxu0 0
    %1428 = vmatprep.subr.bf16.mxu0 0
    %1429 = vmatpush1.bf16.msra.mxu0 0
    %1430 = vmatprep.subr.bf16.mxu0 0
    %1431 = vmatpush1.bf16.msra.mxu0 0
    %1432 = vmatprep.subr.bf16.mxu0 0
    %1433 = vmatpush1.bf16.msra.mxu0 0
    %1434 = vmatprep.subr.bf16.mxu0 0
    %1435 = vmatpush1.bf16.msra.mxu0 0
    %1436 = vmatprep.subr.bf16.mxu0 0
    %1437 = vmatpush1.bf16.msra.mxu0 0
    %1438 = vmatprep.subr.bf16.mxu0 0
    %1439 = vmatpush1.bf16.msra.mxu0 0
    %1440 = vmatprep.subr.bf16.mxu0 0
    %1441 = vmatpush1.bf16.msra.mxu0 0
    %1442 = vmatprep.subr.bf16.mxu0 0
    %1443 = vmatpush1.bf16.msra.mxu0 0
    %1444 = vmatprep.subr.bf16.mxu0 0
    %1445 = vmatpush1.bf16.msra.mxu0 0
    %1446 = vmatprep.subr.bf16.mxu0 0
    %1447 = vmatpush1.bf16.msra.mxu0 0
    %1448 = vmatprep.subr.bf16.mxu0 0
    %1449 = vmatpush1.bf16.msra.mxu0 0
    %1450 = vmatprep.subr.bf16.mxu0 0
    %1451 = vmatpush1.bf16.msra.mxu0 0
    %1452 = vmatprep.subr.bf16.mxu0 0
    %1453 = vmatpush1.bf16.msra.mxu0 0
    %1454 = vmatprep.mubr.bf16.mxu0 0
    %1455 = vmatmul.mubr.bf16.gmra.mrb[0].mxu0 %v1291
    %v1456 = vpop.f32.mrb[0].mxu0
    %v1457 = vadd.f32 %v1414, %v1456
    %v1458 = vpop.f32.mrb[0].mxu0
    %v1459 = vadd.f32 %v1416, %v1458
    %v1460 = vpop.f32.mrb[0].mxu0
    %v1461 = vadd.f32 %v1418, %v1460
    %v1462 = vpop.f32.mrb[0].mxu0
    %v1463 = vadd.f32 %v1420, %v1462
    %1464 = vdwg.mxu0
    %1465 = vmatprep.subr.bf16.mxu0 %v900
    %1466 = vmatpush1.bf16.msra.mxu0 %v899
    %1467 = vmatprep.subr.bf16.mxu0 %v904
    %1468 = vmatpush1.bf16.msra.mxu0 %v903
    %1469 = vmatprep.subr.bf16.mxu0 %v908
    %1470 = vmatpush1.bf16.msra.mxu0 %v907
    %1471 = vmatprep.subr.bf16.mxu0 %v912
    %1472 = vmatpush1.bf16.msra.mxu0 %v911
    %1473 = vmatprep.subr.bf16.mxu0 %v916
    %1474 = vmatpush1.bf16.msra.mxu0 %v915
    %1475 = vmatprep.subr.bf16.mxu0 %v920
    %1476 = vmatpush1.bf16.msra.mxu0 %v919
    %1477 = vmatprep.subr.bf16.mxu0 %v924
    %1478 = vmatpush1.bf16.msra.mxu0 %v923
    %1479 = vmatprep.subr.bf16.mxu0 %v928
    %1480 = vmatpush1.bf16.msra.mxu0 %v927
    %1481 = vmatprep.subr.bf16.mxu0 %v932
    %1482 = vmatpush1.bf16.msra.mxu0 %v931
    %1483 = vmatprep.subr.bf16.mxu0 %v936
    %1484 = vmatpush1.bf16.msra.mxu0 %v935
    %1485 = vmatprep.subr.bf16.mxu0 %v940
    %1486 = vmatpush1.bf16.msra.mxu0 %v939
    %1487 = vmatprep.subr.bf16.mxu0 %v944
    %1488 = vmatpush1.bf16.msra.mxu0 %v943
    %1489 = vmatprep.subr.bf16.mxu0 %v948
    %1490 = vmatpush1.bf16.msra.mxu0 %v947
    %1491 = vmatprep.subr.bf16.mxu0 %v952
    %1492 = vmatpush1.bf16.msra.mxu0 %v951
    %1493 = vmatprep.subr.bf16.mxu0 %v956
    %1494 = vmatpush1.bf16.msra.mxu0 %v955
    %1495 = vmatprep.subr.bf16.mxu0 %v960
    %1496 = vmatpush1.bf16.msra.mxu0 %v959
    %1497 = vmatprep.mubr.bf16.mxu0 %v85
    %1498 = vmatmul.mubr.bf16.gmra.mrb[0].mxu0 %v84
    %v1499 = vpop.f32.mrb[0].mxu0
    %v1500 = vadd.f32 %v300, %v1499
    %v1501 = vpop.f32.mrb[0].mxu0
    %v1502 = vadd.f32 %v304, %v1501
    %v1503 = vpop.f32.mrb[0].mxu0
    %v1504 = vadd.f32 %v300, %v1503
    %v1505 = vpop.f32.mrb[0].mxu0
    %v1506 = vadd.f32 %v304, %v1505
    %1507 = vdwg.mxu0
    %1508 = vmatprep.subr.bf16.mxu0 %v964
    %1509 = vmatpush1.bf16.msra.mxu0 %v963
    %1510 = vmatprep.subr.bf16.mxu0 %v968
    %1511 = vmatpush1.bf16.msra.mxu0 %v967
    %1512 = vmatprep.subr.bf16.mxu0 %v972
    %1513 = vmatpush1.bf16.msra.mxu0 %v971
    %1514 = vmatprep.subr.bf16.mxu0 %v976
    %1515 = vmatpush1.bf16.msra.mxu0 %v975
    %1516 = vmatprep.subr.bf16.mxu0 %v980
    %1517 = vmatpush1.bf16.msra.mxu0 %v979
    %1518 = vmatprep.subr.bf16.mxu0 %v984
    %1519 = vmatpush1.bf16.msra.mxu0 %v983
    %1520 = vmatprep.subr.bf16.mxu0 %v988
    %1521 = vmatpush1.bf16.msra.mxu0 %v987
    %1522 = vmatprep.subr.bf16.mxu0 %v992
    %1523 = vmatpush1.bf16.msra.mxu0 %v991
    %1524 = vmatprep.subr.bf16.mxu0 %v996
    %1525 = vmatpush1.bf16.msra.mxu0 %v995
    %1526 = vmatprep.subr.bf16.mxu0 %v1000
    %1527 = vmatpush1.bf16.msra.mxu0 %v999
    %1528 = vmatprep.subr.bf16.mxu0 %v1004
    %1529 = vmatpush1.bf16.msra.mxu0 %v1003
    %1530 = vmatprep.subr.bf16.mxu0 %v1008
    %1531 = vmatpush1.bf16.msra.mxu0 %v1007
    %1532 = vmatprep.subr.bf16.mxu0 %v1012
    %1533 = vmatpush1.bf16.msra.mxu0 %v1011
    %1534 = vmatprep.subr.bf16.mxu0 %v1016
    %1535 = vmatpush1.bf16.msra.mxu0 %v1015
    %1536 = vmatprep.subr.bf16.mxu0 %v1020
    %1537 = vmatpush1.bf16.msra.mxu0 %v1019
    %1538 = vmatprep.subr.bf16.mxu0 %v1024
    %1539 = vmatpush1.bf16.msra.mxu0 %v1023
    %1540 = vmatprep.mubr.bf16.mxu0 %v87
    %1541 = vmatmul.mubr.bf16.gmra.mrb[0].mxu0 %v86
    %v1542 = vpop.f32.mrb[0].mxu0
    %v1543 = vadd.f32 %v1500, %v1542
    %v1544 = vpop.f32.mrb[0].mxu0
    %v1545 = vadd.f32 %v1502, %v1544
    %v1546 = vpop.f32.mrb[0].mxu0
    %v1547 = vadd.f32 %v1504, %v1546
    %v1548 = vpop.f32.mrb[0].mxu0
    %v1549 = vadd.f32 %v1506, %v1548
    %1550 = vdwg.mxu0
    %1551 = vmatprep.subr.bf16.mxu0 %v1028
    %1552 = vmatpush1.bf16.msra.mxu0 %v1027
    %1553 = vmatprep.subr.bf16.mxu0 %v1032
    %1554 = vmatpush1.bf16.msra.mxu0 %v1031
    %1555 = vmatprep.subr.bf16.mxu0 %v1036
    %1556 = vmatpush1.bf16.msra.mxu0 %v1035
    %1557 = vmatprep.subr.bf16.mxu0 %v1040
    %1558 = vmatpush1.bf16.msra.mxu0 %v1039
    %1559 = vmatprep.subr.bf16.mxu0 %v1044
    %1560 = vmatpush1.bf16.msra.mxu0 %v1043
    %1561 = vmatprep.subr.bf16.mxu0 %v1048
    %1562 = vmatpush1.bf16.msra.mxu0 %v1047
    %1563 = vmatprep.subr.bf16.mxu0 %v1052
    %1564 = vmatpush1.bf16.msra.mxu0 %v1051
    %1565 = vmatprep.subr.bf16.mxu0 %v1056
    %1566 = vmatpush1.bf16.msra.mxu0 %v1055
    %1567 = vmatprep.subr.bf16.mxu0 %v1060
    %1568 = vmatpush1.bf16.msra.mxu0 %v1059
    %1569 = vmatprep.subr.bf16.mxu0 %v1064
    %1570 = vmatpush1.bf16.msra.mxu0 %v1063
    %1571 = vmatprep.subr.bf16.mxu0 %v1068
    %1572 = vmatpush1.bf16.msra.mxu0 %v1067
    %1573 = vmatprep.subr.bf16.mxu0 %v1072
    %1574 = vmatpush1.bf16.msra.mxu0 %v1071
    %1575 = vmatprep.subr.bf16.mxu0 %v1076
    %1576 = vmatpush1.bf16.msra.mxu0 %v1075
    %1577 = vmatprep.subr.bf16.mxu0 %v1080
    %1578 = vmatpush1.bf16.msra.mxu0 %v1079
    %1579 = vmatprep.subr.bf16.mxu0 %v1084
    %1580 = vmatpush1.bf16.msra.mxu0 %v1083
    %1581 = vmatprep.subr.bf16.mxu0 %v1088
    %1582 = vmatpush1.bf16.msra.mxu0 %v1087
    %1583 = vmatprep.mubr.bf16.mxu0 %v89
    %1584 = vmatmul.mubr.bf16.gmra.mrb[0].mxu0 %v88
    %v1585 = vpop.f32.mrb[0].mxu0
    %v1586 = vadd.f32 %v1543, %v1585
    %v1587 = vpop.f32.mrb[0].mxu0
    %v1588 = vadd.f32 %v1545, %v1587
    %v1589 = vpop.f32.mrb[0].mxu0
    %v1590 = vadd.f32 %v1547, %v1589
    %v1591 = vpop.f32.mrb[0].mxu0
    %v1592 = vadd.f32 %v1549, %v1591
    %1593 = vdwg.mxu0
    %1594 = vmatprep.subr.bf16.mxu0 %v1092
    %1595 = vmatpush1.bf16.msra.mxu0 %v1091
    %1596 = vmatprep.subr.bf16.mxu0 0
    %1597 = vmatpush1.bf16.msra.mxu0 0
    %1598 = vmatprep.subr.bf16.mxu0 0
    %1599 = vmatpush1.bf16.msra.mxu0 0
    %1600 = vmatprep.subr.bf16.mxu0 0
    %1601 = vmatpush1.bf16.msra.mxu0 0
    %1602 = vmatprep.subr.bf16.mxu0 0
    %1603 = vmatpush1.bf16.msra.mxu0 0
    %1604 = vmatprep.subr.bf16.mxu0 0
    %1605 = vmatpush1.bf16.msra.mxu0 0
    %1606 = vmatprep.subr.bf16.mxu0 0
    %1607 = vmatpush1.bf16.msra.mxu0 0
    %1608 = vmatprep.subr.bf16.mxu0 0
    %1609 = vmatpush1.bf16.msra.mxu0 0
    %1610 = vmatprep.subr.bf16.mxu0 0
    %1611 = vmatpush1.bf16.msra.mxu0 0
    %1612 = vmatprep.subr.bf16.mxu0 0
    %1613 = vmatpush1.bf16.msra.mxu0 0
    %1614 = vmatprep.subr.bf16.mxu0 0
    %1615 = vmatpush1.bf16.msra.mxu0 0
    %1616 = vmatprep.subr.bf16.mxu0 0
    %1617 = vmatpush1.bf16.msra.mxu0 0
    %1618 = vmatprep.subr.bf16.mxu0 0
    %1619 = vmatpush1.bf16.msra.mxu0 0
    %1620 = vmatprep.subr.bf16.mxu0 0
    %1621 = vmatpush1.bf16.msra.mxu0 0
    %1622 = vmatprep.subr.bf16.mxu0 0
    %1623 = vmatpush1.bf16.msra.mxu0 0
    %1624 = vmatprep.subr.bf16.mxu0 0
    %1625 = vmatpush1.bf16.msra.mxu0 0
    %1626 = vmatprep.mubr.bf16.mxu0 0
    %1627 = vmatmul.mubr.bf16.gmra.mrb[0].mxu0 %v1291
    %v1628 = vpop.f32.mrb[0].mxu0
    %v1629 = vadd.f32 %v1586, %v1628
    %v1630 = vpop.f32.mrb[0].mxu0
    %v1631 = vadd.f32 %v1588, %v1630
    %v1632 = vpop.f32.mrb[0].mxu0
    %v1633 = vadd.f32 %v1590, %v1632
    %v1634 = vpop.f32.mrb[0].mxu0
    %v1635 = vadd.f32 %v1592, %v1634
    %1636 = vdwg.mxu0
    %v1637 = vmul.f32 %v1457, 0.2
    %v1638 = vmul.f32 %v1459, 0.2
    %v1639 = vmul.f32 %v1629, 0.2
    %v1640 = vmul.f32 %v1631, 0.2
    %v1641 = vmul.f32 %v1461, 0.2
    %v1642 = vmul.f32 %v1463, 0.2
    %v1643 = vmul.f32 %v1633, 0.2
    %v1644 = vmul.f32 %v1635, 0.2
    %v1645 = vmax.f32 %v1457, %v1637
    %v1646 = vmax.f32 %v1459, %v1638
    %v1647 = vmax.f32 %v1629, %v1639
    %v1648 = vmax.f32 %v1631, %v1640
    %v1649 = vmax.f32 %v1461, %v1641
    %v1650 = vmax.f32 %v1463, %v1642
    %v1651 = vmax.f32 %v1633, %v1643
    %v1652 = vmax.f32 %v1635, %v1644
    %v1653 = vpack.c.bf16 %v1649, %v1645
    %v1654 = vpack.c.bf16 %v1650, %v1646
    %v1655 = vpack.c.bf16 %v1651, %v1647
    %v1656 = vpack.c.bf16 %v1652, %v1648
    %v1657 = vld [vmem:[#allocation7] sm:$0xff]
    %v1658 = vld [vmem:[#allocation7 + $0x8] sm:$0xff]
    %v1659 = vld [vmem:[#allocation7 + $0x10] sm:$0xff]
    %v1660 = vld [vmem:[#allocation7 + $0x18] sm:$0xff]
    %v1661 = vld [vmem:[#allocation7 + $0x20] sm:$0xff]
    %v1662 = vld [vmem:[#allocation7 + $0x28] sm:$0xff]
    %v1663 = vld [vmem:[#allocation7 + $0x30] sm:$0xff]
    %v1664 = vld [vmem:[#allocation7 + $0x38] sm:$0xff]
    %v1665 = vld [vmem:[#allocation7 + $0x40] sm:$0xff]
    %v1666 = vld [vmem:[#allocation7 + $0x48] sm:$0xff]
    %v1667 = vld [vmem:[#allocation7 + $0x50] sm:$0xff]
    %v1668 = vld [vmem:[#allocation7 + $0x58] sm:$0xff]
    %v1669 = vld [vmem:[#allocation7 + $0x60] sm:$0xff]
    %v1670 = vld [vmem:[#allocation7 + $0x68] sm:$0xff]
    %v1671 = vld [vmem:[#allocation7 + $0x70] sm:$0xff]
    %v1672 = vld [vmem:[#allocation7 + $0x78] sm:$0xff]
    %v1673 = vld [vmem:[#allocation7 + $0x80] sm:$0xff]
    %v1674 = vld [vmem:[#allocation7 + $0x88] sm:$0xff]
    %v1675 = vld [vmem:[#allocation7 + $0x90] sm:$0xff]
    %v1676 = vld [vmem:[#allocation7 + $0x98] sm:$0xff]
    %v1677 = vld [vmem:[#allocation7 + $0xa0] sm:$0xff]
    %v1678 = vld [vmem:[#allocation7 + $0xa8] sm:$0xff]
    %v1679 = vld [vmem:[#allocation7 + $0xb0] sm:$0xff]
    %v1680 = vld [vmem:[#allocation7 + $0xb8] sm:$0xff]
    %v1681 = vld [vmem:[#allocation7 + $0xc0] sm:$0xff]
    %v1682 = vld [vmem:[#allocation7 + $0xc8] sm:$0xff]
    %v1683 = vld [vmem:[#allocation7 + $0xd0] sm:$0xff]
    %v1684 = vld [vmem:[#allocation7 + $0xd8] sm:$0xff]
    %v1685 = vld [vmem:[#allocation7 + $0xe0] sm:$0xff]
    %v1686 = vld [vmem:[#allocation7 + $0xe8] sm:$0xff]
    %v1687 = vld [vmem:[#allocation7 + $0xf0] sm:$0xff]
    %v1688 = vld [vmem:[#allocation7 + $0xf8] sm:$0xff]
    %v1689 = vld [vmem:[#allocation7 + $0x100] sm:$0xff]
    %v1690 = vld [vmem:[#allocation7 + $0x108] sm:$0xff]
    %v1691 = vld [vmem:[#allocation7 + $0x110] sm:$0xff]
    %v1692 = vld [vmem:[#allocation7 + $0x118] sm:$0xff]
    %v1693 = vld [vmem:[#allocation7 + $0x120] sm:$0xff]
    %v1694 = vld [vmem:[#allocation7 + $0x128] sm:$0xff]
    %v1695 = vld [vmem:[#allocation7 + $0x130] sm:$0xff]
    %v1696 = vld [vmem:[#allocation7 + $0x138] sm:$0xff]
    %v1697 = vld [vmem:[#allocation7 + $0x140] sm:$0xff]
    %v1698 = vld [vmem:[#allocation7 + $0x148] sm:$0xff]
    %v1699 = vld [vmem:[#allocation7 + $0x150] sm:$0xff]
    %v1700 = vld [vmem:[#allocation7 + $0x158] sm:$0xff]
    %v1701 = vld [vmem:[#allocation7 + $0x160] sm:$0xff]
    %v1702 = vld [vmem:[#allocation7 + $0x168] sm:$0xff]
    %v1703 = vld [vmem:[#allocation7 + $0x170] sm:$0xff]
    %v1704 = vld [vmem:[#allocation7 + $0x178] sm:$0xff]
    %v1705 = vld [vmem:[#allocation7 + $0x180] sm:$0xff]
    %v1706 = vld [vmem:[#allocation7 + $0x188] sm:$0xff]
    %v1707 = vld [vmem:[#allocation7 + $0x190] sm:$0xff]
    %v1708 = vld [vmem:[#allocation7 + $0x198] sm:$0xff]
    %v1709 = vld [vmem:[#allocation7 + $0x1a0] sm:$0xff]
    %v1710 = vld [vmem:[#allocation7 + $0x1a8] sm:$0xff]
    %v1711 = vld [vmem:[#allocation7 + $0x1b0] sm:$0xff]
    %v1712 = vld [vmem:[#allocation7 + $0x1b8] sm:$0xff]
    %v1713 = vld [vmem:[#allocation7 + $0x1c0] sm:$0xff]
    %v1714 = vld [vmem:[#allocation7 + $0x1c8] sm:$0xff]
    %v1715 = vld [vmem:[#allocation7 + $0x1d0] sm:$0xff]
    %v1716 = vld [vmem:[#allocation7 + $0x1d8] sm:$0xff]
    %v1717 = vld [vmem:[#allocation7 + $0x1e0] sm:$0xff]
    %v1718 = vld [vmem:[#allocation7 + $0x1e8] sm:$0xff]
    %v1719 = vld [vmem:[#allocation7 + $0x1f0] sm:$0xff]
    %v1720 = vld [vmem:[#allocation7 + $0x1f8] sm:$0xff]
    %v1721 = vld [vmem:[%s4] sm:$0x3]
    %v1723 = vlaneseq
    %v1724 = vshrl.u32 %v1723, 7
    %v1725 = vsub.s32 0, %v1724
    %v1726 = vrot.slane %v1721, %v1725
    %v1727 = vlaneseq
    %v1728 = vshrl.u32 %v1727, 7
    %v1729 = vsub.s32 1, %v1728
    %v1730 = vrot.slane %v1721, %v1729
    %v1797 = vunpack.c.l.b16 %v1657
    %v1798 = vunpack.c.h.b16 %v1657
    %v1799 = vunpack.c.l.b16 %v1658
    %v1800 = vunpack.c.h.b16 %v1658
    %v1801 = vunpack.c.l.b16 %v1659
    %v1802 = vunpack.c.h.b16 %v1659
    %v1803 = vunpack.c.l.b16 %v1660
    %v1804 = vunpack.c.h.b16 %v1660
    %v1805 = vunpack.c.l.b16 %v1661
    %v1806 = vunpack.c.h.b16 %v1661
    %v1807 = vunpack.c.l.b16 %v1662
    %v1808 = vunpack.c.h.b16 %v1662
    %v1809 = vunpack.c.l.b16 %v1663
    %v1810 = vunpack.c.h.b16 %v1663
    %v1811 = vunpack.c.l.b16 %v1664
    %v1812 = vunpack.c.h.b16 %v1664
    %v1813 = vunpack.c.l.b16 %v1665
    %v1814 = vunpack.c.h.b16 %v1665
    %v1815 = vunpack.c.l.b16 %v1666
    %v1816 = vunpack.c.h.b16 %v1666
    %v1817 = vunpack.c.l.b16 %v1667
    %v1818 = vunpack.c.h.b16 %v1667
    %v1819 = vunpack.c.l.b16 %v1668
    %v1820 = vunpack.c.h.b16 %v1668
    %v1821 = vunpack.c.l.b16 %v1669
    %v1822 = vunpack.c.h.b16 %v1669
    %v1823 = vunpack.c.l.b16 %v1670
    %v1824 = vunpack.c.h.b16 %v1670
    %v1825 = vunpack.c.l.b16 %v1671
    %v1826 = vunpack.c.h.b16 %v1671
    %v1827 = vunpack.c.l.b16 %v1672
    %v1828 = vunpack.c.h.b16 %v1672
    %v1829 = vunpack.c.l.b16 %v1673
    %v1830 = vunpack.c.h.b16 %v1673
    %v1831 = vunpack.c.l.b16 %v1674
    %v1832 = vunpack.c.h.b16 %v1674
    %v1833 = vunpack.c.l.b16 %v1675
    %v1834 = vunpack.c.h.b16 %v1675
    %v1835 = vunpack.c.l.b16 %v1676
    %v1836 = vunpack.c.h.b16 %v1676
    %v1837 = vunpack.c.l.b16 %v1677
    %v1838 = vunpack.c.h.b16 %v1677
    %v1839 = vunpack.c.l.b16 %v1678
    %v1840 = vunpack.c.h.b16 %v1678
    %v1841 = vunpack.c.l.b16 %v1679
    %v1842 = vunpack.c.h.b16 %v1679
    %v1843 = vunpack.c.l.b16 %v1680
    %v1844 = vunpack.c.h.b16 %v1680
    %v1845 = vunpack.c.l.b16 %v1681
    %v1846 = vunpack.c.h.b16 %v1681
    %v1847 = vunpack.c.l.b16 %v1682
    %v1848 = vunpack.c.h.b16 %v1682
    %v1849 = vunpack.c.l.b16 %v1683
    %v1850 = vunpack.c.h.b16 %v1683
    %v1851 = vunpack.c.l.b16 %v1684
    %v1852 = vunpack.c.h.b16 %v1684
    %v1853 = vunpack.c.l.b16 %v1685
    %v1854 = vunpack.c.h.b16 %v1685
    %v1855 = vunpack.c.l.b16 %v1686
    %v1856 = vunpack.c.h.b16 %v1686
    %v1857 = vunpack.c.l.b16 %v1687
    %v1858 = vunpack.c.h.b16 %v1687
    %v1859 = vunpack.c.l.b16 %v1688
    %v1860 = vunpack.c.h.b16 %v1688
    %v1861 = vunpack.c.l.b16 %v1689
    %v1862 = vunpack.c.h.b16 %v1689
    %v1863 = vunpack.c.l.b16 %v1690
    %v1864 = vunpack.c.h.b16 %v1690
    %v1865 = vunpack.c.l.b16 %v1691
    %v1866 = vunpack.c.h.b16 %v1691
    %v1867 = vunpack.c.l.b16 %v1692
    %v1868 = vunpack.c.h.b16 %v1692
    %v1869 = vunpack.c.l.b16 %v1693
    %v1870 = vunpack.c.h.b16 %v1693
    %v1871 = vunpack.c.l.b16 %v1694
    %v1872 = vunpack.c.h.b16 %v1694
    %v1873 = vunpack.c.l.b16 %v1695
    %v1874 = vunpack.c.h.b16 %v1695
    %v1875 = vunpack.c.l.b16 %v1696
    %v1876 = vunpack.c.h.b16 %v1696
    %v1877 = vunpack.c.l.b16 %v1697
    %v1878 = vunpack.c.h.b16 %v1697
    %v1879 = vunpack.c.l.b16 %v1698
    %v1880 = vunpack.c.h.b16 %v1698
    %v1881 = vunpack.c.l.b16 %v1699
    %v1882 = vunpack.c.h.b16 %v1699
    %v1883 = vunpack.c.l.b16 %v1700
    %v1884 = vunpack.c.h.b16 %v1700
    %v1885 = vunpack.c.l.b16 %v1701
    %v1886 = vunpack.c.h.b16 %v1701
    %v1887 = vunpack.c.l.b16 %v1702
    %v1888 = vunpack.c.h.b16 %v1702
    %v1889 = vunpack.c.l.b16 %v1703
    %v1890 = vunpack.c.h.b16 %v1703
    %v1891 = vunpack.c.l.b16 %v1704
    %v1892 = vunpack.c.h.b16 %v1704
    %v1893 = vunpack.c.l.b16 %v1705
    %v1894 = vunpack.c.h.b16 %v1705
    %v1895 = vunpack.c.l.b16 %v1706
    %v1896 = vunpack.c.h.b16 %v1706
    %v1897 = vunpack.c.l.b16 %v1707
    %v1898 = vunpack.c.h.b16 %v1707
    %v1899 = vunpack.c.l.b16 %v1708
    %v1900 = vunpack.c.h.b16 %v1708
    %v1901 = vunpack.c.l.b16 %v1709
    %v1902 = vunpack.c.h.b16 %v1709
    %v1903 = vunpack.c.l.b16 %v1710
    %v1904 = vunpack.c.h.b16 %v1710
    %v1905 = vunpack.c.l.b16 %v1711
    %v1906 = vunpack.c.h.b16 %v1711
    %v1907 = vunpack.c.l.b16 %v1712
    %v1908 = vunpack.c.h.b16 %v1712
    %v1909 = vunpack.c.l.b16 %v1713
    %v1910 = vunpack.c.h.b16 %v1713
    %v1911 = vunpack.c.l.b16 %v1714
    %v1912 = vunpack.c.h.b16 %v1714
    %v1913 = vunpack.c.l.b16 %v1715
    %v1914 = vunpack.c.h.b16 %v1715
    %v1915 = vunpack.c.l.b16 %v1716
    %v1916 = vunpack.c.h.b16 %v1716
    %v1917 = vunpack.c.l.b16 %v1717
    %v1918 = vunpack.c.h.b16 %v1717
    %v1919 = vunpack.c.l.b16 %v1718
    %v1920 = vunpack.c.h.b16 %v1718
    %v1921 = vunpack.c.l.b16 %v1719
    %v1922 = vunpack.c.h.b16 %v1719
    %v1923 = vunpack.c.l.b16 %v1720
    %v1924 = vunpack.c.h.b16 %v1720
    %v1925 = vpack.c.b16 %v1799, %v1797
    %v1926 = vpack.c.b16 %v1800, %v1798
    %v1927 = vpack.c.b16 %v1803, %v1801
    %v1928 = vpack.c.b16 %v1804, %v1802
    %v1929 = vpack.c.b16 %v1807, %v1805
    %v1930 = vpack.c.b16 %v1808, %v1806
    %v1931 = vpack.c.b16 %v1811, %v1809
    %v1932 = vpack.c.b16 %v1812, %v1810
    %v1933 = vpack.c.b16 %v1815, %v1813
    %v1934 = vpack.c.b16 %v1816, %v1814
    %v1935 = vpack.c.b16 %v1819, %v1817
    %v1936 = vpack.c.b16 %v1820, %v1818
    %v1937 = vpack.c.b16 %v1823, %v1821
    %v1938 = vpack.c.b16 %v1824, %v1822
    %v1939 = vpack.c.b16 %v1827, %v1825
    %v1940 = vpack.c.b16 %v1828, %v1826
    %v1941 = vpack.c.b16 %v1831, %v1829
    %v1942 = vpack.c.b16 %v1832, %v1830
    %v1943 = vpack.c.b16 %v1835, %v1833
    %v1944 = vpack.c.b16 %v1836, %v1834
    %v1945 = vpack.c.b16 %v1839, %v1837
    %v1946 = vpack.c.b16 %v1840, %v1838
    %v1947 = vpack.c.b16 %v1843, %v1841
    %v1948 = vpack.c.b16 %v1844, %v1842
    %v1949 = vpack.c.b16 %v1847, %v1845
    %v1950 = vpack.c.b16 %v1848, %v1846
    %v1951 = vpack.c.b16 %v1851, %v1849
    %v1952 = vpack.c.b16 %v1852, %v1850
    %v1953 = vpack.c.b16 %v1855, %v1853
    %v1954 = vpack.c.b16 %v1856, %v1854
    %v1955 = vpack.c.b16 %v1859, %v1857
    %v1956 = vpack.c.b16 %v1860, %v1858
    %v1957 = vpack.c.b16 %v1863, %v1861
    %v1958 = vpack.c.b16 %v1864, %v1862
    %v1959 = vpack.c.b16 %v1867, %v1865
    %v1960 = vpack.c.b16 %v1868, %v1866
    %v1961 = vpack.c.b16 %v1871, %v1869
    %v1962 = vpack.c.b16 %v1872, %v1870
    %v1963 = vpack.c.b16 %v1875, %v1873
    %v1964 = vpack.c.b16 %v1876, %v1874
    %v1965 = vpack.c.b16 %v1879, %v1877
    %v1966 = vpack.c.b16 %v1880, %v1878
    %v1967 = vpack.c.b16 %v1883, %v1881
    %v1968 = vpack.c.b16 %v1884, %v1882
    %v1969 = vpack.c.b16 %v1887, %v1885
    %v1970 = vpack.c.b16 %v1888, %v1886
    %v1971 = vpack.c.b16 %v1891, %v1889
    %v1972 = vpack.c.b16 %v1892, %v1890
    %v1973 = vpack.c.b16 %v1895, %v1893
    %v1974 = vpack.c.b16 %v1896, %v1894
    %v1975 = vpack.c.b16 %v1899, %v1897
    %v1976 = vpack.c.b16 %v1900, %v1898
    %v1977 = vpack.c.b16 %v1903, %v1901
    %v1978 = vpack.c.b16 %v1904, %v1902
    %v1979 = vpack.c.b16 %v1907, %v1905
    %v1980 = vpack.c.b16 %v1908, %v1906
    %v1981 = vpack.c.b16 %v1911, %v1909
    %v1982 = vpack.c.b16 %v1912, %v1910
    %v1983 = vpack.c.b16 %v1915, %v1913
    %v1984 = vpack.c.b16 %v1916, %v1914
    %v1985 = vpack.c.b16 %v1919, %v1917
    %v1986 = vpack.c.b16 %v1920, %v1918
    %v1987 = vpack.c.b16 %v1923, %v1921
    %v1988 = vpack.c.b16 %v1924, %v1922
    %2053 = vmatprep.subr.bf16.mxu0 %v1926
    %2054 = vmatpush1.bf16.msra.mxu0 %v1925
    %2055 = vmatprep.subr.bf16.mxu0 %v1928
    %2056 = vmatpush1.bf16.msra.mxu0 %v1927
    %2057 = vmatprep.subr.bf16.mxu0 %v1930
    %2058 = vmatpush1.bf16.msra.mxu0 %v1929
    %2059 = vmatprep.subr.bf16.mxu0 %v1932
    %2060 = vmatpush1.bf16.msra.mxu0 %v1931
    %2061 = vmatprep.subr.bf16.mxu0 %v1934
    %2062 = vmatpush1.bf16.msra.mxu0 %v1933
    %2063 = vmatprep.subr.bf16.mxu0 %v1936
    %2064 = vmatpush1.bf16.msra.mxu0 %v1935
    %2065 = vmatprep.subr.bf16.mxu0 %v1938
    %2066 = vmatpush1.bf16.msra.mxu0 %v1937
    %2067 = vmatprep.subr.bf16.mxu0 %v1940
    %2068 = vmatpush1.bf16.msra.mxu0 %v1939
    %2069 = vmatprep.subr.bf16.mxu0 %v1942
    %2070 = vmatpush1.bf16.msra.mxu0 %v1941
    %2071 = vmatprep.subr.bf16.mxu0 %v1944
    %2072 = vmatpush1.bf16.msra.mxu0 %v1943
    %2073 = vmatprep.subr.bf16.mxu0 %v1946
    %2074 = vmatpush1.bf16.msra.mxu0 %v1945
    %2075 = vmatprep.subr.bf16.mxu0 %v1948
    %2076 = vmatpush1.bf16.msra.mxu0 %v1947
    %2077 = vmatprep.subr.bf16.mxu0 %v1950
    %2078 = vmatpush1.bf16.msra.mxu0 %v1949
    %2079 = vmatprep.subr.bf16.mxu0 %v1952
    %2080 = vmatpush1.bf16.msra.mxu0 %v1951
    %2081 = vmatprep.subr.bf16.mxu0 %v1954
    %2082 = vmatpush1.bf16.msra.mxu0 %v1953
    %2083 = vmatprep.subr.bf16.mxu0 %v1956
    %2084 = vmatpush1.bf16.msra.mxu0 %v1955
    %2085 = vmatprep.mubr.bf16.mxu0 %v1654
    %2086 = vmatmul.mubr.bf16.gmra.mrb[0].mxu0 %v1653
    %v2087 = vpop.f32.mrb[0].mxu0
    %v2088 = vadd.f32 %v1726, %v2087
    %v2089 = vpop.f32.mrb[0].mxu0
    %v2090 = vadd.f32 %v1730, %v2089
    %v2091 = vpop.f32.mrb[0].mxu0
    %v2092 = vadd.f32 %v1726, %v2091
    %v2093 = vpop.f32.mrb[0].mxu0
    %v2094 = vadd.f32 %v1730, %v2093
    %2095 = vdwg.mxu0
    %2096 = vmatprep.subr.bf16.mxu0 %v1958
    %2097 = vmatpush1.bf16.msra.mxu0 %v1957
    %2098 = vmatprep.subr.bf16.mxu0 %v1960
    %2099 = vmatpush1.bf16.msra.mxu0 %v1959
    %2100 = vmatprep.subr.bf16.mxu0 %v1962
    %2101 = vmatpush1.bf16.msra.mxu0 %v1961
    %2102 = vmatprep.subr.bf16.mxu0 %v1964
    %2103 = vmatpush1.bf16.msra.mxu0 %v1963
    %2104 = vmatprep.subr.bf16.mxu0 %v1966
    %2105 = vmatpush1.bf16.msra.mxu0 %v1965
    %2106 = vmatprep.subr.bf16.mxu0 %v1968
    %2107 = vmatpush1.bf16.msra.mxu0 %v1967
    %2108 = vmatprep.subr.bf16.mxu0 %v1970
    %2109 = vmatpush1.bf16.msra.mxu0 %v1969
    %2110 = vmatprep.subr.bf16.mxu0 %v1972
    %2111 = vmatpush1.bf16.msra.mxu0 %v1971
    %2112 = vmatprep.subr.bf16.mxu0 %v1974
    %2113 = vmatpush1.bf16.msra.mxu0 %v1973
    %2114 = vmatprep.subr.bf16.mxu0 %v1976
    %2115 = vmatpush1.bf16.msra.mxu0 %v1975
    %2116 = vmatprep.subr.bf16.mxu0 %v1978
    %2117 = vmatpush1.bf16.msra.mxu0 %v1977
    %2118 = vmatprep.subr.bf16.mxu0 %v1980
    %2119 = vmatpush1.bf16.msra.mxu0 %v1979
    %2120 = vmatprep.subr.bf16.mxu0 %v1982
    %2121 = vmatpush1.bf16.msra.mxu0 %v1981
    %2122 = vmatprep.subr.bf16.mxu0 %v1984
    %2123 = vmatpush1.bf16.msra.mxu0 %v1983
    %2124 = vmatprep.subr.bf16.mxu0 %v1986
    %2125 = vmatpush1.bf16.msra.mxu0 %v1985
    %2126 = vmatprep.subr.bf16.mxu0 %v1988
    %2127 = vmatpush1.bf16.msra.mxu0 %v1987
    %2128 = vmatprep.mubr.bf16.mxu0 %v1656
    %2129 = vmatmul.mubr.bf16.gmra.mrb[0].mxu0 %v1655
    %v2130 = vpop.f32.mrb[0].mxu0
    %v2131 = vadd.f32 %v2088, %v2130
    %v2132 = vpop.f32.mrb[0].mxu0
    %v2133 = vadd.f32 %v2090, %v2132
    %v2134 = vpop.f32.mrb[0].mxu0
    %v2135 = vadd.f32 %v2092, %v2134
    %v2136 = vpop.f32.mrb[0].mxu0
    %v2137 = vadd.f32 %v2094, %v2136
    %2138 = vdwg.mxu0
    %v2139 = vmul.f32 %v2131, 0.2
    %v2140 = vmul.f32 %v2133, 0.2
    %v2141 = vmul.f32 %v2135, 0.2
    %v2142 = vmul.f32 %v2137, 0.2
    %v2143 = vmax.f32 %v2131, %v2139
    %v2144 = vmax.f32 %v2133, %v2140
    %v2145 = vmax.f32 %v2135, %v2141
    %v2146 = vmax.f32 %v2137, %v2142
    %v2147 = vld [vmem:[%s5] sm:$0x3]
    %v2149 = vlaneseq
    %v2150 = vshrl.u32 %v2149, 7
    %v2151 = vsub.s32 0, %v2150
    %v2152 = vrot.slane %v2147, %v2151
    %v2153 = vlaneseq
    %v2154 = vshrl.u32 %v2153, 7
    %v2155 = vsub.s32 1, %v2154
    %v2156 = vrot.slane %v2147, %v2155
    %v2159 = vmul.f32 %v2143, %v2152
    %v2160 = vmul.f32 %v2144, %v2156
    %v2161 = vmul.f32 %v2145, %v2152
    %v2162 = vmul.f32 %v2146, %v2156
    %v2163 = vadd.f32 %v2159, %v2160
    %2164 = vadd.xlane.f32.xlu0 %v2163
    %v2165 = vpop.xlane.xlu0 %2164
    %v2166 = vadd.f32 %v2161, %v2162
    %2167 = vadd.xlane.f32.xlu0 %v2166
    %v2168 = vpop.xlane.xlu0 %2167
    %v2169 = vld [vmem:[#allocation2] sm:$0x1]
    %v2171 = vlaneseq
    %v2172 = vshrl.u32 %v2171, 7
    %v2173 = vsub.s32 0, %v2172
    %v2174 = vrot.slane %v2169, %v2173
    %v2176 = vadd.f32 %v2165, %v2174
    %v2177 = vadd.f32 %v2168, %v2174
    %v2178 = vxor.u32 %v2176, 2147483648
    %v2179 = vxor.u32 %v2177, 2147483648
    %v2180 = vmul.f32 %v2178, 1.442695
    %v2181 = vpow.pop %v2180
    %v2182 = vmul.f32 %v2179, 1.442695
    %v2183 = vpow.pop %v2182
    %v2184 = vadd.f32 %v2181, 1.0
    %v2185 = vadd.f32 %v2183, 1.0
    %v2186 = vrcp.pop %v2184
    %v2187 = vmul.f32 1.0, %v2186
    %v2188 = vrcp.pop %v2185
    %v2189 = vmul.f32 1.0, %v2188
    %vm2190 = vcmask 7168
    %2191 = vst.msk [vmem:[%s7] sm:$0xff] %vm2190, %v2187
    %2192 = vst.msk [vmem:[%s7 + $0x8] sm:$0xff] %vm2190, %v2189
    // Predicated region
    $region42: #{tpu_custom_call.1} parent=1 // pred_check
      _
    $region43: #{tpu_custom_call.1} parent=1 // pred_check_branch
      %2194 = sbr.rel (0) target = $region45
    $region44: #{tpu_custom_call.1} parent=1 // pred_region
      _
    $region45: #{tpu_custom_call.1} parent=1 // pred_fallthru
      _
    // Predicated region
    $region46: #{tpu_custom_call.1} parent=1 // pred_check
      _
    $region47: #{tpu_custom_call.1} parent=1 // pred_check_branch
      %2196 = sbr.rel (0) target = $region49
    $region48: #{tpu_custom_call.1} parent=1 // pred_region
      _
    $region49: #{tpu_custom_call.1} parent=1 // pred_fallthru
      _
    %2197 = vsyncpa [#allocation4], 1
    %2198 = vsyncpa [#allocation6], 1

// kernel: tpu_custom_call.1
$region0: #{tpu_custom_call.1}
  #allocation0 [shape = 'u32[]', space=smem, size = 0x4, offset = 0x4, fixed_abs, tag = 'smem constant byte address 0x4 - core index']
  #allocation1 [shape = 'u32[144,128]{1,0:T(1,128)}', space=vmem, size = 0x12000, scoped, tag = 'internal scratch']
  #allocation2 [shape = 'f32[1,1]{1,0:T(1,128)S(1)}', space=vmem, size = 0x200, scoped, tag = 'scoped memory for tpu_custom_call.1']
  %s0 = inlined_call_operand.hbm [shape: f32[16,784], index: 0, kind: input, shape index: {}]
  %s1 = inlined_call_operand.hbm [shape: bf16[784,512], index: 1, kind: input, shape index: {}]
  %s2 = inlined_call_operand.vmem [shape: f32[1,512], index: 2, kind: input, shape index: {}]
  %s3 = inlined_call_operand.hbm [shape: bf16[512,256], index: 3, kind: input, shape index: {}]
  %s4 = inlined_call_operand.vmem [shape: f32[1,256], index: 4, kind: input, shape index: {}]
  %s5 = inlined_call_operand.vmem [shape: f32[1,256], index: 5, kind: input, shape index: {}]
  %s6 = inlined_call_operand.<no memory space> [shape: f32[1,1], index: 6, kind: input, shape index: {}]
  %s7 = inlined_call_operand.vmem [shape: f32[16,1], index: 7, kind: output, shape index: {}]
  %s8 = sld [smem:[#allocation0]]
  $region50: #{tpu_custom_call.1} parent=0
    _
  %s10 = ssub.s32 1, %s8
  %s11 = scalar_select 0, %s10, %s8
  %v12 = vstv %s6
  %13 = vst [vmem:[#allocation2] sm:$0x1] %v12
  $region1: #{tpu_custom_call.1} parent=0
    #allocation3 [shape = 'u8[57344]{0}', space=vmem, size = 0xe000, scoped, tag = 'input window, operand 0, single buffered']
    #allocation4 [shape = 's32[1]{0}', space=sflag, size = 0x4, scoped, tag = 'scoped memory for tpu_custom_call.1']
    #allocation5 [shape = 'u8[802816]{0}', space=vmem, size = 0xc4000, scoped, tag = 'input window, operand 1, single buffered']
    #allocation6 [shape = 's32[1]{0}', space=sflag, size = 0x4, scoped, tag = 'scoped memory for tpu_custom_call.1']
    #allocation7 [shape = 'u8[262144]{0}', space=vmem, size = 0x40000, scoped, tag = 'input window, operand 3, single buffered']
    %14 = vsyncpa [#allocation4], 0
    %15 = vsyncpa [#allocation6], 0
    // Predicated region
    $region2: #{tpu_custom_call.1} parent=1 // pred_check
      _
    $region3: #{tpu_custom_call.1} parent=1 // pred_check_branch
      %17 = sbr.rel (0) target = $region5
    $region4: #{tpu_custom_call.1} parent=1 // pred_region
      %s19 = ssub.s32 1792, 1792
      %20 = vsyncadd [#allocation4], %s19
      %s21 = sshll.u32 [#allocation3], 4
      %s22 = int_to_ptr.vmem [resolvable:$true] %s21
      %27 = dma.hbm_to_vmem [thread:$0]  %s0, 1792, %s22, [#allocation4], 896, 896, 56
    $region5: #{tpu_custom_call.1} parent=1 // pred_fallthru
      _
    // Predicated region
    $region6: #{tpu_custom_call.1} parent=1 // pred_check
      _
    $region7: #{tpu_custom_call.1} parent=1 // pred_check_branch
      %29 = sbr.rel (0) target = $region9
    $region8: #{tpu_custom_call.1} parent=1 // pred_region
      %s31 = ssub.s32 25088, 25088
      %32 = vsyncadd [#allocation6], %s31
      %s33 = sshll.u32 [#allocation5], 4
      %s34 = int_to_ptr.vmem [resolvable:$true] %s33
      %39 = dma.hbm_to_vmem [thread:$0]  %s1, 25088, %s34, [#allocation6], 256, 256, 16
    $region9: #{tpu_custom_call.1} parent=1 // pred_fallthru
      _
    // Predicated region
    $region10: #{tpu_custom_call.1} parent=1 // pred_check
      _
    $region11: #{tpu_custom_call.1} parent=1 // pred_check_branch
      %41 = sbr.rel (0) target = $region13
    $region12: #{tpu_custom_call.1} parent=1 // pred_region
      _
    $region13: #{tpu_custom_call.1} parent=1 // pred_fallthru
      _
    // Predicated region
    $region14: #{tpu_custom_call.1} parent=1 // pred_check
      _
    $region15: #{tpu_custom_call.1} parent=1 // pred_check_branch
      %43 = sbr.rel (0) target = $region17
    $region16: #{tpu_custom_call.1} parent=1 // pred_region
      %s45 = ssub.s32 8192, 8192
      %46 = vsyncadd [#allocation6], %s45
      %s47 = sshll.u32 [#allocation7], 4
      %s48 = int_to_ptr.vmem [resolvable:$true] %s47
      %53 = dma.hbm_to_vmem [thread:$0]  %s3, 8192, %s48, [#allocation6], 128, 128, 8
    $region17: #{tpu_custom_call.1} parent=1 // pred_fallthru
      _
    // Predicated region
    $region18: #{tpu_custom_call.1} parent=1 // pred_check
      _
    $region19: #{tpu_custom_call.1} parent=1 // pred_check_branch
      %55 = sbr.rel (0) target = $region21
    $region20: #{tpu_custom_call.1} parent=1 // pred_region
      _
    $region21: #{tpu_custom_call.1} parent=1 // pred_fallthru
      _
    // Predicated region
    $region22: #{tpu_custom_call.1} parent=1 // pred_check
      _
    $region23: #{tpu_custom_call.1} parent=1 // pred_check_branch
      %57 = sbr.rel (0) target = $region25
    $region24: #{tpu_custom_call.1} parent=1 // pred_region
      _
    $region25: #{tpu_custom_call.1} parent=1 // pred_fallthru
      _
    // Predicated region
    $region26: #{tpu_custom_call.1} parent=1 // pred_check
      _
    $region27: #{tpu_custom_call.1} parent=1 // pred_check_branch
      %59 = sbr.rel (0) target = $region29
    $region28: #{tpu_custom_call.1} parent=1 // pred_region
      _
    $region29: #{tpu_custom_call.1} parent=1 // pred_fallthru
      _
    // Predicated region
    $region30: #{tpu_custom_call.1} parent=1 // pred_check
      _
    $region31: #{tpu_custom_call.1} parent=1 // pred_check_branch
      %61 = sbr.rel (0) target = $region33
    $region32: #{tpu_custom_call.1} parent=1 // pred_region
      %62 = dma.done [#allocation4], 1792
    $region33: #{tpu_custom_call.1} parent=1 // pred_fallthru
      _
    // Predicated region
    $region34: #{tpu_custom_call.1} parent=1 // pred_check
      _
    $region35: #{tpu_custom_call.1} parent=1 // pred_check_branch
      %64 = sbr.rel (0) target = $region37
    $region36: #{tpu_custom_call.1} parent=1 // pred_region
      %65 = dma.done [#allocation6], 25088
    $region37: #{tpu_custom_call.1} parent=1 // pred_fallthru
      _
    // Predicated region
    $region38: #{tpu_custom_call.1} parent=1 // pred_check
      _
    $region39: #{tpu_custom_call.1} parent=1 // pred_check_branch
      %67 = sbr.rel (0) target = $region41
    $region40: #{tpu_custom_call.1} parent=1 // pred_region
      %68 = dma.done [#allocation6], 8192
    $region41: #{tpu_custom_call.1} parent=1 // pred_fallthru
      _
    %v70 = vld [vmem:[#allocation3] sm:$0xff]
    %v71 = vld [vmem:[#allocation3 + $0x8] sm:$0xff]
    %v72 = vld [vmem:[#allocation3 + $0x10] sm:$0xff]
    %v73 = vld [vmem:[#allocation3 + $0x18] sm:$0xff]
    %v74 = vld [vmem:[#allocation3 + $0x20] sm:$0xff]
    %v75 = vld [vmem:[#allocation3 + $0x28] sm:$0xff]
    %v76 = vld [vmem:[#allocation3 + $0x30] sm:$0xff]
    %v77 = vld [vmem:[#allocation3 + $0x38] sm:$0xff]
    %v78 = vld [vmem:[#allocation3 + $0x40] sm:$0xff]
    %v79 = vld [vmem:[#allocation3 + $0x48] sm:$0xff]
    %v80 = vld [vmem:[#allocation3 + $0x50] sm:$0xff]
    %v81 = vld [vmem:[#allocation3 + $0x58] sm:$0xff]
    %v82 = vld [vmem:[#allocation3 + $0x60] sm:$0xff]
    %v83 = vld [vmem:[#allocation3 + $0x68] sm:$0xff]
    %v84 = vpack.c.bf16 %v77, %v70
    %v85 = vpack.c.bf16 %v78, %v71
    %v86 = vpack.c.bf16 %v79, %v72
    %v87 = vpack.c.bf16 %v80, %v73
    %v88 = vpack.c.bf16 %v81, %v74
    %v89 = vpack.c.bf16 %v82, %v75
    %v90 = vpack.c.bf16 %v83, %v76
    %v91 = vld [vmem:[#allocation5] sm:$0xff]
    %v92 = vld [vmem:[#allocation5 + $0x8] sm:$0xff]
    %v93 = vld [vmem:[#allocation5 + $0x10] sm:$0xff]
    %v94 = vld [vmem:[#allocation5 + $0x18] sm:$0xff]
    %v95 = vld [vmem:[#allocation5 + $0x20] sm:$0xff]
    %v96 = vld [vmem:[#allocation5 + $0x28] sm:$0xff]
    %v97 = vld [vmem:[#allocation5 + $0x30] sm:$0xff]
    %v98 = vld [vmem:[#allocation5 + $0x38] sm:$0xff]
    %v99 = vld [vmem:[#allocation5 + $0x40] sm:$0xff]
    %v100 = vld [vmem:[#allocation5 + $0x48] sm:$0xff]
    %v101 = vld [vmem:[#allocation5 + $0x50] sm:$0xff]
    %v102 = vld [vmem:[#allocation5 + $0x58] sm:$0xff]
    %v103 = vld [vmem:[#allocation5 + $0x60] sm:$0xff]
    %v104 = vld [vmem:[#allocation5 + $0x68] sm:$0xff]
    %v105 = vld [vmem:[#allocation5 + $0x70] sm:$0xff]
    %v106 = vld [vmem:[#allocation5 + $0x78] sm:$0xff]
    %v107 = vld [vmem:[#allocation5 + $0x80] sm:$0xff]
    %v108 = vld [vmem:[#allocation5 + $0x88] sm:$0xff]
    %v109 = vld [vmem:[#allocation5 + $0x90] sm:$0xff]
    %v110 = vld [vmem:[#allocation5 + $0x98] sm:$0xff]
    %v111 = vld [vmem:[#allocation5 + $0xa0] sm:$0xff]
    %v112 = vld [vmem:[#allocation5 + $0xa8] sm:$0xff]
    %v113 = vld [vmem:[#allocation5 + $0xb0] sm:$0xff]
    %v114 = vld [vmem:[#allocation5 + $0xb8] sm:$0xff]
    %v115 = vld [vmem:[#allocation5 + $0xc0] sm:$0xff]
    %v116 = vld [vmem:[#allocation5 + $0xc8] sm:$0xff]
    %v117 = vld [vmem:[#allocation5 + $0xd0] sm:$0xff]
    %v118 = vld [vmem:[#allocation5 + $0xd8] sm:$0xff]
    %v119 = vld [vmem:[#allocation5 + $0xe0] sm:$0xff]
    %v120 = vld [vmem:[#allocation5 + $0xe8] sm:$0xff]
    %v121 = vld [vmem:[#allocation5 + $0xf0] sm:$0xff]
    %v122 = vld [vmem:[#allocation5 + $0xf8] sm:$0xff]
    %v123 = vld [vmem:[#allocation5 + $0x100] sm:$0xff]
    %v124 = vld [vmem:[#allocation5 + $0x108] sm:$0xff]
    %v125 = vld [vmem:[#allocation5 + $0x110] sm:$0xff]
    %v126 = vld [vmem:[#allocation5 + $0x118] sm:$0xff]
    %v127 = vld [vmem:[#allocation5 + $0x120] sm:$0xff]
    %v128 = vld [vmem:[#allocation5 + $0x128] sm:$0xff]
    %v129 = vld [vmem:[#allocation5 + $0x130] sm:$0xff]
    %v130 = vld [vmem:[#allocation5 + $0x138] sm:$0xff]
    %v131 = vld [vmem:[#allocation5 + $0x140] sm:$0xff]
    %v132 = vld [vmem:[#allocation5 + $0x148] sm:$0xff]
    %v133 = vld [vmem:[#allocation5 + $0x150] sm:$0xff]
    %v134 = vld [vmem:[#allocation5 + $0x158] sm:$0xff]
    %v135 = vld [vmem:[#allocation5 + $0x160] sm:$0xff]
    %v136 = vld [vmem:[#allocation5 + $0x168] sm:$0xff]
    %v137 = vld [vmem:[#allocation5 + $0x170] sm:$0xff]
    %v138 = vld [vmem:[#allocation5 + $0x178] sm:$0xff]
    %v139 = vld [vmem:[#allocation5 + $0x180] sm:$0xff]
    %v140 = vld [vmem:[#allocation5 + $0x188] sm:$0xff]
    %v141 = vld [vmem:[#allocation5 + $0x190] sm:$0xff]
    %v142 = vld [vmem:[#allocation5 + $0x198] sm:$0xff]
    %v143 = vld [vmem:[#allocation5 + $0x1a0] sm:$0xff]
    %v144 = vld [vmem:[#allocation5 + $0x1a8] sm:$0xff]
    %v145 = vld [vmem:[#allocation5 + $0x1b0] sm:$0xff]
    %v146 = vld [vmem:[#allocation5 + $0x1b8] sm:$0xff]
    %v147 = vld [vmem:[#allocation5 + $0x1c0] sm:$0xff]
    %v148 = vld [vmem:[#allocation5 + $0x1c8] sm:$0xff]
    %v149 = vld [vmem:[#allocation5 + $0x1d0] sm:$0xff]
    %v150 = vld [vmem:[#allocation5 + $0x1d8] sm:$0xff]
    %v151 = vld [vmem:[#allocation5 + $0x1e0] sm:$0xff]
    %v152 = vld [vmem:[#allocation5 + $0x1e8] sm:$0xff]
    %v153 = vld [vmem:[#allocation5 + $0x1f0] sm:$0xff]
    %v154 = vld [vmem:[#allocation5 + $0x1f8] sm:$0xff]
    %v155 = vld [vmem:[#allocation5 + $0x200] sm:$0xff]
    %v156 = vld [vmem:[#allocation5 + $0x208] sm:$0xff]
    %v157 = vld [vmem:[#allocation5 + $0x210] sm:$0xff]
    %v158 = vld [vmem:[#allocation5 + $0x218] sm:$0xff]
    %v159 = vld [vmem:[#allocation5 + $0x220] sm:$0xff]
    %v160 = vld [vmem:[#allocation5 + $0x228] sm:$0xff]
    %v161 = vld [vmem:[#allocation5 + $0x230] sm:$0xff]
    %v162 = vld [vmem:[#allocation5 + $0x238] sm:$0xff]
    %v163 = vld [vmem:[#allocation5 + $0x240] sm:$0xff]
    %v164 = vld [vmem:[#allocation5 + $0x248] sm:$0xff]
    %v165 = vld [vmem:[#allocation5 + $0x250] sm:$0xff]
    %v166 = vld [vmem:[#allocation5 + $0x258] sm:$0xff]
    %v167 = vld [vmem:[#allocation5 + $0x260] sm:$0xff]
    %v168 = vld [vmem:[#allocation5 + $0x268] sm:$0xff]
    %v169 = vld [vmem:[#allocation5 + $0x270] sm:$0xff]
    %v170 = vld [vmem:[#allocation5 + $0x278] sm:$0xff]
    %v171 = vld [vmem:[#allocation5 + $0x280] sm:$0xff]
    %v172 = vld [vmem:[#allocation5 + $0x288] sm:$0xff]
    %v173 = vld [vmem:[#allocation5 + $0x290] sm:$0xff]
    %v174 = vld [vmem:[#allocation5 + $0x298] sm:$0xff]
    %v175 = vld [vmem:[#allocation5 + $0x2a0] sm:$0xff]
    %v176 = vld [vmem:[#allocation5 + $0x2a8] sm:$0xff]
    %v177 = vld [vmem:[#allocation5 + $0x2b0] sm:$0xff]
    %v178 = vld [vmem:[#allocation5 + $0x2b8] sm:$0xff]
    %v179 = vld [vmem:[#allocation5 + $0x2c0] sm:$0xff]
    %v180 = vld [vmem:[#allocation5 + $0x2c8] sm:$0xff]
    %v181 = vld [vmem:[#allocation5 + $0x2d0] sm:$0xff]
    %v182 = vld [vmem:[#allocation5 + $0x2d8] sm:$0xff]
    %v183 = vld [vmem:[#allocation5 + $0x2e0] sm:$0xff]
    %v184 = vld [vmem:[#allocation5 + $0x2e8] sm:$0xff]
    %v185 = vld [vmem:[#allocation5 + $0x2f0] sm:$0xff]
    %v186 = vld [vmem:[#allocation5 + $0x2f8] sm:$0xff]
    %v187 = vld [vmem:[#allocation5 + $0x300] sm:$0xff]
    %v188 = vld [vmem:[#allocation5 + $0x308] sm:$0xff]
    %v189 = vld [vmem:[#allocation5 + $0x310] sm:$0xff]
    %v190 = vld [vmem:[#allocation5 + $0x318] sm:$0xff]
    %v191 = vld [vmem:[#allocation5 + $0x320] sm:$0xff]
    %v192 = vld [vmem:[#allocation5 + $0x328] sm:$0xff]
    %v193 = vld [vmem:[#allocation5 + $0x330] sm:$0xff]
    %v194 = vld [vmem:[#allocation5 + $0x338] sm:$0xff]
    %v195 = vld [vmem:[#allocation5 + $0x340] sm:$0xff]
    %v196 = vld [vmem:[#allocation5 + $0x348] sm:$0xff]
    %v197 = vld [vmem:[#allocation5 + $0x350] sm:$0xff]
    %v198 = vld [vmem:[#allocation5 + $0x358] sm:$0xff]
    %v199 = vld [vmem:[#allocation5 + $0x360] sm:$0xff]
    %v200 = vld [vmem:[#allocation5 + $0x368] sm:$0xff]
    %v201 = vld [vmem:[#allocation5 + $0x370] sm:$0xff]
    %v202 = vld [vmem:[#allocation5 + $0x378] sm:$0xff]
    %v203 = vld [vmem:[#allocation5 + $0x380] sm:$0xff]
    %v204 = vld [vmem:[#allocation5 + $0x388] sm:$0xff]
    %v205 = vld [vmem:[#allocation5 + $0x390] sm:$0xff]
    %v206 = vld [vmem:[#allocation5 + $0x398] sm:$0xff]
    %v207 = vld [vmem:[#allocation5 + $0x3a0] sm:$0xff]
    %v208 = vld [vmem:[#allocation5 + $0x3a8] sm:$0xff]
    %v209 = vld [vmem:[#allocation5 + $0x3b0] sm:$0xff]
    %v210 = vld [vmem:[#allocation5 + $0x3b8] sm:$0xff]
    %v211 = vld [vmem:[#allocation5 + $0x3c0] sm:$0xff]
    %v212 = vld [vmem:[#allocation5 + $0x3c8] sm:$0xff]
    %v213 = vld [vmem:[#allocation5 + $0x3d0] sm:$0xff]
    %v214 = vld [vmem:[#allocation5 + $0x3d8] sm:$0xff]
    %v215 = vld [vmem:[#allocation5 + $0x3e0] sm:$0xff]
    %v216 = vld [vmem:[#allocation5 + $0x3e8] sm:$0xff]
    %v217 = vld [vmem:[#allocation5 + $0x3f0] sm:$0xff]
    %v218 = vld [vmem:[#allocation5 + $0x3f8] sm:$0xff]
    %v219 = vld [vmem:[#allocation5 + $0x400] sm:$0xff]
    %v220 = vld [vmem:[#allocation5 + $0x408] sm:$0xff]
    %v221 = vld [vmem:[#allocation5 + $0x410] sm:$0xff]
    %v222 = vld [vmem:[#allocation5 + $0x418] sm:$0xff]
    %v223 = vld [vmem:[#allocation5 + $0x420] sm:$0xff]
    %v224 = vld [vmem:[#allocation5 + $0x428] sm:$0xff]
    %v225 = vld [vmem:[#allocation5 + $0x430] sm:$0xff]
    %v226 = vld [vmem:[#allocation5 + $0x438] sm:$0xff]
    %v227 = vld [vmem:[#allocation5 + $0x440] sm:$0xff]
    %v228 = vld [vmem:[#allocation5 + $0x448] sm:$0xff]
    %v229 = vld [vmem:[#allocation5 + $0x450] sm:$0xff]
    %v230 = vld [vmem:[#allocation5 + $0x458] sm:$0xff]
    %v231 = vld [vmem:[#allocation5 + $0x460] sm:$0xff]
    %v232 = vld [vmem:[#allocation5 + $0x468] sm:$0xff]
    %v233 = vld [vmem:[#allocation5 + $0x470] sm:$0xff]
    %v234 = vld [vmem:[#allocation5 + $0x478] sm:$0xff]
    %v235 = vld [vmem:[#allocation5 + $0x480] sm:$0xff]
    %v236 = vld [vmem:[#allocation5 + $0x488] sm:$0xff]
    %v237 = vld [vmem:[#allocation5 + $0x490] sm:$0xff]
    %v238 = vld [vmem:[#allocation5 + $0x498] sm:$0xff]
    %v239 = vld [vmem:[#allocation5 + $0x4a0] sm:$0xff]
    %v240 = vld [vmem:[#allocation5 + $0x4a8] sm:$0xff]
    %v241 = vld [vmem:[#allocation5 + $0x4b0] sm:$0xff]
    %v242 = vld [vmem:[#allocation5 + $0x4b8] sm:$0xff]
    %v243 = vld [vmem:[#allocation5 + $0x4c0] sm:$0xff]
    %v244 = vld [vmem:[#allocation5 + $0x4c8] sm:$0xff]
    %v245 = vld [vmem:[#allocation5 + $0x4d0] sm:$0xff]
    %v246 = vld [vmem:[#allocation5 + $0x4d8] sm:$0xff]
    %v247 = vld [vmem:[#allocation5 + $0x4e0] sm:$0xff]
    %v248 = vld [vmem:[#allocation5 + $0x4e8] sm:$0xff]
    %v249 = vld [vmem:[#allocation5 + $0x4f0] sm:$0xff]
    %v250 = vld [vmem:[#allocation5 + $0x4f8] sm:$0xff]
    %v251 = vld [vmem:[#allocation5 + $0x500] sm:$0xff]
    %v252 = vld [vmem:[#allocation5 + $0x508] sm:$0xff]
    %v253 = vld [vmem:[#allocation5 + $0x510] sm:$0xff]
    %v254 = vld [vmem:[#allocation5 + $0x518] sm:$0xff]
    %v255 = vld [vmem:[#allocation5 + $0x520] sm:$0xff]
    %v256 = vld [vmem:[#allocation5 + $0x528] sm:$0xff]
    %v257 = vld [vmem:[#allocation5 + $0x530] sm:$0xff]
    %v258 = vld [vmem:[#allocation5 + $0x538] sm:$0xff]
    %v259 = vld [vmem:[#allocation5 + $0x540] sm:$0xff]
    %v260 = vld [vmem:[#allocation5 + $0x548] sm:$0xff]
    %v261 = vld [vmem:[#allocation5 + $0x550] sm:$0xff]
    %v262 = vld [vmem:[#allocation5 + $0x558] sm:$0xff]
    %v263 = vld [vmem:[#allocation5 + $0x560] sm:$0xff]
    %v264 = vld [vmem:[#allocation5 + $0x568] sm:$0xff]
    %v265 = vld [vmem:[#allocation5 + $0x570] sm:$0xff]
    %v266 = vld [vmem:[#allocation5 + $0x578] sm:$0xff]
    %v267 = vld [vmem:[#allocation5 + $0x580] sm:$0xff]
    %v268 = vld [vmem:[#allocation5 + $0x588] sm:$0xff]
    %v269 = vld [vmem:[#allocation5 + $0x590] sm:$0xff]
    %v270 = vld [vmem:[#allocation5 + $0x598] sm:$0xff]
    %v271 = vld [vmem:[#allocation5 + $0x5a0] sm:$0xff]
    %v272 = vld [vmem:[#allocation5 + $0x5a8] sm:$0xff]
    %v273 = vld [vmem:[#allocation5 + $0x5b0] sm:$0xff]
    %v274 = vld [vmem:[#allocation5 + $0x5b8] sm:$0xff]
    %v275 = vld [vmem:[#allocation5 + $0x5c0] sm:$0xff]
    %v276 = vld [vmem:[#allocation5 + $0x5c8] sm:$0xff]
    %v277 = vld [vmem:[#allocation5 + $0x5d0] sm:$0xff]
    %v278 = vld [vmem:[#allocation5 + $0x5d8] sm:$0xff]
    %v279 = vld [vmem:[#allocation5 + $0x5e0] sm:$0xff]
    %v280 = vld [vmem:[#allocation5 + $0x5e8] sm:$0xff]
    %v281 = vld [vmem:[#allocation5 + $0x5f0] sm:$0xff]
    %v282 = vld [vmem:[#allocation5 + $0x5f8] sm:$0xff]
    %v283 = vld [vmem:[#allocation5 + $0x600] sm:$0xff]
    %v284 = vld [vmem:[#allocation5 + $0x608] sm:$0xff]
    %v285 = vld [vmem:[#allocation5 + $0x610] sm:$0xff]
    %v286 = vld [vmem:[#allocation5 + $0x618] sm:$0xff]
    %v287 = vld [vmem:[%s2] sm:$0xf]
    %v289 = vlaneseq
    %v290 = vshrl.u32 %v289, 7
    %v291 = vsub.s32 0, %v290
    %v292 = vrot.slane %v287, %v291
    %v293 = vlaneseq
    %v294 = vshrl.u32 %v293, 7
    %v295 = vsub.s32 1, %v294
    %v296 = vrot.slane %v287, %v295
    %v297 = vlaneseq
    %v298 = vshrl.u32 %v297, 7
    %v299 = vsub.s32 2, %v298
    %v300 = vrot.slane %v287, %v299
    %v301 = vlaneseq
    %v302 = vshrl.u32 %v301, 7
    %v303 = vsub.s32 3, %v302
    %v304 = vrot.slane %v287, %v303
    %v505 = vunpack.c.l.b16 %v91
    %v506 = vunpack.c.h.b16 %v91
    %v507 = vunpack.c.l.b16 %v92
    %v508 = vunpack.c.h.b16 %v92
    %v509 = vunpack.c.l.b16 %v93
    %v510 = vunpack.c.h.b16 %v93
    %v511 = vunpack.c.l.b16 %v94
    %v512 = vunpack.c.h.b16 %v94
    %v513 = vunpack.c.l.b16 %v95
    %v514 = vunpack.c.h.b16 %v95
    %v515 = vunpack.c.l.b16 %v96
    %v516 = vunpack.c.h.b16 %v96
    %v517 = vunpack.c.l.b16 %v97
    %v518 = vunpack.c.h.b16 %v97
    %v519 = vunpack.c.l.b16 %v98
    %v520 = vunpack.c.h.b16 %v98
    %v521 = vunpack.c.l.b16 %v99
    %v522 = vunpack.c.h.b16 %v99
    %v523 = vunpack.c.l.b16 %v100
    %v524 = vunpack.c.h.b16 %v100
    %v525 = vunpack.c.l.b16 %v101
    %v526 = vunpack.c.h.b16 %v101
    %v527 = vunpack.c.l.b16 %v102
    %v528 = vunpack.c.h.b16 %v102
    %v529 = vunpack.c.l.b16 %v103
    %v530 = vunpack.c.h.b16 %v103
    %v531 = vunpack.c.l.b16 %v104
    %v532 = vunpack.c.h.b16 %v104
    %v533 = vunpack.c.l.b16 %v105
    %v534 = vunpack.c.h.b16 %v105
    %v535 = vunpack.c.l.b16 %v106
    %v536 = vunpack.c.h.b16 %v106
    %v537 = vunpack.c.l.b16 %v107
    %v538 = vunpack.c.h.b16 %v107
    %v539 = vunpack.c.l.b16 %v108
    %v540 = vunpack.c.h.b16 %v108
    %v541 = vunpack.c.l.b16 %v109
    %v542 = vunpack.c.h.b16 %v109
    %v543 = vunpack.c.l.b16 %v110
    %v544 = vunpack.c.h.b16 %v110
    %v545 = vunpack.c.l.b16 %v111
    %v546 = vunpack.c.h.b16 %v111
    %v547 = vunpack.c.l.b16 %v112
    %v548 = vunpack.c.h.b16 %v112
    %v549 = vunpack.c.l.b16 %v113
    %v550 = vunpack.c.h.b16 %v113
    %v551 = vunpack.c.l.b16 %v114
    %v552 = vunpack.c.h.b16 %v114
    %v553 = vunpack.c.l.b16 %v115
    %v554 = vunpack.c.h.b16 %v115
    %v555 = vunpack.c.l.b16 %v116
    %v556 = vunpack.c.h.b16 %v116
    %v557 = vunpack.c.l.b16 %v117
    %v558 = vunpack.c.h.b16 %v117
    %v559 = vunpack.c.l.b16 %v118
    %v560 = vunpack.c.h.b16 %v118
    %v561 = vunpack.c.l.b16 %v119
    %v562 = vunpack.c.h.b16 %v119
    %v563 = vunpack.c.l.b16 %v120
    %v564 = vunpack.c.h.b16 %v120
    %v565 = vunpack.c.l.b16 %v121
    %v566 = vunpack.c.h.b16 %v121
    %v567 = vunpack.c.l.b16 %v122
    %v568 = vunpack.c.h.b16 %v122
    %v569 = vunpack.c.l.b16 %v123
    %v570 = vunpack.c.h.b16 %v123
    %v571 = vunpack.c.l.b16 %v124
    %v572 = vunpack.c.h.b16 %v124
    %v573 = vunpack.c.l.b16 %v125
    %v574 = vunpack.c.h.b16 %v125
    %v575 = vunpack.c.l.b16 %v126
    %v576 = vunpack.c.h.b16 %v126
    %v577 = vunpack.c.l.b16 %v127
    %v578 = vunpack.c.h.b16 %v127
    %v579 = vunpack.c.l.b16 %v128
    %v580 = vunpack.c.h.b16 %v128
    %v581 = vunpack.c.l.b16 %v129
    %v582 = vunpack.c.h.b16 %v129
    %v583 = vunpack.c.l.b16 %v130
    %v584 = vunpack.c.h.b16 %v130
    %v585 = vunpack.c.l.b16 %v131
    %v586 = vunpack.c.h.b16 %v131
    %v587 = vunpack.c.l.b16 %v132
    %v588 = vunpack.c.h.b16 %v132
    %v589 = vunpack.c.l.b16 %v133
    %v590 = vunpack.c.h.b16 %v133
    %v591 = vunpack.c.l.b16 %v134
    %v592 = vunpack.c.h.b16 %v134
    %v593 = vunpack.c.l.b16 %v135
    %v594 = vunpack.c.h.b16 %v135
    %v595 = vunpack.c.l.b16 %v136
    %v596 = vunpack.c.h.b16 %v136
    %v597 = vunpack.c.l.b16 %v137
    %v598 = vunpack.c.h.b16 %v137
    %v599 = vunpack.c.l.b16 %v138
    %v600 = vunpack.c.h.b16 %v138
    %v601 = vunpack.c.l.b16 %v139
    %v602 = vunpack.c.h.b16 %v139
    %v603 = vunpack.c.l.b16 %v140
    %v604 = vunpack.c.h.b16 %v140
    %v605 = vunpack.c.l.b16 %v141
    %v606 = vunpack.c.h.b16 %v141
    %v607 = vunpack.c.l.b16 %v142
    %v608 = vunpack.c.h.b16 %v142
    %v609 = vunpack.c.l.b16 %v143
    %v610 = vunpack.c.h.b16 %v143
    %v611 = vunpack.c.l.b16 %v144
    %v612 = vunpack.c.h.b16 %v144
    %v613 = vunpack.c.l.b16 %v145
    %v614 = vunpack.c.h.b16 %v145
    %v615 = vunpack.c.l.b16 %v146
    %v616 = vunpack.c.h.b16 %v146
    %v617 = vunpack.c.l.b16 %v147
    %v618 = vunpack.c.h.b16 %v147
    %v619 = vunpack.c.l.b16 %v148
    %v620 = vunpack.c.h.b16 %v148
    %v621 = vunpack.c.l.b16 %v149
    %v622 = vunpack.c.h.b16 %v149
    %v623 = vunpack.c.l.b16 %v150
    %v624 = vunpack.c.h.b16 %v150
    %v625 = vunpack.c.l.b16 %v151
    %v626 = vunpack.c.h.b16 %v151
    %v627 = vunpack.c.l.b16 %v152
    %v628 = vunpack.c.h.b16 %v152
    %v629 = vunpack.c.l.b16 %v153
    %v630 = vunpack.c.h.b16 %v153
    %v631 = vunpack.c.l.b16 %v154
    %v632 = vunpack.c.h.b16 %v154
    %v633 = vunpack.c.l.b16 %v155
    %v634 = vunpack.c.h.b16 %v155
    %v635 = vunpack.c.l.b16 %v156
    %v636 = vunpack.c.h.b16 %v156
    %v637 = vunpack.c.l.b16 %v157
    %v638 = vunpack.c.h.b16 %v157
    %v639 = vunpack.c.l.b16 %v158
    %v640 = vunpack.c.h.b16 %v158
    %v641 = vunpack.c.l.b16 %v159
    %v642 = vunpack.c.h.b16 %v159
    %v643 = vunpack.c.l.b16 %v160
    %v644 = vunpack.c.h.b16 %v160
    %v645 = vunpack.c.l.b16 %v161
    %v646 = vunpack.c.h.b16 %v161
    %v647 = vunpack.c.l.b16 %v162
    %v648 = vunpack.c.h.b16 %v162
    %v649 = vunpack.c.l.b16 %v163
    %v650 = vunpack.c.h.b16 %v163
    %v651 = vunpack.c.l.b16 %v164
    %v652 = vunpack.c.h.b16 %v164
    %v653 = vunpack.c.l.b16 %v165
    %v654 = vunpack.c.h.b16 %v165
    %v655 = vunpack.c.l.b16 %v166
    %v656 = vunpack.c.h.b16 %v166
    %v657 = vunpack.c.l.b16 %v167
    %v658 = vunpack.c.h.b16 %v167
    %v659 = vunpack.c.l.b16 %v168
    %v660 = vunpack.c.h.b16 %v168
    %v661 = vunpack.c.l.b16 %v169
    %v662 = vunpack.c.h.b16 %v169
    %v663 = vunpack.c.l.b16 %v170
    %v664 = vunpack.c.h.b16 %v170
    %v665 = vunpack.c.l.b16 %v171
    %v666 = vunpack.c.h.b16 %v171
    %v667 = vunpack.c.l.b16 %v172
    %v668 = vunpack.c.h.b16 %v172
    %v669 = vunpack.c.l.b16 %v173
    %v670 = vunpack.c.h.b16 %v173
    %v671 = vunpack.c.l.b16 %v174
    %v672 = vunpack.c.h.b16 %v174
    %v673 = vunpack.c.l.b16 %v175
    %v674 = vunpack.c.h.b16 %v175
    %v675 = vunpack.c.l.b16 %v176
    %v676 = vunpack.c.h.b16 %v176
    %v677 = vunpack.c.l.b16 %v177
    %v678 = vunpack.c.h.b16 %v177
    %v679 = vunpack.c.l.b16 %v178
    %v680 = vunpack.c.h.b16 %v178
    %v681 = vunpack.c.l.b16 %v179
    %v682 = vunpack.c.h.b16 %v179
    %v683 = vunpack.c.l.b16 %v180
    %v684 = vunpack.c.h.b16 %v180
    %v685 = vunpack.c.l.b16 %v181
    %v686 = vunpack.c.h.b16 %v181
    %v687 = vunpack.c.l.b16 %v182
    %v688 = vunpack.c.h.b16 %v182
    %v689 = vunpack.c.l.b16 %v183
    %v690 = vunpack.c.h.b16 %v183
    %v691 = vunpack.c.l.b16 %v184
    %v692 = vunpack.c.h.b16 %v184
    %v693 = vunpack.c.l.b16 %v185
    %v694 = vunpack.c.h.b16 %v185
    %v695 = vunpack.c.l.b16 %v186
    %v696 = vunpack.c.h.b16 %v186
    %v697 = vunpack.c.l.b16 %v187
    %v698 = vunpack.c.h.b16 %v187
    %v699 = vunpack.c.l.b16 %v188
    %v700 = vunpack.c.h.b16 %v188
    %v701 = vunpack.c.l.b16 %v189
    %v702 = vunpack.c.h.b16 %v189
    %v703 = vunpack.c.l.b16 %v190
    %v704 = vunpack.c.h.b16 %v190
    %v705 = vunpack.c.l.b16 %v191
    %v706 = vunpack.c.h.b16 %v191
    %v707 = vunpack.c.l.b16 %v192
    %v708 = vunpack.c.h.b16 %v192
    %v709 = vunpack.c.l.b16 %v193
    %v710 = vunpack.c.h.b16 %v193
    %v711 = vunpack.c.l.b16 %v194
    %v712 = vunpack.c.h.b16 %v194
    %v713 = vunpack.c.l.b16 %v195
    %v714 = vunpack.c.h.b16 %v195
    %v715 = vunpack.c.l.b16 %v196
    %v716 = vunpack.c.h.b16 %v196
    %v717 = vunpack.c.l.b16 %v197
    %v718 = vunpack.c.h.b16 %v197
    %v719 = vunpack.c.l.b16 %v198
    %v720 = vunpack.c.h.b16 %v198
    %v721 = vunpack.c.l.b16 %v199
    %v722 = vunpack.c.h.b16 %v199
    %v723 = vunpack.c.l.b16 %v200
    %v724 = vunpack.c.h.b16 %v200
    %v725 = vunpack.c.l.b16 %v201
    %v726 = vunpack.c.h.b16 %v201
    %v727 = vunpack.c.l.b16 %v202
    %v728 = vunpack.c.h.b16 %v202
    %v729 = vunpack.c.l.b16 %v203
    %v730 = vunpack.c.h.b16 %v203
    %v731 = vunpack.c.l.b16 %v204
    %v732 = vunpack.c.h.b16 %v204
    %v733 = vunpack.c.l.b16 %v205
    %v734 = vunpack.c.h.b16 %v205
    %v735 = vunpack.c.l.b16 %v206
    %v736 = vunpack.c.h.b16 %v206
    %v737 = vunpack.c.l.b16 %v207
    %v738 = vunpack.c.h.b16 %v207
    %v739 = vunpack.c.l.b16 %v208
    %v740 = vunpack.c.h.b16 %v208
    %v741 = vunpack.c.l.b16 %v209
    %v742 = vunpack.c.h.b16 %v209
    %v743 = vunpack.c.l.b16 %v210
    %v744 = vunpack.c.h.b16 %v210
    %v745 = vunpack.c.l.b16 %v211
    %v746 = vunpack.c.h.b16 %v211
    %v747 = vunpack.c.l.b16 %v212
    %v748 = vunpack.c.h.b16 %v212
    %v749 = vunpack.c.l.b16 %v213
    %v750 = vunpack.c.h.b16 %v213
    %v751 = vunpack.c.l.b16 %v214
    %v752 = vunpack.c.h.b16 %v214
    %v753 = vunpack.c.l.b16 %v215
    %v754 = vunpack.c.h.b16 %v215
    %v755 = vunpack.c.l.b16 %v216
    %v756 = vunpack.c.h.b16 %v216
    %v757 = vunpack.c.l.b16 %v217
    %v758 = vunpack.c.h.b16 %v217
    %v759 = vunpack.c.l.b16 %v218
    %v760 = vunpack.c.h.b16 %v218
    %v761 = vunpack.c.l.b16 %v219
    %v762 = vunpack.c.h.b16 %v219
    %v763 = vunpack.c.l.b16 %v220
    %v764 = vunpack.c.h.b16 %v220
    %v765 = vunpack.c.l.b16 %v221
    %v766 = vunpack.c.h.b16 %v221
    %v767 = vunpack.c.l.b16 %v222
    %v768 = vunpack.c.h.b16 %v222
    %v769 = vunpack.c.l.b16 %v223
    %v770 = vunpack.c.h.b16 %v223
    %v771 = vunpack.c.l.b16 %v224
    %v772 = vunpack.c.h.b16 %v224
    %v773 = vunpack.c.l.b16 %v225
    %v774 = vunpack.c.h.b16 %v225
    %v775 = vunpack.c.l.b16 %v226
    %v776 = vunpack.c.h.b16 %v226
    %v777 = vunpack.c.l.b16 %v227
    %v778 = vunpack.c.h.b16 %v227
    %v779 = vunpack.c.l.b16 %v228
    %v780 = vunpack.c.h.b16 %v228
    %v781 = vunpack.c.l.b16 %v229
    %v782 = vunpack.c.h.b16 %v229
    %v783 = vunpack.c.l.b16 %v230
    %v784 = vunpack.c.h.b16 %v230
    %v785 = vunpack.c.l.b16 %v231
    %v786 = vunpack.c.h.b16 %v231
    %v787 = vunpack.c.l.b16 %v232
    %v788 = vunpack.c.h.b16 %v232
    %v789 = vunpack.c.l.b16 %v233
    %v790 = vunpack.c.h.b16 %v233
    %v791 = vunpack.c.l.b16 %v234
    %v792 = vunpack.c.h.b16 %v234
    %v793 = vunpack.c.l.b16 %v235
    %v794 = vunpack.c.h.b16 %v235
    %v795 = vunpack.c.l.b16 %v236
    %v796 = vunpack.c.h.b16 %v236
    %v797 = vunpack.c.l.b16 %v237
    %v798 = vunpack.c.h.b16 %v237
    %v799 = vunpack.c.l.b16 %v238
    %v800 = vunpack.c.h.b16 %v238
    %v801 = vunpack.c.l.b16 %v239
    %v802 = vunpack.c.h.b16 %v239
    %v803 = vunpack.c.l.b16 %v240
    %v804 = vunpack.c.h.b16 %v240
    %v805 = vunpack.c.l.b16 %v241
    %v806 = vunpack.c.h.b16 %v241
    %v807 = vunpack.c.l.b16 %v242
    %v808 = vunpack.c.h.b16 %v242
    %v809 = vunpack.c.l.b16 %v243
    %v810 = vunpack.c.h.b16 %v243
    %v811 = vunpack.c.l.b16 %v244
    %v812 = vunpack.c.h.b16 %v244
    %v813 = vunpack.c.l.b16 %v245
    %v814 = vunpack.c.h.b16 %v245
    %v815 = vunpack.c.l.b16 %v246
    %v816 = vunpack.c.h.b16 %v246
    %v817 = vunpack.c.l.b16 %v247
    %v818 = vunpack.c.h.b16 %v247
    %v819 = vunpack.c.l.b16 %v248
    %v820 = vunpack.c.h.b16 %v248
    %v821 = vunpack.c.l.b16 %v249
    %v822 = vunpack.c.h.b16 %v249
    %v823 = vunpack.c.l.b16 %v250
    %v824 = vunpack.c.h.b16 %v250
    %v825 = vunpack.c.l.b16 %v251
    %v826 = vunpack.c.h.b16 %v251
    %v827 = vunpack.c.l.b16 %v252
    %v828 = vunpack.c.h.b16 %v252
    %v829 = vunpack.c.l.b16 %v253
    %v830 = vunpack.c.h.b16 %v253
    %v831 = vunpack.c.l.b16 %v254
    %v832 = vunpack.c.h.b16 %v254
    %v833 = vunpack.c.l.b16 %v255
    %v834 = vunpack.c.h.b16 %v255
    %v835 = vunpack.c.l.b16 %v256
    %v836 = vunpack.c.h.b16 %v256
    %v837 = vunpack.c.l.b16 %v257
    %v838 = vunpack.c.h.b16 %v257
    %v839 = vunpack.c.l.b16 %v258
    %v840 = vunpack.c.h.b16 %v258
    %v841 = vunpack.c.l.b16 %v259
    %v842 = vunpack.c.h.b16 %v259
    %v843 = vunpack.c.l.b16 %v260
    %v844 = vunpack.c.h.b16 %v260
    %v845 = vunpack.c.l.b16 %v261
    %v846 = vunpack.c.h.b16 %v261
    %v847 = vunpack.c.l.b16 %v262
    %v848 = vunpack.c.h.b16 %v262
    %v849 = vunpack.c.l.b16 %v263
    %v850 = vunpack.c.h.b16 %v263
    %v851 = vunpack.c.l.b16 %v264
    %v852 = vunpack.c.h.b16 %v264
    %v853 = vunpack.c.l.b16 %v265
    %v854 = vunpack.c.h.b16 %v265
    %v855 = vunpack.c.l.b16 %v266
    %v856 = vunpack.c.h.b16 %v266
    %v857 = vunpack.c.l.b16 %v267
    %v858 = vunpack.c.h.b16 %v267
    %v859 = vunpack.c.l.b16 %v268
    %v860 = vunpack.c.h.b16 %v268
    %v861 = vunpack.c.l.b16 %v269
    %v862 = vunpack.c.h.b16 %v269
    %v863 = vunpack.c.l.b16 %v270
    %v864 = vunpack.c.h.b16 %v270
    %v865 = vunpack.c.l.b16 %v271
    %v866 = vunpack.c.h.b16 %v271
    %v867 = vunpack.c.l.b16 %v272
    %v868 = vunpack.c.h.b16 %v272
    %v869 = vunpack.c.l.b16 %v273
    %v870 = vunpack.c.h.b16 %v273
    %v871 = vunpack.c.l.b16 %v274
    %v872 = vunpack.c.h.b16 %v274
    %v873 = vunpack.c.l.b16 %v275
    %v874 = vunpack.c.h.b16 %v275
    %v875 = vunpack.c.l.b16 %v276
    %v876 = vunpack.c.h.b16 %v276
    %v877 = vunpack.c.l.b16 %v277
    %v878 = vunpack.c.h.b16 %v277
    %v879 = vunpack.c.l.b16 %v278
    %v880 = vunpack.c.h.b16 %v278
    %v881 = vunpack.c.l.b16 %v279
    %v882 = vunpack.c.h.b16 %v279
    %v883 = vunpack.c.l.b16 %v280
    %v884 = vunpack.c.h.b16 %v280
    %v885 = vunpack.c.l.b16 %v281
    %v886 = vunpack.c.h.b16 %v281
    %v887 = vunpack.c.l.b16 %v282
    %v888 = vunpack.c.h.b16 %v282
    %v889 = vunpack.c.l.b16 %v283
    %v890 = vunpack.c.h.b16 %v283
    %v891 = vunpack.c.l.b16 %v284
    %v892 = vunpack.c.h.b16 %v284
    %v893 = vunpack.c.l.b16 %v285
    %v894 = vunpack.c.h.b16 %v285
    %v895 = vunpack.c.l.b16 %v286
    %v896 = vunpack.c.h.b16 %v286
    %v897 = vpack.c.b16 %v509, %v505
    %v898 = vpack.c.b16 %v510, %v506
    %v899 = vpack.c.b16 %v511, %v507
    %v900 = vpack.c.b16 %v512, %v508
    %v901 = vpack.c.b16 %v517, %v513
    %v902 = vpack.c.b16 %v518, %v514
    %v903 = vpack.c.b16 %v519, %v515
    %v904 = vpack.c.b16 %v520, %v516
    %v905 = vpack.c.b16 %v525, %v521
    %v906 = vpack.c.b16 %v526, %v522
    %v907 = vpack.c.b16 %v527, %v523
    %v908 = vpack.c.b16 %v528, %v524
    %v909 = vpack.c.b16 %v533, %v529
    %v910 = vpack.c.b16 %v534, %v530
    %v911 = vpack.c.b16 %v535, %v531
    %v912 = vpack.c.b16 %v536, %v532
    %v913 = vpack.c.b16 %v541, %v537
    %v914 = vpack.c.b16 %v542, %v538
    %v915 = vpack.c.b16 %v543, %v539
    %v916 = vpack.c.b16 %v544, %v540
    %v917 = vpack.c.b16 %v549, %v545
    %v918 = vpack.c.b16 %v550, %v546
    %v919 = vpack.c.b16 %v551, %v547
    %v920 = vpack.c.b16 %v552, %v548
    %v921 = vpack.c.b16 %v557, %v553
    %v922 = vpack.c.b16 %v558, %v554
    %v923 = vpack.c.b16 %v559, %v555
    %v924 = vpack.c.b16 %v560, %v556
    %v925 = vpack.c.b16 %v565, %v561
    %v926 = vpack.c.b16 %v566, %v562
    %v927 = vpack.c.b16 %v567, %v563
    %v928 = vpack.c.b16 %v568, %v564
    %v929 = vpack.c.b16 %v573, %v569
    %v930 = vpack.c.b16 %v574, %v570
    %v931 = vpack.c.b16 %v575, %v571
    %v932 = vpack.c.b16 %v576, %v572
    %v933 = vpack.c.b16 %v581, %v577
    %v934 = vpack.c.b16 %v582, %v578
    %v935 = vpack.c.b16 %v583, %v579
    %v936 = vpack.c.b16 %v584, %v580
    %v937 = vpack.c.b16 %v589, %v585
    %v938 = vpack.c.b16 %v590, %v586
    %v939 = vpack.c.b16 %v591, %v587
    %v940 = vpack.c.b16 %v592, %v588
    %v941 = vpack.c.b16 %v597, %v593
    %v942 = vpack.c.b16 %v598, %v594
    %v943 = vpack.c.b16 %v599, %v595
    %v944 = vpack.c.b16 %v600, %v596
    %v945 = vpack.c.b16 %v605, %v601
    %v946 = vpack.c.b16 %v606, %v602
    %v947 = vpack.c.b16 %v607, %v603
    %v948 = vpack.c.b16 %v608, %v604
    %v949 = vpack.c.b16 %v613, %v609
    %v950 = vpack.c.b16 %v614, %v610
    %v951 = vpack.c.b16 %v615, %v611
    %v952 = vpack.c.b16 %v616, %v612
    %v953 = vpack.c.b16 %v621, %v617
    %v954 = vpack.c.b16 %v622, %v618
    %v955 = vpack.c.b16 %v623, %v619
    %v956 = vpack.c.b16 %v624, %v620
    %v957 = vpack.c.b16 %v629, %v625
    %v958 = vpack.c.b16 %v630, %v626
    %v959 = vpack.c.b16 %v631, %v627
    %v960 = vpack.c.b16 %v632, %v628
    %v961 = vpack.c.b16 %v637, %v633
    %v962 = vpack.c.b16 %v638, %v634
    %v963 = vpack.c.b16 %v639, %v635
    %v964 = vpack.c.b16 %v640, %v636
    %v965 = vpack.c.b16 %v645, %v641
    %v966 = vpack.c.b16 %v646, %v642
    %v967 = vpack.c.b16 %v647, %v643
    %v968 = vpack.c.b16 %v648, %v644
    %v969 = vpack.c.b16 %v653, %v649
    %v970 = vpack.c.b16 %v654, %v650
    %v971 = vpack.c.b16 %v655, %v651
    %v972 = vpack.c.b16 %v656, %v652
    %v973 = vpack.c.b16 %v661, %v657
    %v974 = vpack.c.b16 %v662, %v658
    %v975 = vpack.c.b16 %v663, %v659
    %v976 = vpack.c.b16 %v664, %v660
    %v977 = vpack.c.b16 %v669, %v665
    %v978 = vpack.c.b16 %v670, %v666
    %v979 = vpack.c.b16 %v671, %v667
    %v980 = vpack.c.b16 %v672, %v668
    %v981 = vpack.c.b16 %v677, %v673
    %v982 = vpack.c.b16 %v678, %v674
    %v983 = vpack.c.b16 %v679, %v675
    %v984 = vpack.c.b16 %v680, %v676
    %v985 = vpack.c.b16 %v685, %v681
    %v986 = vpack.c.b16 %v686, %v682
    %v987 = vpack.c.b16 %v687, %v683
    %v988 = vpack.c.b16 %v688, %v684
    %v989 = vpack.c.b16 %v693, %v689
    %v990 = vpack.c.b16 %v694, %v690
    %v991 = vpack.c.b16 %v695, %v691
    %v992 = vpack.c.b16 %v696, %v692
    %v993 = vpack.c.b16 %v701, %v697
    %v994 = vpack.c.b16 %v702, %v698
    %v995 = vpack.c.b16 %v703, %v699
    %v996 = vpack.c.b16 %v704, %v700
    %v997 = vpack.c.b16 %v709, %v705
    %v998 = vpack.c.b16 %v710, %v706
    %v999 = vpack.c.b16 %v711, %v707
    %v1000 = vpack.c.b16 %v712, %v708
    %v1001 = vpack.c.b16 %v717, %v713
    %v1002 = vpack.c.b16 %v718, %v714
    %v1003 = vpack.c.b16 %v719, %v715
    %v1004 = vpack.c.b16 %v720, %v716
    %v1005 = vpack.c.b16 %v725, %v721
    %v1006 = vpack.c.b16 %v726, %v722
    %v1007 = vpack.c.b16 %v727, %v723
    %v1008 = vpack.c.b16 %v728, %v724
    %v1009 = vpack.c.b16 %v733, %v729
    %v1010 = vpack.c.b16 %v734, %v730
    %v1011 = vpack.c.b16 %v735, %v731
    %v1012 = vpack.c.b16 %v736, %v732
    %v1013 = vpack.c.b16 %v741, %v737
    %v1014 = vpack.c.b16 %v742, %v738
    %v1015 = vpack.c.b16 %v743, %v739
    %v1016 = vpack.c.b16 %v744, %v740
    %v1017 = vpack.c.b16 %v749, %v745
    %v1018 = vpack.c.b16 %v750, %v746
    %v1019 = vpack.c.b16 %v751, %v747
    %v1020 = vpack.c.b16 %v752, %v748
    %v1021 = vpack.c.b16 %v757, %v753
    %v1022 = vpack.c.b16 %v758, %v754
    %v1023 = vpack.c.b16 %v759, %v755
    %v1024 = vpack.c.b16 %v760, %v756
    %v1025 = vpack.c.b16 %v765, %v761
    %v1026 = vpack.c.b16 %v766, %v762
    %v1027 = vpack.c.b16 %v767, %v763
    %v1028 = vpack.c.b16 %v768, %v764
    %v1029 = vpack.c.b16 %v773, %v769
    %v1030 = vpack.c.b16 %v774, %v770
    %v1031 = vpack.c.b16 %v775, %v771
    %v1032 = vpack.c.b16 %v776, %v772
    %v1033 = vpack.c.b16 %v781, %v777
    %v1034 = vpack.c.b16 %v782, %v778
    %v1035 = vpack.c.b16 %v783, %v779
    %v1036 = vpack.c.b16 %v784, %v780
    %v1037 = vpack.c.b16 %v789, %v785
    %v1038 = vpack.c.b16 %v790, %v786
    %v1039 = vpack.c.b16 %v791, %v787
    %v1040 = vpack.c.b16 %v792, %v788
    %v1041 = vpack.c.b16 %v797, %v793
    %v1042 = vpack.c.b16 %v798, %v794
    %v1043 = vpack.c.b16 %v799, %v795
    %v1044 = vpack.c.b16 %v800, %v796
    %v1045 = vpack.c.b16 %v805, %v801
    %v1046 = vpack.c.b16 %v806, %v802
    %v1047 = vpack.c.b16 %v807, %v803
    %v1048 = vpack.c.b16 %v808, %v804
    %v1049 = vpack.c.b16 %v813, %v809
    %v1050 = vpack.c.b16 %v814, %v810
    %v1051 = vpack.c.b16 %v815, %v811
    %v1052 = vpack.c.b16 %v816, %v812
    %v1053 = vpack.c.b16 %v821, %v817
    %v1054 = vpack.c.b16 %v822, %v818
    %v1055 = vpack.c.b16 %v823, %v819
    %v1056 = vpack.c.b16 %v824, %v820
    %v1057 = vpack.c.b16 %v829, %v825
    %v1058 = vpack.c.b16 %v830, %v826
    %v1059 = vpack.c.b16 %v831, %v827
    %v1060 = vpack.c.b16 %v832, %v828
    %v1061 = vpack.c.b16 %v837, %v833
    %v1062 = vpack.c.b16 %v838, %v834
    %v1063 = vpack.c.b16 %v839, %v835
    %v1064 = vpack.c.b16 %v840, %v836
    %v1065 = vpack.c.b16 %v845, %v841
    %v1066 = vpack.c.b16 %v846, %v842
    %v1067 = vpack.c.b16 %v847, %v843
    %v1068 = vpack.c.b16 %v848, %v844
    %v1069 = vpack.c.b16 %v853, %v849
    %v1070 = vpack.c.b16 %v854, %v850
    %v1071 = vpack.c.b16 %v855, %v851
    %v1072 = vpack.c.b16 %v856, %v852
    %v1073 = vpack.c.b16 %v861, %v857
    %v1074 = vpack.c.b16 %v862, %v858
    %v1075 = vpack.c.b16 %v863, %v859
    %v1076 = vpack.c.b16 %v864, %v860
    %v1077 = vpack.c.b16 %v869, %v865
    %v1078 = vpack.c.b16 %v870, %v866
    %v1079 = vpack.c.b16 %v871, %v867
    %v1080 = vpack.c.b16 %v872, %v868
    %v1081 = vpack.c.b16 %v877, %v873
    %v1082 = vpack.c.b16 %v878, %v874
    %v1083 = vpack.c.b16 %v879, %v875
    %v1084 = vpack.c.b16 %v880, %v876
    %v1085 = vpack.c.b16 %v885, %v881
    %v1086 = vpack.c.b16 %v886, %v882
    %v1087 = vpack.c.b16 %v887, %v883
    %v1088 = vpack.c.b16 %v888, %v884
    %v1089 = vpack.c.b16 %v893, %v889
    %v1090 = vpack.c.b16 %v894, %v890
    %v1091 = vpack.c.b16 %v895, %v891
    %v1092 = vpack.c.b16 %v896, %v892
    %vm1289 = vcmask 130048
    %v1291 = vsel %vm1289, %v90, 0
    %1293 = vmatprep.subr.bf16.mxu0 %v898
    %1294 = vmatpush1.bf16.msra.mxu0 %v897
    %1295 = vmatprep.subr.bf16.mxu0 %v902
    %1296 = vmatpush1.bf16.msra.mxu0 %v901
    %1297 = vmatprep.subr.bf16.mxu0 %v906
    %1298 = vmatpush1.bf16.msra.mxu0 %v905
    %1299 = vmatprep.subr.bf16.mxu0 %v910
    %1300 = vmatpush1.bf16.msra.mxu0 %v909
    %1301 = vmatprep.subr.bf16.mxu0 %v914
    %1302 = vmatpush1.bf16.msra.mxu0 %v913
    %1303 = vmatprep.subr.bf16.mxu0 %v918
    %1304 = vmatpush1.bf16.msra.mxu0 %v917
    %1305 = vmatprep.subr.bf16.mxu0 %v922
    %1306 = vmatpush1.bf16.msra.mxu0 %v921
    %1307 = vmatprep.subr.bf16.mxu0 %v926
    %1308 = vmatpush1.bf16.msra.mxu0 %v925
    %1309 = vmatprep.subr.bf16.mxu0 %v930
    %1310 = vmatpush1.bf16.msra.mxu0 %v929
    %1311 = vmatprep.subr.bf16.mxu0 %v934
    %1312 = vmatpush1.bf16.msra.mxu0 %v933
    %1313 = vmatprep.subr.bf16.mxu0 %v938
    %1314 = vmatpush1.bf16.msra.mxu0 %v937
    %1315 = vmatprep.subr.bf16.mxu0 %v942
    %1316 = vmatpush1.bf16.msra.mxu0 %v941
    %1317 = vmatprep.subr.bf16.mxu0 %v946
    %1318 = vmatpush1.bf16.msra.mxu0 %v945
    %1319 = vmatprep.subr.bf16.mxu0 %v950
    %1320 = vmatpush1.bf16.msra.mxu0 %v949
    %1321 = vmatprep.subr.bf16.mxu0 %v954
    %1322 = vmatpush1.bf16.msra.mxu0 %v953
    %1323 = vmatprep.subr.bf16.mxu0 %v958
    %1324 = vmatpush1.bf16.msra.mxu0 %v957
    %1325 = vmatprep.mubr.bf16.mxu0 %v85
    %1326 = vmatmul.mubr.bf16.gmra.mrb[0].mxu0 %v84
    %v1327 = vpop.f32.mrb[0].mxu0
    %v1328 = vadd.f32 %v292, %v1327
    %v1329 = vpop.f32.mrb[0].mxu0
    %v1330 = vadd.f32 %v296, %v1329
    %v1331 = vpop.f32.mrb[0].mxu0
    %v1332 = vadd.f32 %v292, %v1331
    %v1333 = vpop.f32.mrb[0].mxu0
    %v1334 = vadd.f32 %v296, %v1333
    %1335 = vdwg.mxu0
    %1336 = vmatprep.subr.bf16.mxu0 %v962
    %1337 = vmatpush1.bf16.msra.mxu0 %v961
    %1338 = vmatprep.subr.bf16.mxu0 %v966
    %1339 = vmatpush1.bf16.msra.mxu0 %v965
    %1340 = vmatprep.subr.bf16.mxu0 %v970
    %1341 = vmatpush1.bf16.msra.mxu0 %v969
    %1342 = vmatprep.subr.bf16.mxu0 %v974
    %1343 = vmatpush1.bf16.msra.mxu0 %v973
    %1344 = vmatprep.subr.bf16.mxu0 %v978
    %1345 = vmatpush1.bf16.msra.mxu0 %v977
    %1346 = vmatprep.subr.bf16.mxu0 %v982
    %1347 = vmatpush1.bf16.msra.mxu0 %v981
    %1348 = vmatprep.subr.bf16.mxu0 %v986
    %1349 = vmatpush1.bf16.msra.mxu0 %v985
    %1350 = vmatprep.subr.bf16.mxu0 %v990
    %1351 = vmatpush1.bf16.msra.mxu0 %v989
    %1352 = vmatprep.subr.bf16.mxu0 %v994
    %1353 = vmatpush1.bf16.msra.mxu0 %v993
    %1354 = vmatprep.subr.bf16.mxu0 %v998
    %1355 = vmatpush1.bf16.msra.mxu0 %v997
    %1356 = vmatprep.subr.bf16.mxu0 %v1002
    %1357 = vmatpush1.bf16.msra.mxu0 %v1001
    %1358 = vmatprep.subr.bf16.mxu0 %v1006
    %1359 = vmatpush1.bf16.msra.mxu0 %v1005
    %1360 = vmatprep.subr.bf16.mxu0 %v1010
    %1361 = vmatpush1.bf16.msra.mxu0 %v1009
    %1362 = vmatprep.subr.bf16.mxu0 %v1014
    %1363 = vmatpush1.bf16.msra.mxu0 %v1013
    %1364 = vmatprep.subr.bf16.mxu0 %v1018
    %1365 = vmatpush1.bf16.msra.mxu0 %v1017
    %1366 = vmatprep.subr.bf16.mxu0 %v1022
    %1367 = vmatpush1.bf16.msra.mxu0 %v1021
    %1368 = vmatprep.mubr.bf16.mxu0 %v87
    %1369 = vmatmul.mubr.bf16.gmra.mrb[0].mxu0 %v86
    %v1370 = vpop.f32.mrb[0].mxu0
    %v1371 = vadd.f32 %v1328, %v1370
    %v1372 = vpop.f32.mrb[0].mxu0
    %v1373 = vadd.f32 %v1330, %v1372
    %v1374 = vpop.f32.mrb[0].mxu0
    %v1375 = vadd.f32 %v1332, %v1374
    %v1376 = vpop.f32.mrb[0].mxu0
    %v1377 = vadd.f32 %v1334, %v1376
    %1378 = vdwg.mxu0
    %1379 = vmatprep.subr.bf16.mxu0 %v1026
    %1380 = vmatpush1.bf16.msra.mxu0 %v1025
    %1381 = vmatprep.subr.bf16.mxu0 %v1030
    %1382 = vmatpush1.bf16.msra.mxu0 %v1029
    %1383 = vmatprep.subr.bf16.mxu0 %v1034
    %1384 = vmatpush1.bf16.msra.mxu0 %v1033
    %1385 = vmatprep.subr.bf16.mxu0 %v1038
    %1386 = vmatpush1.bf16.msra.mxu0 %v1037
    %1387 = vmatprep.subr.bf16.mxu0 %v1042
    %1388 = vmatpush1.bf16.msra.mxu0 %v1041
    %1389 = vmatprep.subr.bf16.mxu0 %v1046
    %1390 = vmatpush1.bf16.msra.mxu0 %v1045
    %1391 = vmatprep.subr.bf16.mxu0 %v1050
    %1392 = vmatpush1.bf16.msra.mxu0 %v1049
    %1393 = vmatprep.subr.bf16.mxu0 %v1054
    %1394 = vmatpush1.bf16.msra.mxu0 %v1053
    %1395 = vmatprep.subr.bf16.mxu0 %v1058
    %1396 = vmatpush1.bf16.msra.mxu0 %v1057
    %1397 = vmatprep.subr.bf16.mxu0 %v1062
    %1398 = vmatpush1.bf16.msra.mxu0 %v1061
    %1399 = vmatprep.subr.bf16.mxu0 %v1066
    %1400 = vmatpush1.bf16.msra.mxu0 %v1065
    %1401 = vmatprep.subr.bf16.mxu0 %v1070
    %1402 = vmatpush1.bf16.msra.mxu0 %v1069
    %1403 = vmatprep.subr.bf16.mxu0 %v1074
    %1404 = vmatpush1.bf16.msra.mxu0 %v1073
    %1405 = vmatprep.subr.bf16.mxu0 %v1078
    %1406 = vmatpush1.bf16.msra.mxu0 %v1077
    %1407 = vmatprep.subr.bf16.mxu0 %v1082
    %1408 = vmatpush1.bf16.msra.mxu0 %v1081
    %1409 = vmatprep.subr.bf16.mxu0 %v1086
    %1410 = vmatpush1.bf16.msra.mxu0 %v1085
    %1411 = vmatprep.mubr.bf16.mxu0 %v89
    %1412 = vmatmul.mubr.bf16.gmra.mrb[0].mxu0 %v88
    %v1413 = vpop.f32.mrb[0].mxu0
    %v1414 = vadd.f32 %v1371, %v1413
    %v1415 = vpop.f32.mrb[0].mxu0
    %v1416 = vadd.f32 %v1373, %v1415
    %v1417 = vpop.f32.mrb[0].mxu0
    %v1418 = vadd.f32 %v1375, %v1417
    %v1419 = vpop.f32.mrb[0].mxu0
    %v1420 = vadd.f32 %v1377, %v1419
    %1421 = vdwg.mxu0
    %1422 = vmatprep.subr.bf16.mxu0 %v1090
    %1423 = vmatpush1.bf16.msra.mxu0 %v1089
    %1424 = vmatprep.subr.bf16.mxu0 0
    %1425 = vmatpush1.bf16.msra.mxu0 0
    %1426 = vmatprep.subr.bf16.mxu0 0
    %1427 = vmatpush1.bf16.msra.mxu0 0
    %1428 = vmatprep.subr.bf16.mxu0 0
    %1429 = vmatpush1.bf16.msra.mxu0 0
    %1430 = vmatprep.subr.bf16.mxu0 0
    %1431 = vmatpush1.bf16.msra.mxu0 0
    %1432 = vmatprep.subr.bf16.mxu0 0
    %1433 = vmatpush1.bf16.msra.mxu0 0
    %1434 = vmatprep.subr.bf16.mxu0 0
    %1435 = vmatpush1.bf16.msra.mxu0 0
    %1436 = vmatprep.subr.bf16.mxu0 0
    %1437 = vmatpush1.bf16.msra.mxu0 0
    %1438 = vmatprep.subr.bf16.mxu0 0
    %1439 = vmatpush1.bf16.msra.mxu0 0
    %1440 = vmatprep.subr.bf16.mxu0 0
    %1441 = vmatpush1.bf16.msra.mxu0 0
    %1442 = vmatprep.subr.bf16.mxu0 0
    %1443 = vmatpush1.bf16.msra.mxu0 0
    %1444 = vmatprep.subr.bf16.mxu0 0
    %1445 = vmatpush1.bf16.msra.mxu0 0
    %1446 = vmatprep.subr.bf16.mxu0 0
    %1447 = vmatpush1.bf16.msra.mxu0 0
    %1448 = vmatprep.subr.bf16.mxu0 0
    %1449 = vmatpush1.bf16.msra.mxu0 0
    %1450 = vmatprep.subr.bf16.mxu0 0
    %1451 = vmatpush1.bf16.msra.mxu0 0
    %1452 = vmatprep.subr.bf16.mxu0 0
    %1453 = vmatpush1.bf16.msra.mxu0 0
    %1454 = vmatprep.mubr.bf16.mxu0 0
    %1455 = vmatmul.mubr.bf16.gmra.mrb[0].mxu0 %v1291
    %v1456 = vpop.f32.mrb[0].mxu0
    %v1457 = vadd.f32 %v1414, %v1456
    %v1458 = vpop.f32.mrb[0].mxu0
    %v1459 = vadd.f32 %v1416, %v1458
    %v1460 = vpop.f32.mrb[0].mxu0
    %v1461 = vadd.f32 %v1418, %v1460
    %v1462 = vpop.f32.mrb[0].mxu0
    %v1463 = vadd.f32 %v1420, %v1462
    %1464 = vdwg.mxu0
    %1465 = vmatprep.subr.bf16.mxu0 %v900
    %1466 = vmatpush1.bf16.msra.mxu0 %v899
    %1467 = vmatprep.subr.bf16.mxu0 %v904
    %1468 = vmatpush1.bf16.msra.mxu0 %v903
    %1469 = vmatprep.subr.bf16.mxu0 %v908
    %1470 = vmatpush1.bf16.msra.mxu0 %v907
    %1471 = vmatprep.subr.bf16.mxu0 %v912
    %1472 = vmatpush1.bf16.msra.mxu0 %v911
    %1473 = vmatprep.subr.bf16.mxu0 %v916
    %1474 = vmatpush1.bf16.msra.mxu0 %v915
    %1475 = vmatprep.subr.bf16.mxu0 %v920
    %1476 = vmatpush1.bf16.msra.mxu0 %v919
    %1477 = vmatprep.subr.bf16.mxu0 %v924
    %1478 = vmatpush1.bf16.msra.mxu0 %v923
    %1479 = vmatprep.subr.bf16.mxu0 %v928
    %1480 = vmatpush1.bf16.msra.mxu0 %v927
    %1481 = vmatprep.subr.bf16.mxu0 %v932
    %1482 = vmatpush1.bf16.msra.mxu0 %v931
    %1483 = vmatprep.subr.bf16.mxu0 %v936
    %1484 = vmatpush1.bf16.msra.mxu0 %v935
    %1485 = vmatprep.subr.bf16.mxu0 %v940
    %1486 = vmatpush1.bf16.msra.mxu0 %v939
    %1487 = vmatprep.subr.bf16.mxu0 %v944
    %1488 = vmatpush1.bf16.msra.mxu0 %v943
    %1489 = vmatprep.subr.bf16.mxu0 %v948
    %1490 = vmatpush1.bf16.msra.mxu0 %v947
    %1491 = vmatprep.subr.bf16.mxu0 %v952
    %1492 = vmatpush1.bf16.msra.mxu0 %v951
    %1493 = vmatprep.subr.bf16.mxu0 %v956
    %1494 = vmatpush1.bf16.msra.mxu0 %v955
    %1495 = vmatprep.subr.bf16.mxu0 %v960
    %1496 = vmatpush1.bf16.msra.mxu0 %v959
    %1497 = vmatprep.mubr.bf16.mxu0 %v85
    %1498 = vmatmul.mubr.bf16.gmra.mrb[0].mxu0 %v84
    %v1499 = vpop.f32.mrb[0].mxu0
    %v1500 = vadd.f32 %v300, %v1499
    %v1501 = vpop.f32.mrb[0].mxu0
    %v1502 = vadd.f32 %v304, %v1501
    %v1503 = vpop.f32.mrb[0].mxu0
    %v1504 = vadd.f32 %v300, %v1503
    %v1505 = vpop.f32.mrb[0].mxu0
    %v1506 = vadd.f32 %v304, %v1505
    %1507 = vdwg.mxu0
    %1508 = vmatprep.subr.bf16.mxu0 %v964
    %1509 = vmatpush1.bf16.msra.mxu0 %v963
    %1510 = vmatprep.subr.bf16.mxu0 %v968
    %1511 = vmatpush1.bf16.msra.mxu0 %v967
    %1512 = vmatprep.subr.bf16.mxu0 %v972
    %1513 = vmatpush1.bf16.msra.mxu0 %v971
    %1514 = vmatprep.subr.bf16.mxu0 %v976
    %1515 = vmatpush1.bf16.msra.mxu0 %v975
    %1516 = vmatprep.subr.bf16.mxu0 %v980
    %1517 = vmatpush1.bf16.msra.mxu0 %v979
    %1518 = vmatprep.subr.bf16.mxu0 %v984
    %1519 = vmatpush1.bf16.msra.mxu0 %v983
    %1520 = vmatprep.subr.bf16.mxu0 %v988
    %1521 = vmatpush1.bf16.msra.mxu0 %v987
    %1522 = vmatprep.subr.bf16.mxu0 %v992
    %1523 = vmatpush1.bf16.msra.mxu0 %v991
    %1524 = vmatprep.subr.bf16.mxu0 %v996
    %1525 = vmatpush1.bf16.msra.mxu0 %v995
    %1526 = vmatprep.subr.bf16.mxu0 %v1000
    %1527 = vmatpush1.bf16.msra.mxu0 %v999
    %1528 = vmatprep.subr.bf16.mxu0 %v1004
    %1529 = vmatpush1.bf16.msra.mxu0 %v1003
    %1530 = vmatprep.subr.bf16.mxu0 %v1008
    %1531 = vmatpush1.bf16.msra.mxu0 %v1007
    %1532 = vmatprep.subr.bf16.mxu0 %v1012
    %1533 = vmatpush1.bf16.msra.mxu0 %v1011
    %1534 = vmatprep.subr.bf16.mxu0 %v1016
    %1535 = vmatpush1.bf16.msra.mxu0 %v1015
    %1536 = vmatprep.subr.bf16.mxu0 %v1020
    %1537 = vmatpush1.bf16.msra.mxu0 %v1019
    %1538 = vmatprep.subr.bf16.mxu0 %v1024
    %1539 = vmatpush1.bf16.msra.mxu0 %v1023
    %1540 = vmatprep.mubr.bf16.mxu0 %v87
    %1541 = vmatmul.mubr.bf16.gmra.mrb[0].mxu0 %v86
    %v1542 = vpop.f32.mrb[0].mxu0
    %v1543 = vadd.f32 %v1500, %v1542
    %v1544 = vpop.f32.mrb[0].mxu0
    %v1545 = vadd.f32 %v1502, %v1544
    %v1546 = vpop.f32.mrb[0].mxu0
    %v1547 = vadd.f32 %v1504, %v1546
    %v1548 = vpop.f32.mrb[0].mxu0
    %v1549 = vadd.f32 %v1506, %v1548
    %1550 = vdwg.mxu0
    %1551 = vmatprep.subr.bf16.mxu0 %v1028
    %1552 = vmatpush1.bf16.msra.mxu0 %v1027
    %1553 = vmatprep.subr.bf16.mxu0 %v1032
    %1554 = vmatpush1.bf16.msra.mxu0 %v1031
    %1555 = vmatprep.subr.bf16.mxu0 %v1036
    %1556 = vmatpush1.bf16.msra.mxu0 %v1035
    %1557 = vmatprep.subr.bf16.mxu0 %v1040
    %1558 = vmatpush1.bf16.msra.mxu0 %v1039
    %1559 = vmatprep.subr.bf16.mxu0 %v1044
    %1560 = vmatpush1.bf16.msra.mxu0 %v1043
    %1561 = vmatprep.subr.bf16.mxu0 %v1048
    %1562 = vmatpush1.bf16.msra.mxu0 %v1047
    %1563 = vmatprep.subr.bf16.mxu0 %v1052
    %1564 = vmatpush1.bf16.msra.mxu0 %v1051
    %1565 = vmatprep.subr.bf16.mxu0 %v1056
    %1566 = vmatpush1.bf16.msra.mxu0 %v1055
    %1567 = vmatprep.subr.bf16.mxu0 %v1060
    %1568 = vmatpush1.bf16.msra.mxu0 %v1059
    %1569 = vmatprep.subr.bf16.mxu0 %v1064
    %1570 = vmatpush1.bf16.msra.mxu0 %v1063
    %1571 = vmatprep.subr.bf16.mxu0 %v1068
    %1572 = vmatpush1.bf16.msra.mxu0 %v1067
    %1573 = vmatprep.subr.bf16.mxu0 %v1072
    %1574 = vmatpush1.bf16.msra.mxu0 %v1071
    %1575 = vmatprep.subr.bf16.mxu0 %v1076
    %1576 = vmatpush1.bf16.msra.mxu0 %v1075
    %1577 = vmatprep.subr.bf16.mxu0 %v1080
    %1578 = vmatpush1.bf16.msra.mxu0 %v1079
    %1579 = vmatprep.subr.bf16.mxu0 %v1084
    %1580 = vmatpush1.bf16.msra.mxu0 %v1083
    %1581 = vmatprep.subr.bf16.mxu0 %v1088
    %1582 = vmatpush1.bf16.msra.mxu0 %v1087
    %1583 = vmatprep.mubr.bf16.mxu0 %v89
    %1584 = vmatmul.mubr.bf16.gmra.mrb[0].mxu0 %v88
    %v1585 = vpop.f32.mrb[0].mxu0
    %v1586 = vadd.f32 %v1543, %v1585
    %v1587 = vpop.f32.mrb[0].mxu0
    %v1588 = vadd.f32 %v1545, %v1587
    %v1589 = vpop.f32.mrb[0].mxu0
    %v1590 = vadd.f32 %v1547, %v1589
    %v1591 = vpop.f32.mrb[0].mxu0
    %v1592 = vadd.f32 %v1549, %v1591
    %1593 = vdwg.mxu0
    %1594 = vmatprep.subr.bf16.mxu0 %v1092
    %1595 = vmatpush1.bf16.msra.mxu0 %v1091
    %1596 = vmatprep.subr.bf16.mxu0 0
    %1597 = vmatpush1.bf16.msra.mxu0 0
    %1598 = vmatprep.subr.bf16.mxu0 0
    %1599 = vmatpush1.bf16.msra.mxu0 0
    %1600 = vmatprep.subr.bf16.mxu0 0
    %1601 = vmatpush1.bf16.msra.mxu0 0
    %1602 = vmatprep.subr.bf16.mxu0 0
    %1603 = vmatpush1.bf16.msra.mxu0 0
    %1604 = vmatprep.subr.bf16.mxu0 0
    %1605 = vmatpush1.bf16.msra.mxu0 0
    %1606 = vmatprep.subr.bf16.mxu0 0
    %1607 = vmatpush1.bf16.msra.mxu0 0
    %1608 = vmatprep.subr.bf16.mxu0 0
    %1609 = vmatpush1.bf16.msra.mxu0 0
    %1610 = vmatprep.subr.bf16.mxu0 0
    %1611 = vmatpush1.bf16.msra.mxu0 0
    %1612 = vmatprep.subr.bf16.mxu0 0
    %1613 = vmatpush1.bf16.msra.mxu0 0
    %1614 = vmatprep.subr.bf16.mxu0 0
    %1615 = vmatpush1.bf16.msra.mxu0 0
    %1616 = vmatprep.subr.bf16.mxu0 0
    %1617 = vmatpush1.bf16.msra.mxu0 0
    %1618 = vmatprep.subr.bf16.mxu0 0
    %1619 = vmatpush1.bf16.msra.mxu0 0
    %1620 = vmatprep.subr.bf16.mxu0 0
    %1621 = vmatpush1.bf16.msra.mxu0 0
    %1622 = vmatprep.subr.bf16.mxu0 0
    %1623 = vmatpush1.bf16.msra.mxu0 0
    %1624 = vmatprep.subr.bf16.mxu0 0
    %1625 = vmatpush1.bf16.msra.mxu0 0
    %1626 = vmatprep.mubr.bf16.mxu0 0
    %1627 = vmatmul.mubr.bf16.gmra.mrb[0].mxu0 %v1291
    %v1628 = vpop.f32.mrb[0].mxu0
    %v1629 = vadd.f32 %v1586, %v1628
    %v1630 = vpop.f32.mrb[0].mxu0
    %v1631 = vadd.f32 %v1588, %v1630
    %v1632 = vpop.f32.mrb[0].mxu0
    %v1633 = vadd.f32 %v1590, %v1632
    %v1634 = vpop.f32.mrb[0].mxu0
    %v1635 = vadd.f32 %v1592, %v1634
    %1636 = vdwg.mxu0
    %v1637 = vmul.f32 %v1457, 0.2
    %v1638 = vmul.f32 %v1459, 0.2
    %v1639 = vmul.f32 %v1629, 0.2
    %v1640 = vmul.f32 %v1631, 0.2
    %v1641 = vmul.f32 %v1461, 0.2
    %v1642 = vmul.f32 %v1463, 0.2
    %v1643 = vmul.f32 %v1633, 0.2
    %v1644 = vmul.f32 %v1635, 0.2
    %v1645 = vmax.f32 %v1457, %v1637
    %v1646 = vmax.f32 %v1459, %v1638
    %v1647 = vmax.f32 %v1629, %v1639
    %v1648 = vmax.f32 %v1631, %v1640
    %v1649 = vmax.f32 %v1461, %v1641
    %v1650 = vmax.f32 %v1463, %v1642
    %v1651 = vmax.f32 %v1633, %v1643
    %v1652 = vmax.f32 %v1635, %v1644
    %v1653 = vpack.c.bf16 %v1649, %v1645
    %v1654 = vpack.c.bf16 %v1650, %v1646
    %v1655 = vpack.c.bf16 %v1651, %v1647
    %v1656 = vpack.c.bf16 %v1652, %v1648
    %v1657 = vld [vmem:[#allocation7] sm:$0xff]
    %v1658 = vld [vmem:[#allocation7 + $0x8] sm:$0xff]
    %v1659 = vld [vmem:[#allocation7 + $0x10] sm:$0xff]
    %v1660 = vld [vmem:[#allocation7 + $0x18] sm:$0xff]
    %v1661 = vld [vmem:[#allocation7 + $0x20] sm:$0xff]
    %v1662 = vld [vmem:[#allocation7 + $0x28] sm:$0xff]
    %v1663 = vld [vmem:[#allocation7 + $0x30] sm:$0xff]
    %v1664 = vld [vmem:[#allocation7 + $0x38] sm:$0xff]
    %v1665 = vld [vmem:[#allocation7 + $0x40] sm:$0xff]
    %v1666 = vld [vmem:[#allocation7 + $0x48] sm:$0xff]
    %v1667 = vld [vmem:[#allocation7 + $0x50] sm:$0xff]
    %v1668 = vld [vmem:[#allocation7 + $0x58] sm:$0xff]
    %v1669 = vld [vmem:[#allocation7 + $0x60] sm:$0xff]
    %v1670 = vld [vmem:[#allocation7 + $0x68] sm:$0xff]
    %v1671 = vld [vmem:[#allocation7 + $0x70] sm:$0xff]
    %v1672 = vld [vmem:[#allocation7 + $0x78] sm:$0xff]
    %v1673 = vld [vmem:[#allocation7 + $0x80] sm:$0xff]
    %v1674 = vld [vmem:[#allocation7 + $0x88] sm:$0xff]
    %v1675 = vld [vmem:[#allocation7 + $0x90] sm:$0xff]
    %v1676 = vld [vmem:[#allocation7 + $0x98] sm:$0xff]
    %v1677 = vld [vmem:[#allocation7 + $0xa0] sm:$0xff]
    %v1678 = vld [vmem:[#allocation7 + $0xa8] sm:$0xff]
    %v1679 = vld [vmem:[#allocation7 + $0xb0] sm:$0xff]
    %v1680 = vld [vmem:[#allocation7 + $0xb8] sm:$0xff]
    %v1681 = vld [vmem:[#allocation7 + $0xc0] sm:$0xff]
    %v1682 = vld [vmem:[#allocation7 + $0xc8] sm:$0xff]
    %v1683 = vld [vmem:[#allocation7 + $0xd0] sm:$0xff]
    %v1684 = vld [vmem:[#allocation7 + $0xd8] sm:$0xff]
    %v1685 = vld [vmem:[#allocation7 + $0xe0] sm:$0xff]
    %v1686 = vld [vmem:[#allocation7 + $0xe8] sm:$0xff]
    %v1687 = vld [vmem:[#allocation7 + $0xf0] sm:$0xff]
    %v1688 = vld [vmem:[#allocation7 + $0xf8] sm:$0xff]
    %v1689 = vld [vmem:[#allocation7 + $0x100] sm:$0xff]
    %v1690 = vld [vmem:[#allocation7 + $0x108] sm:$0xff]
    %v1691 = vld [vmem:[#allocation7 + $0x110] sm:$0xff]
    %v1692 = vld [vmem:[#allocation7 + $0x118] sm:$0xff]
    %v1693 = vld [vmem:[#allocation7 + $0x120] sm:$0xff]
    %v1694 = vld [vmem:[#allocation7 + $0x128] sm:$0xff]
    %v1695 = vld [vmem:[#allocation7 + $0x130] sm:$0xff]
    %v1696 = vld [vmem:[#allocation7 + $0x138] sm:$0xff]
    %v1697 = vld [vmem:[#allocation7 + $0x140] sm:$0xff]
    %v1698 = vld [vmem:[#allocation7 + $0x148] sm:$0xff]
    %v1699 = vld [vmem:[#allocation7 + $0x150] sm:$0xff]
    %v1700 = vld [vmem:[#allocation7 + $0x158] sm:$0xff]
    %v1701 = vld [vmem:[#allocation7 + $0x160] sm:$0xff]
    %v1702 = vld [vmem:[#allocation7 + $0x168] sm:$0xff]
    %v1703 = vld [vmem:[#allocation7 + $0x170] sm:$0xff]
    %v1704 = vld [vmem:[#allocation7 + $0x178] sm:$0xff]
    %v1705 = vld [vmem:[#allocation7 + $0x180] sm:$0xff]
    %v1706 = vld [vmem:[#allocation7 + $0x188] sm:$0xff]
    %v1707 = vld [vmem:[#allocation7 + $0x190] sm:$0xff]
    %v1708 = vld [vmem:[#allocation7 + $0x198] sm:$0xff]
    %v1709 = vld [vmem:[#allocation7 + $0x1a0] sm:$0xff]
    %v1710 = vld [vmem:[#allocation7 + $0x1a8] sm:$0xff]
    %v1711 = vld [vmem:[#allocation7 + $0x1b0] sm:$0xff]
    %v1712 = vld [vmem:[#allocation7 + $0x1b8] sm:$0xff]
    %v1713 = vld [vmem:[#allocation7 + $0x1c0] sm:$0xff]
    %v1714 = vld [vmem:[#allocation7 + $0x1c8] sm:$0xff]
    %v1715 = vld [vmem:[#allocation7 + $0x1d0] sm:$0xff]
    %v1716 = vld [vmem:[#allocation7 + $0x1d8] sm:$0xff]
    %v1717 = vld [vmem:[#allocation7 + $0x1e0] sm:$0xff]
    %v1718 = vld [vmem:[#allocation7 + $0x1e8] sm:$0xff]
    %v1719 = vld [vmem:[#allocation7 + $0x1f0] sm:$0xff]
    %v1720 = vld [vmem:[#allocation7 + $0x1f8] sm:$0xff]
    %v1721 = vld [vmem:[%s4] sm:$0x3]
    %v1723 = vlaneseq
    %v1724 = vshrl.u32 %v1723, 7
    %v1725 = vsub.s32 0, %v1724
    %v1726 = vrot.slane %v1721, %v1725
    %v1727 = vlaneseq
    %v1728 = vshrl.u32 %v1727, 7
    %v1729 = vsub.s32 1, %v1728
    %v1730 = vrot.slane %v1721, %v1729
    %v1797 = vunpack.c.l.b16 %v1657
    %v1798 = vunpack.c.h.b16 %v1657
    %v1799 = vunpack.c.l.b16 %v1658
    %v1800 = vunpack.c.h.b16 %v1658
    %v1801 = vunpack.c.l.b16 %v1659
    %v1802 = vunpack.c.h.b16 %v1659
    %v1803 = vunpack.c.l.b16 %v1660
    %v1804 = vunpack.c.h.b16 %v1660
    %v1805 = vunpack.c.l.b16 %v1661
    %v1806 = vunpack.c.h.b16 %v1661
    %v1807 = vunpack.c.l.b16 %v1662
    %v1808 = vunpack.c.h.b16 %v1662
    %v1809 = vunpack.c.l.b16 %v1663
    %v1810 = vunpack.c.h.b16 %v1663
    %v1811 = vunpack.c.l.b16 %v1664
    %v1812 = vunpack.c.h.b16 %v1664
    %v1813 = vunpack.c.l.b16 %v1665
    %v1814 = vunpack.c.h.b16 %v1665
    %v1815 = vunpack.c.l.b16 %v1666
    %v1816 = vunpack.c.h.b16 %v1666
    %v1817 = vunpack.c.l.b16 %v1667
    %v1818 = vunpack.c.h.b16 %v1667
    %v1819 = vunpack.c.l.b16 %v1668
    %v1820 = vunpack.c.h.b16 %v1668
    %v1821 = vunpack.c.l.b16 %v1669
    %v1822 = vunpack.c.h.b16 %v1669
    %v1823 = vunpack.c.l.b16 %v1670
    %v1824 = vunpack.c.h.b16 %v1670
    %v1825 = vunpack.c.l.b16 %v1671
    %v1826 = vunpack.c.h.b16 %v1671
    %v1827 = vunpack.c.l.b16 %v1672
    %v1828 = vunpack.c.h.b16 %v1672
    %v1829 = vunpack.c.l.b16 %v1673
    %v1830 = vunpack.c.h.b16 %v1673
    %v1831 = vunpack.c.l.b16 %v1674
    %v1832 = vunpack.c.h.b16 %v1674
    %v1833 = vunpack.c.l.b16 %v1675
    %v1834 = vunpack.c.h.b16 %v1675
    %v1835 = vunpack.c.l.b16 %v1676
    %v1836 = vunpack.c.h.b16 %v1676
    %v1837 = vunpack.c.l.b16 %v1677
    %v1838 = vunpack.c.h.b16 %v1677
    %v1839 = vunpack.c.l.b16 %v1678
    %v1840 = vunpack.c.h.b16 %v1678
    %v1841 = vunpack.c.l.b16 %v1679
    %v1842 = vunpack.c.h.b16 %v1679
    %v1843 = vunpack.c.l.b16 %v1680
    %v1844 = vunpack.c.h.b16 %v1680
    %v1845 = vunpack.c.l.b16 %v1681
    %v1846 = vunpack.c.h.b16 %v1681
    %v1847 = vunpack.c.l.b16 %v1682
    %v1848 = vunpack.c.h.b16 %v1682
    %v1849 = vunpack.c.l.b16 %v1683
    %v1850 = vunpack.c.h.b16 %v1683
    %v1851 = vunpack.c.l.b16 %v1684
    %v1852 = vunpack.c.h.b16 %v1684
    %v1853 = vunpack.c.l.b16 %v1685
    %v1854 = vunpack.c.h.b16 %v1685
    %v1855 = vunpack.c.l.b16 %v1686
    %v1856 = vunpack.c.h.b16 %v1686
    %v1857 = vunpack.c.l.b16 %v1687
    %v1858 = vunpack.c.h.b16 %v1687
    %v1859 = vunpack.c.l.b16 %v1688
    %v1860 = vunpack.c.h.b16 %v1688
    %v1861 = vunpack.c.l.b16 %v1689
    %v1862 = vunpack.c.h.b16 %v1689
    %v1863 = vunpack.c.l.b16 %v1690
    %v1864 = vunpack.c.h.b16 %v1690
    %v1865 = vunpack.c.l.b16 %v1691
    %v1866 = vunpack.c.h.b16 %v1691
    %v1867 = vunpack.c.l.b16 %v1692
    %v1868 = vunpack.c.h.b16 %v1692
    %v1869 = vunpack.c.l.b16 %v1693
    %v1870 = vunpack.c.h.b16 %v1693
    %v1871 = vunpack.c.l.b16 %v1694
    %v1872 = vunpack.c.h.b16 %v1694
    %v1873 = vunpack.c.l.b16 %v1695
    %v1874 = vunpack.c.h.b16 %v1695
    %v1875 = vunpack.c.l.b16 %v1696
    %v1876 = vunpack.c.h.b16 %v1696
    %v1877 = vunpack.c.l.b16 %v1697
    %v1878 = vunpack.c.h.b16 %v1697
    %v1879 = vunpack.c.l.b16 %v1698
    %v1880 = vunpack.c.h.b16 %v1698
    %v1881 = vunpack.c.l.b16 %v1699
    %v1882 = vunpack.c.h.b16 %v1699
    %v1883 = vunpack.c.l.b16 %v1700
    %v1884 = vunpack.c.h.b16 %v1700
    %v1885 = vunpack.c.l.b16 %v1701
    %v1886 = vunpack.c.h.b16 %v1701
    %v1887 = vunpack.c.l.b16 %v1702
    %v1888 = vunpack.c.h.b16 %v1702
    %v1889 = vunpack.c.l.b16 %v1703
    %v1890 = vunpack.c.h.b16 %v1703
    %v1891 = vunpack.c.l.b16 %v1704
    %v1892 = vunpack.c.h.b16 %v1704
    %v1893 = vunpack.c.l.b16 %v1705
    %v1894 = vunpack.c.h.b16 %v1705
    %v1895 = vunpack.c.l.b16 %v1706
    %v1896 = vunpack.c.h.b16 %v1706
    %v1897 = vunpack.c.l.b16 %v1707
    %v1898 = vunpack.c.h.b16 %v1707
    %v1899 = vunpack.c.l.b16 %v1708
    %v1900 = vunpack.c.h.b16 %v1708
    %v1901 = vunpack.c.l.b16 %v1709
    %v1902 = vunpack.c.h.b16 %v1709
    %v1903 = vunpack.c.l.b16 %v1710
    %v1904 = vunpack.c.h.b16 %v1710
    %v1905 = vunpack.c.l.b16 %v1711
    %v1906 = vunpack.c.h.b16 %v1711
    %v1907 = vunpack.c.l.b16 %v1712
    %v1908 = vunpack.c.h.b16 %v1712
    %v1909 = vunpack.c.l.b16 %v1713
    %v1910 = vunpack.c.h.b16 %v1713
    %v1911 = vunpack.c.l.b16 %v1714
    %v1912 = vunpack.c.h.b16 %v1714
    %v1913 = vunpack.c.l.b16 %v1715
    %v1914 = vunpack.c.h.b16 %v1715
    %v1915 = vunpack.c.l.b16 %v1716
    %v1916 = vunpack.c.h.b16 %v1716
    %v1917 = vunpack.c.l.b16 %v1717
    %v1918 = vunpack.c.h.b16 %v1717
    %v1919 = vunpack.c.l.b16 %v1718
    %v1920 = vunpack.c.h.b16 %v1718
    %v1921 = vunpack.c.l.b16 %v1719
    %v1922 = vunpack.c.h.b16 %v1719
    %v1923 = vunpack.c.l.b16 %v1720
    %v1924 = vunpack.c.h.b16 %v1720
    %v1925 = vpack.c.b16 %v1799, %v1797
    %v1926 = vpack.c.b16 %v1800, %v1798
    %v1927 = vpack.c.b16 %v1803, %v1801
    %v1928 = vpack.c.b16 %v1804, %v1802
    %v1929 = vpack.c.b16 %v1807, %v1805
    %v1930 = vpack.c.b16 %v1808, %v1806
    %v1931 = vpack.c.b16 %v1811, %v1809
    %v1932 = vpack.c.b16 %v1812, %v1810
    %v1933 = vpack.c.b16 %v1815, %v1813
    %v1934 = vpack.c.b16 %v1816, %v1814
    %v1935 = vpack.c.b16 %v1819, %v1817
    %v1936 = vpack.c.b16 %v1820, %v1818
    %v1937 = vpack.c.b16 %v1823, %v1821
    %v1938 = vpack.c.b16 %v1824, %v1822
    %v1939 = vpack.c.b16 %v1827, %v1825
    %v1940 = vpack.c.b16 %v1828, %v1826
    %v1941 = vpack.c.b16 %v1831, %v1829
    %v1942 = vpack.c.b16 %v1832, %v1830
    %v1943 = vpack.c.b16 %v1835, %v1833
    %v1944 = vpack.c.b16 %v1836, %v1834
    %v1945 = vpack.c.b16 %v1839, %v1837
    %v1946 = vpack.c.b16 %v1840, %v1838
    %v1947 = vpack.c.b16 %v1843, %v1841
    %v1948 = vpack.c.b16 %v1844, %v1842
    %v1949 = vpack.c.b16 %v1847, %v1845
    %v1950 = vpack.c.b16 %v1848, %v1846
    %v1951 = vpack.c.b16 %v1851, %v1849
    %v1952 = vpack.c.b16 %v1852, %v1850
    %v1953 = vpack.c.b16 %v1855, %v1853
    %v1954 = vpack.c.b16 %v1856, %v1854
    %v1955 = vpack.c.b16 %v1859, %v1857
    %v1956 = vpack.c.b16 %v1860, %v1858
    %v1957 = vpack.c.b16 %v1863, %v1861
    %v1958 = vpack.c.b16 %v1864, %v1862
    %v1959 = vpack.c.b16 %v1867, %v1865
    %v1960 = vpack.c.b16 %v1868, %v1866
    %v1961 = vpack.c.b16 %v1871, %v1869
    %v1962 = vpack.c.b16 %v1872, %v1870
    %v1963 = vpack.c.b16 %v1875, %v1873
    %v1964 = vpack.c.b16 %v1876, %v1874
    %v1965 = vpack.c.b16 %v1879, %v1877
    %v1966 = vpack.c.b16 %v1880, %v1878
    %v1967 = vpack.c.b16 %v1883, %v1881
    %v1968 = vpack.c.b16 %v1884, %v1882
    %v1969 = vpack.c.b16 %v1887, %v1885
    %v1970 = vpack.c.b16 %v1888, %v1886
    %v1971 = vpack.c.b16 %v1891, %v1889
    %v1972 = vpack.c.b16 %v1892, %v1890
    %v1973 = vpack.c.b16 %v1895, %v1893
    %v1974 = vpack.c.b16 %v1896, %v1894
    %v1975 = vpack.c.b16 %v1899, %v1897
    %v1976 = vpack.c.b16 %v1900, %v1898
    %v1977 = vpack.c.b16 %v1903, %v1901
    %v1978 = vpack.c.b16 %v1904, %v1902
    %v1979 = vpack.c.b16 %v1907, %v1905
    %v1980 = vpack.c.b16 %v1908, %v1906
    %v1981 = vpack.c.b16 %v1911, %v1909
    %v1982 = vpack.c.b16 %v1912, %v1910
    %v1983 = vpack.c.b16 %v1915, %v1913
    %v1984 = vpack.c.b16 %v1916, %v1914
    %v1985 = vpack.c.b16 %v1919, %v1917
    %v1986 = vpack.c.b16 %v1920, %v1918
    %v1987 = vpack.c.b16 %v1923, %v1921
    %v1988 = vpack.c.b16 %v1924, %v1922
    %2053 = vmatprep.subr.bf16.mxu0 %v1926
    %2054 = vmatpush1.bf16.msra.mxu0 %v1925
    %2055 = vmatprep.subr.bf16.mxu0 %v1928
    %2056 = vmatpush1.bf16.msra.mxu0 %v1927
    %2057 = vmatprep.subr.bf16.mxu0 %v1930
    %2058 = vmatpush1.bf16.msra.mxu0 %v1929
    %2059 = vmatprep.subr.bf16.mxu0 %v1932
    %2060 = vmatpush1.bf16.msra.mxu0 %v1931
    %2061 = vmatprep.subr.bf16.mxu0 %v1934
    %2062 = vmatpush1.bf16.msra.mxu0 %v1933
    %2063 = vmatprep.subr.bf16.mxu0 %v1936
    %2064 = vmatpush1.bf16.msra.mxu0 %v1935
    %2065 = vmatprep.subr.bf16.mxu0 %v1938
    %2066 = vmatpush1.bf16.msra.mxu0 %v1937
    %2067 = vmatprep.subr.bf16.mxu0 %v1940
    %2068 = vmatpush1.bf16.msra.mxu0 %v1939
    %2069 = vmatprep.subr.bf16.mxu0 %v1942
    %2070 = vmatpush1.bf16.msra.mxu0 %v1941
    %2071 = vmatprep.subr.bf16.mxu0 %v1944
    %2072 = vmatpush1.bf16.msra.mxu0 %v1943
    %2073 = vmatprep.subr.bf16.mxu0 %v1946
    %2074 = vmatpush1.bf16.msra.mxu0 %v1945
    %2075 = vmatprep.subr.bf16.mxu0 %v1948
    %2076 = vmatpush1.bf16.msra.mxu0 %v1947
    %2077 = vmatprep.subr.bf16.mxu0 %v1950
    %2078 = vmatpush1.bf16.msra.mxu0 %v1949
    %2079 = vmatprep.subr.bf16.mxu0 %v1952
    %2080 = vmatpush1.bf16.msra.mxu0 %v1951
    %2081 = vmatprep.subr.bf16.mxu0 %v1954
    %2082 = vmatpush1.bf16.msra.mxu0 %v1953
    %2083 = vmatprep.subr.bf16.mxu0 %v1956
    %2084 = vmatpush1.bf16.msra.mxu0 %v1955
    %2085 = vmatprep.mubr.bf16.mxu0 %v1654
    %2086 = vmatmul.mubr.bf16.gmra.mrb[0].mxu0 %v1653
    %v2087 = vpop.f32.mrb[0].mxu0
    %v2088 = vadd.f32 %v1726, %v2087
    %v2089 = vpop.f32.mrb[0].mxu0
    %v2090 = vadd.f32 %v1730, %v2089
    %v2091 = vpop.f32.mrb[0].mxu0
    %v2092 = vadd.f32 %v1726, %v2091
    %v2093 = vpop.f32.mrb[0].mxu0
    %v2094 = vadd.f32 %v1730, %v2093
    %2095 = vdwg.mxu0
    %2096 = vmatprep.subr.bf16.mxu0 %v1958
    %2097 = vmatpush1.bf16.msra.mxu0 %v1957
    %2098 = vmatprep.subr.bf16.mxu0 %v1960
    %2099 = vmatpush1.bf16.msra.mxu0 %v1959
    %2100 = vmatprep.subr.bf16.mxu0 %v1962
    %2101 = vmatpush1.bf16.msra.mxu0 %v1961
    %2102 = vmatprep.subr.bf16.mxu0 %v1964
    %2103 = vmatpush1.bf16.msra.mxu0 %v1963
    %2104 = vmatprep.subr.bf16.mxu0 %v1966
    %2105 = vmatpush1.bf16.msra.mxu0 %v1965
    %2106 = vmatprep.subr.bf16.mxu0 %v1968
    %2107 = vmatpush1.bf16.msra.mxu0 %v1967
    %2108 = vmatprep.subr.bf16.mxu0 %v1970
    %2109 = vmatpush1.bf16.msra.mxu0 %v1969
    %2110 = vmatprep.subr.bf16.mxu0 %v1972
    %2111 = vmatpush1.bf16.msra.mxu0 %v1971
    %2112 = vmatprep.subr.bf16.mxu0 %v1974
    %2113 = vmatpush1.bf16.msra.mxu0 %v1973
    %2114 = vmatprep.subr.bf16.mxu0 %v1976
    %2115 = vmatpush1.bf16.msra.mxu0 %v1975
    %2116 = vmatprep.subr.bf16.mxu0 %v1978
    %2117 = vmatpush1.bf16.msra.mxu0 %v1977
    %2118 = vmatprep.subr.bf16.mxu0 %v1980
    %2119 = vmatpush1.bf16.msra.mxu0 %v1979
    %2120 = vmatprep.subr.bf16.mxu0 %v1982
    %2121 = vmatpush1.bf16.msra.mxu0 %v1981
    %2122 = vmatprep.subr.bf16.mxu0 %v1984
    %2123 = vmatpush1.bf16.msra.mxu0 %v1983
    %2124 = vmatprep.subr.bf16.mxu0 %v1986
    %2125 = vmatpush1.bf16.msra.mxu0 %v1985
    %2126 = vmatprep.subr.bf16.mxu0 %v1988
    %2127 = vmatpush1.bf16.msra.mxu0 %v1987
    %2128 = vmatprep.mubr.bf16.mxu0 %v1656
    %2129 = vmatmul.mubr.bf16.gmra.mrb[0].mxu0 %v1655
    %v2130 = vpop.f32.mrb[0].mxu0
    %v2131 = vadd.f32 %v2088, %v2130
    %v2132 = vpop.f32.mrb[0].mxu0
    %v2133 = vadd.f32 %v2090, %v2132
    %v2134 = vpop.f32.mrb[0].mxu0
    %v2135 = vadd.f32 %v2092, %v2134
    %v2136 = vpop.f32.mrb[0].mxu0
    %v2137 = vadd.f32 %v2094, %v2136
    %2138 = vdwg.mxu0
    %v2139 = vmul.f32 %v2131, 0.2
    %v2140 = vmul.f32 %v2133, 0.2
    %v2141 = vmul.f32 %v2135, 0.2
    %v2142 = vmul.f32 %v2137, 0.2
    %v2143 = vmax.f32 %v2131, %v2139
    %v2144 = vmax.f32 %v2133, %v2140
    %v2145 = vmax.f32 %v2135, %v2141
    %v2146 = vmax.f32 %v2137, %v2142
    %v2147 = vld [vmem:[%s5] sm:$0x3]
    %v2149 = vlaneseq
    %v2150 = vshrl.u32 %v2149, 7
    %v2151 = vsub.s32 0, %v2150
    %v2152 = vrot.slane %v2147, %v2151
    %v2153 = vlaneseq
    %v2154 = vshrl.u32 %v2153, 7
    %v2155 = vsub.s32 1, %v2154
    %v2156 = vrot.slane %v2147, %v2155
    %v2159 = vmul.f32 %v2143, %v2152
    %v2160 = vmul.f32 %v2144, %v2156
    %v2161 = vmul.f32 %v2145, %v2152
    %v2162 = vmul.f32 %v2146, %v2156
    %v2163 = vadd.f32 %v2159, %v2160
    %2164 = vadd.xlane.f32.xlu0 %v2163
    %v2165 = vpop.xlane.xlu0 %2164
    %v2166 = vadd.f32 %v2161, %v2162
    %2167 = vadd.xlane.f32.xlu0 %v2166
    %v2168 = vpop.xlane.xlu0 %2167
    %v2169 = vld [vmem:[#allocation2] sm:$0x1]
    %v2171 = vlaneseq
    %v2172 = vshrl.u32 %v2171, 7
    %v2173 = vsub.s32 0, %v2172
    %v2174 = vrot.slane %v2169, %v2173
    %v2176 = vadd.f32 %v2165, %v2174
    %v2177 = vadd.f32 %v2168, %v2174
    %v2178 = vxor.u32 %v2176, 2147483648
    %v2179 = vxor.u32 %v2177, 2147483648
    %v2180 = vmul.f32 %v2178, 1.442695
    %v2181 = vpow.pop %v2180
    %v2182 = vmul.f32 %v2179, 1.442695
    %v2183 = vpow.pop %v2182
    %v2184 = vadd.f32 %v2181, 1.0
    %v2185 = vadd.f32 %v2183, 1.0
    %v2186 = vrcp.pop %v2184
    %v2187 = vmul.f32 1.0, %v2186
    %v2188 = vrcp.pop %v2185
    %v2189 = vmul.f32 1.0, %v2188
    %vm2190 = vcmask 7168
    %2191 = vst.msk [vmem:[%s7] sm:$0xff] %vm2190, %v2187
    %2192 = vst.msk [vmem:[%s7 + $0x8] sm:$0xff] %vm2190, %v2189
    // Predicated region
    $region42: #{tpu_custom_call.1} parent=1 // pred_check
      _
    $region43: #{tpu_custom_call.1} parent=1 // pred_check_branch
      %2194 = sbr.rel (0) target = $region45
    $region44: #{tpu_custom_call.1} parent=1 // pred_region
      _
    $region45: #{tpu_custom_call.1} parent=1 // pred_fallthru
      _
    // Predicated region
    $region46: #{tpu_custom_call.1} parent=1 // pred_check
      _
    $region47: #{tpu_custom_call.1} parent=1 // pred_check_branch
      %2196 = sbr.rel (0) target = $region49
    $region48: #{tpu_custom_call.1} parent=1 // pred_region
      _
    $region49: #{tpu_custom_call.1} parent=1 // pred_fallthru
      _
    %2197 = vsyncpa [#allocation4], 1
    %2198 = vsyncpa [#allocation6], 1

</llo_original>
